<compile_context>
chip_gen: v7x
topology: tpu7x:2x2x1
jax: 0.10.0
libtpu: 0.0.40
codegen_flags: <defaults>
</compile_context>

<pallas_src>
import functools

import jax
import jax.numpy as jnp
from jax.experimental import pallas as pl
from jax.experimental.pallas import tpu as pltpu


# ----------------------------- Pallas kernels -----------------------------

def _conv3x3_kernel(p0_ref, p1_ref, p2_ref, w_ref, s_ref, t_ref, o_ref, *,
                    H, W, relu):
    """One (batch, depth) step of a 3x3x3 / stride-1 / pad-1 conv.

    p{0,1,2}_ref : (1, 1, H+2, W+2, Cin)  padded input depth planes d, d+1, d+2
    w_ref        : (27, Cin, Cout)        taps in (kd, kh, kw) order
    s_ref, t_ref : (1, Cout)              folded BN scale / (bias + BN) shift
    o_ref        : (1, 1, H*W, Cout)
    """
    Cout = o_ref.shape[-1]
    acc = jnp.zeros((H * W, Cout), jnp.float32)
    for kd, p_ref in enumerate((p0_ref, p1_ref, p2_ref)):
        for kh in range(3):
            for kw in range(3):
                patch = p_ref[0, 0, kh:kh + H, kw:kw + W, :].reshape(H * W, -1)
                acc = acc + jnp.dot(patch, w_ref[kd * 9 + kh * 3 + kw],
                                    preferred_element_type=jnp.float32)
    y = acc * s_ref[...] + t_ref[...]
    if relu:
        y = jnp.maximum(y, 0.0)
    o_ref[0, 0] = y.astype(o_ref.dtype)


def conv3x3_bn_act(x_ndhwc, w_taps, scale, shift, *, relu=True,
                   out_dtype=jnp.float32):
    """Fused 3x3x3 conv (stride 1, pad 1) + folded bias/BN + optional ReLU.

    Returns an (N, D, H*W, Cout) array."""
    N, D, H, W, Cin = x_ndhwc.shape
    Cout = w_taps.shape[-1]
    Hp, Wp = H + 2, W + 2
    xp = jnp.pad(x_ndhwc.astype(jnp.bfloat16),
                 ((0, 0), (1, 1), (1, 1), (1, 1), (0, 0)))
    w = w_taps.astype(jnp.bfloat16)
    s2 = scale.reshape(1, Cout).astype(jnp.float32)
    t2 = shift.reshape(1, Cout).astype(jnp.float32)

    def plane_spec(kd):
        return pl.BlockSpec((1, 1, Hp, Wp, Cin),
                            lambda n, d, kd=kd: (n, d + kd, 0, 0, 0))

    flops = 2 * N * D * H * W * 27 * Cin * Cout
    bytes_accessed = int(3 * xp.size * 2 + w.size * 2 + (s2.size + t2.size) * 4
                         + N * D * H * W * Cout * jnp.dtype(out_dtype).itemsize)

    return pl.pallas_call(
        functools.partial(_conv3x3_kernel, H=H, W=W, relu=relu),
        out_shape=jax.ShapeDtypeStruct((N, D, H * W, Cout), out_dtype),
        grid=(N, D),
        in_specs=[plane_spec(0), plane_spec(1), plane_spec(2),
                  pl.BlockSpec((27, Cin, Cout), lambda n, d: (0, 0, 0)),
                  pl.BlockSpec((1, Cout), lambda n, d: (0, 0)),
                  pl.BlockSpec((1, Cout), lambda n, d: (0, 0))],
        out_specs=pl.BlockSpec((1, 1, H * W, Cout), lambda n, d: (n, d, 0, 0)),
        compiler_params=pltpu.CompilerParams(
            dimension_semantics=("parallel", "parallel"),
            vmem_limit_bytes=48 * 1024 * 1024),
        cost_estimate=pl.CostEstimate(flops=int(flops), transcendentals=0,
                                      bytes_accessed=bytes_accessed),
    )(xp, xp, xp, w, s2, t2)


def _splat_conv_gap_kernel(p0_ref, p1_ref, p2_ref, w_ref, s_ref, t_ref,
                           r0_ref, r1_ref, gap_ref, *, H, W, C, inv_S):
    """Grouped 3x3x3 conv + bn0 + ReLU over the full 2C radix width (single dot
    per tap), emitted as two radix halves, with the global-average-pool fused as
    a grid-resident accumulator over the depth axis.

    p{0,1,2}_ref : (1, 1, H+2, W+2, Cin)
    w_ref        : (27, Cin, 2C)   radix-concatenated taps
    s_ref, t_ref : (1, 2C)
    r0/r1_ref    : (1, 1, H*W, C)
    gap_ref      : (1, 1, 2C)      f32 accumulator (resident across depth)
    """
    C2 = 2 * C
    acc = jnp.zeros((H * W, C2), jnp.float32)
    for kd, p_ref in enumerate((p0_ref, p1_ref, p2_ref)):
        for kh in range(3):
            for kw in range(3):
                patch = p_ref[0, 0, kh:kh + H, kw:kw + W, :].reshape(H * W, -1)
                acc = acc + jnp.dot(patch, w_ref[kd * 9 + kh * 3 + kw],
                                    preferred_element_type=jnp.float32)
    h = jnp.maximum(acc * s_ref[...] + t_ref[...], 0.0)          # (H*W, 2C)
    r0_ref[0, 0] = h[:, :C].astype(r0_ref.dtype)
    r1_ref[0, 0] = h[:, C:].astype(r1_ref.dtype)

    # --- global average pool over spatial dims (reduction across depth axis) ---
    d = pl.program_id(1)

    @pl.when(d == 0)
    def _():
        gap_ref[...] = jnp.zeros_like(gap_ref)

    gap_ref[...] += jnp.sum(h, axis=0, keepdims=True)[None]

    @pl.when(d == pl.num_programs(1) - 1)
    def _():
        gap_ref[...] = gap_ref[...] * inv_S


def splat_conv3x3_gap(y_ndhwc, w_taps, scale, shift):
    """SplAtConv3d conv path.  Returns the two radix halves (N, D, H*W, C) in
    bf16 and the fused global-average-pool over the full 2C width (N, 1, 2C) in
    f32 (host does the tiny radix fold)."""
    N, D, H, W, Cin = y_ndhwc.shape
    C2 = w_taps.shape[-1]
    C = C2 // 2
    Hp, Wp = H + 2, W + 2
    yp = jnp.pad(y_ndhwc.astype(jnp.bfloat16),
                 ((0, 0), (1, 1), (1, 1), (1, 1), (0, 0)))
    w = w_taps.astype(jnp.bfloat16)                              # (27, Cin, 2C)
    s2 = scale.reshape(1, C2).astype(jnp.float32)
    t2 = shift.reshape(1, C2).astype(jnp.float32)

    def plane_spec(kd):
        return pl.BlockSpec((1, 1, Hp, Wp, Cin),
                            lambda n, d, kd=kd: (n, d + kd, 0, 0, 0))

    half_spec = pl.BlockSpec((1, 1, H * W, C), lambda n, d: (n, d, 0, 0))
    flops = 2 * N * D * H * W * 27 * Cin * C2
    bytes_accessed = int(3 * yp.size * 2 + w.size * 2 + (s2.size + t2.size) * 4
                         + 2 * N * D * H * W * C * 2 + N * C2 * 4)

    return pl.pallas_call(
        functools.partial(_splat_conv_gap_kernel, H=H, W=W, C=C,
                          inv_S=1.0 / float(D * H * W)),
        out_shape=(jax.ShapeDtypeStruct((N, D, H * W, C), jnp.bfloat16),
                   jax.ShapeDtypeStruct((N, D, H * W, C), jnp.bfloat16),
                   jax.ShapeDtypeStruct((N, 1, C2), jnp.float32)),
        grid=(N, D),
        in_specs=[plane_spec(0), plane_spec(1), plane_spec(2),
                  pl.BlockSpec((27, Cin, C2), lambda n, d: (0, 0, 0)),
                  pl.BlockSpec((1, C2), lambda n, d: (0, 0)),
                  pl.BlockSpec((1, C2), lambda n, d: (0, 0))],
        out_specs=(half_spec, half_spec,
                   pl.BlockSpec((1, 1, C2), lambda n, d: (n, 0, 0))),
        compiler_params=pltpu.CompilerParams(
            dimension_semantics=("parallel", "arbitrary"),
            vmem_limit_bytes=48 * 1024 * 1024),
        cost_estimate=pl.CostEstimate(flops=int(flops), transcendentals=0,
                                      bytes_accessed=bytes_accessed),
    )(yp, yp, yp, w, s2, t2)


def _attn_combine_kernel(x2a_ref, x2b_ref, xin_ref, wd_ref, sd_ref, td_ref,
                         a0_ref, a1_ref, o_ref):
    """out = relu(a0 * split0 + a1 * split1 + downsample(x)); residual fused."""
    res = jnp.dot(xin_ref[0], wd_ref[...], preferred_element_type=jnp.float32)
    res = res * sd_ref[...] + td_ref[...]
    out = (a0_ref[0] * x2a_ref[0].astype(jnp.float32)
           + a1_ref[0] * x2b_ref[0].astype(jnp.float32)
           + res)
    o_ref[0] = jnp.maximum(out, 0.0).astype(o_ref.dtype)


def _pick_row_tile(M, target):
    """Largest multiple-of-8 divisor of M that is <= target (falls back to M)."""
    t = min(M, target)
    t -= t % 8
    while t >= 8:
        if M % t == 0:
            return t
        t -= 8
    return M


def attention_combine(x2a, x2b, x_in, wd, sd, td, a0, a1, *, row_tile=512):
    """Fused residual 1x1x1 conv + BN, attention-weighted radix sum, final ReLU."""
    N, S, C = x2a.shape
    Cin = x_in.shape[-1]
    ts = _pick_row_tile(S, row_tile)
    grid = (N, S // ts)
    flops = 2 * N * S * Cin * C + 6 * N * S * C
    bytes_accessed = int(2 * N * S * C * 2 + N * S * Cin * 2 + Cin * C * 2
                         + 2 * N * C * 4 + 2 * C * 4 + N * S * C * 4)
    return pl.pallas_call(
        _attn_combine_kernel,
        out_shape=jax.ShapeDtypeStruct((N, S, C), jnp.float32),
        grid=grid,
        in_specs=[pl.BlockSpec((1, ts, C), lambda n, j: (n, j, 0)),
                  pl.BlockSpec((1, ts, C), lambda n, j: (n, j, 0)),
                  pl.BlockSpec((1, ts, Cin), lambda n, j: (n, j, 0)),
                  pl.BlockSpec((Cin, C), lambda n, j: (0, 0)),
                  pl.BlockSpec((1, C), lambda n, j: (0, 0)),
                  pl.BlockSpec((1, C), lambda n, j: (0, 0)),
                  pl.BlockSpec((1, 1, C), lambda n, j: (n, 0, 0)),
                  pl.BlockSpec((1, 1, C), lambda n, j: (n, 0, 0))],
        out_specs=pl.BlockSpec((1, ts, C), lambda n, j: (n, j, 0)),
        compiler_params=pltpu.CompilerParams(
            dimension_semantics=("parallel", "parallel"),
            vmem_limit_bytes=48 * 1024 * 1024),
        cost_estimate=pl.CostEstimate(flops=int(flops), transcendentals=0,
                                      bytes_accessed=bytes_accessed),
    )(x2a, x2b, x_in.astype(jnp.bfloat16), wd.astype(jnp.bfloat16),
      sd.reshape(1, C).astype(jnp.float32), td.reshape(1, C).astype(jnp.float32),
      a0.astype(jnp.float32), a1.astype(jnp.float32))


# ------------------------------- JAX glue ----------------------------------

def group_mask(cin, cout, groups):
    cin_g, cout_g = cin // groups, cout // groups
    m = jnp.zeros((cin, cout), jnp.float32)
    for g in range(groups):
        m = m.at[g * cin_g:(g + 1) * cin_g, g * cout_g:(g + 1) * cout_g].set(1.0)
    return m


def conv_weight(key, cin, cout, taps, groups=1):
    """(taps, cin, cout) weight equivalent to a (grouped) conv (zero-masked dense)."""
    fan_in = (cin // groups) * taps
    w = jax.random.normal(key, (taps, cin, cout), jnp.float32) / jnp.sqrt(
        jnp.asarray(fan_in, jnp.float32))
    return w * group_mask(cin, cout, groups)[None]


def init_params(key, ch_in, ch_out):
    inter = max(ch_out * 2 // 4, 32)
    ks = jax.random.split(key, 16)
    p = {}
    # Splitblock.conv[0]: Conv3d(ch_in, ch_out, 3, pad=1, bias=True) + BN + ReLU
    p["w1"] = conv_weight(ks[0], ch_in, ch_out, 27)                    # (27,Cin,C)
    p["b1"] = 0.05 * jax.random.normal(ks[1], (ch_out,), jnp.float32)
    p["bn1_g"] = 1.0 + 0.1 * jax.random.normal(ks[2], (ch_out,), jnp.float32)
    p["bn1_b"] = 0.05 * jax.random.normal(ks[3], (ch_out,), jnp.float32)
    # SplAtConv3d.conv: Conv3d(ch_out, 2*ch_out, 3, pad=1, groups=4, bias=True)+bn0
    p["ws"] = conv_weight(ks[4], ch_out, 2 * ch_out, 27, groups=4)     # (27,C,2C)
    p["bs"] = 0.05 * jax.random.normal(ks[5], (2 * ch_out,), jnp.float32)
    p["bn0_g"] = 1.0 + 0.1 * jax.random.normal(ks[6], (2 * ch_out,), jnp.float32)
    p["bn0_b"] = 0.05 * jax.random.normal(ks[7], (2 * ch_out,), jnp.float32)
    # SplAtConv3d.fc1: Conv3d(ch_out, inter, 1, groups=2, bias=True)
    p["wf1"] = conv_weight(ks[8], ch_out, inter, 1, groups=2)[0]
    p["bf1"] = 0.05 * jax.random.normal(ks[9], (inter,), jnp.float32)
    # SplAtConv3d.fc2: Conv3d(inter, 2*ch_out, 1, groups=2, bias=True)
    p["wf2"] = conv_weight(ks[10], inter, 2 * ch_out, 1, groups=2)[0]
    p["bf2"] = 0.05 * jax.random.normal(ks[11], (2 * ch_out,), jnp.float32)
    # downsample: Conv3d(ch_in, ch_out, 1, bias=False) + BN
    p["wd"] = conv_weight(ks[12], ch_in, ch_out, 1)[0]
    p["bnd_g"] = 1.0 + 0.1 * jax.random.normal(ks[13], (ch_out,), jnp.float32)
    p["bnd_b"] = 0.05 * jax.random.normal(ks[14], (ch_out,), jnp.float32)
    return p


def splitblock_forward(params, x_ncdhw, ch_out, cardinality=2, radix=2):
    N, Cin, D, H, W = x_ncdhw.shape
    S = D * H * W
    C = ch_out
    eps = 1e-5
    x = jnp.transpose(x_ncdhw, (0, 2, 3, 4, 1)).astype(jnp.float32)    # NDHWC

    def bn_fold(g, b):
        # eval-mode BN with running_mean=0, running_var=1
        return g / jnp.sqrt(1.0 + eps), b

    # --- conv branch: Conv3d(3x3x3) + BN + ReLU  (bias folded into BN shift) ---
    s1, t1 = bn_fold(params["bn1_g"], params["bn1_b"])
    t1 = params["b1"] * s1 + t1
    y = conv3x3_bn_act(x, params["w1"], s1, t1, relu=True,
                       out_dtype=jnp.bfloat16)                         # (N,D,H*W,C)
    y = y.reshape(N, D, H, W, C)

    # --- SplAtConv3d: grouped 3x3x3 conv + bn0 + ReLU, radix halves + fused GAP ---
    s0, t0 = bn_fold(params["bn0_g"], params["bn0_b"])
    t0 = params["bs"] * s0 + t0
    x2a, x2b, gap2 = splat_conv3x3_gap(y, params["ws"], s0, t0)
    gap2 = gap2.reshape(N, 2 * C)
    gap = gap2[:, :C] + gap2[:, C:]                                    # radix sum

    # --- fc1 (+ReLU), fc2, rSoftMax: tiny (N, C) tensors -> plain jnp ---
    g1 = jnp.maximum(gap @ params["wf1"] + params["bf1"], 0.0)
    logits = g1 @ params["wf2"] + params["bf2"]                        # (N, 2C)
    innerd = C // cardinality
    j = jnp.arange(C)
    card, inr = j // innerd, j % innerd
    l0 = logits[:, card * C + 0 * innerd + inr]                        # (N, C)
    l1 = logits[:, card * C + 1 * innerd + inr]                        # (N, C)
    m = jnp.maximum(l0, l1)
    e0, e1 = jnp.exp(l0 - m), jnp.exp(l1 - m)
    a0 = (e0 / (e0 + e1)).reshape(N, 1, C)
    a1 = (e1 / (e0 + e1)).reshape(N, 1, C)

    # --- attention combine + fused downsample residual + final ReLU (Pallas) ---
    sd, td = bn_fold(params["bnd_g"], params["bnd_b"])
    out = attention_combine(x2a.reshape(N, S, C), x2b.reshape(N, S, C),
                            x.reshape(N, S, Cin), params["wd"], sd, td, a0, a1)
    out = out.reshape(N, D, H, W, C)
    return jnp.transpose(out, (0, 4, 1, 2, 3))                         # NCDHW


if __name__ == "__main__":
    key = jax.random.PRNGKey(0)
    kx, kp = jax.random.split(key)

    ch_in, ch_out = 4, 16
    N, D, H, W = 2, 8, 8, 8

    x = jax.random.normal(kx, (N, ch_in, D, H, W), jnp.float32)
    params = init_params(kp, ch_in, ch_out)

    out = splitblock_forward(params, x, ch_out)
    out = jax.block_until_ready(out)

    assert out.shape == (N, ch_out, D, H, W)
    assert bool(jnp.all(jnp.isfinite(out)))
    print("KERNEL_OK")
</pallas_src>

<mosaic_0001>
module attributes {stable_mosaic.version = 11 : i64} {
  func.func @_conv3x3_kernel(%arg0: i32, %arg1: i32, %arg2: memref<1x1x10x10x4xbf16, #tpu.memory_space<vmem>>, %arg3: memref<1x1x10x10x4xbf16, #tpu.memory_space<vmem>>, %arg4: memref<1x1x10x10x4xbf16, #tpu.memory_space<vmem>>, %arg5: memref<27x4x16xbf16, #tpu.memory_space<vmem>>, %arg6: memref<1x16xf32, #tpu.memory_space<vmem>>, %arg7: memref<1x16xf32, #tpu.memory_space<vmem>>, %arg8: memref<1x1x64x16xbf16, #tpu.memory_space<vmem>>) attributes {dimension_semantics = [#tpu.dimension_semantics<parallel>, #tpu.dimension_semantics<parallel>], iteration_bounds = array<i64: 2, 8>, scalar_prefetch = 0 : i64, scratch_operands = 0 : i64, tpu.core_type = #tpu.core_type<tc>, window_params = [{transform_indices = @transform_0, window_bounds = array<i64: 1, 1, 10, 10, 4>}, {transform_indices = @transform_1, window_bounds = array<i64: 1, 1, 10, 10, 4>}, {transform_indices = @transform_2, window_bounds = array<i64: 1, 1, 10, 10, 4>}, {pipeline_mode = #tpu.pipeline_mode<synchronous>, transform_indices = @transform_3, window_bounds = array<i64: 27, 4, 16>}, {pipeline_mode = #tpu.pipeline_mode<synchronous>, transform_indices = @transform_4, window_bounds = array<i64: 1, 16>}, {pipeline_mode = #tpu.pipeline_mode<synchronous>, transform_indices = @transform_5, window_bounds = array<i64: 1, 16>}, {transform_indices = @transform_6, window_bounds = array<i64: 1, 1, 64, 16>}]} {
    %cst = arith.constant 0.000000e+00 : f32
    %0 = vector.broadcast %cst : f32 to vector<64x16xf32>
    %c0 = arith.constant 0 : index
    %c0_0 = arith.constant 0 : index
    %c0_1 = arith.constant 0 : index
    %c0_2 = arith.constant 0 : index
    %c0_3 = arith.constant 0 : index
    %1 = vector.load %arg2[%c0, %c0_0, %c0_1, %c0_2, %c0_3] : memref<1x1x10x10x4xbf16, #tpu.memory_space<vmem>>, vector<1x1x8x8x4xbf16>
    %2 = vector.shape_cast %1 : vector<1x1x8x8x4xbf16> to vector<8x8x4xbf16>
    %3 = vector.shape_cast %2 : vector<8x8x4xbf16> to vector<64x4xbf16>
    %c0_4 = arith.constant 0 : index
    %c0_5 = arith.constant 0 : index
    %c0_6 = arith.constant 0 : index
    %4 = vector.load %arg5[%c0_4, %c0_5, %c0_6] : memref<27x4x16xbf16, #tpu.memory_space<vmem>>, vector<1x4x16xbf16>
    %5 = vector.shape_cast %4 : vector<1x4x16xbf16> to vector<4x16xbf16>
    %cst_7 = arith.constant dense<0.000000e+00> : vector<64x16xf32>
    %6 = tpu.matmul %3, %5, %cst_7 {dimension_numbers = #tpu.dot_dimension_numbers<[1], [0], [0], [1], [0, 0, 1, 1], [], []>} : vector<64x4xbf16>, vector<4x16xbf16>, vector<64x16xf32> -> vector<64x16xf32>
    %7 = arith.addf %0, %6 : vector<64x16xf32>
    %c0_8 = arith.constant 0 : index
    %c0_9 = arith.constant 0 : index
    %c0_10 = arith.constant 0 : index
    %c1 = arith.constant 1 : index
    %c0_11 = arith.constant 0 : index
    %8 = vector.load %arg2[%c0_8, %c0_9, %c0_10, %c1, %c0_11] : memref<1x1x10x10x4xbf16, #tpu.memory_space<vmem>>, vector<1x1x8x8x4xbf16>
    %9 = vector.shape_cast %8 : vector<1x1x8x8x4xbf16> to vector<8x8x4xbf16>
    %10 = vector.shape_cast %9 : vector<8x8x4xbf16> to vector<64x4xbf16>
    %c1_12 = arith.constant 1 : index
    %c0_13 = arith.constant 0 : index
    %c0_14 = arith.constant 0 : index
    %11 = vector.load %arg5[%c1_12, %c0_13, %c0_14] : memref<27x4x16xbf16, #tpu.memory_space<vmem>>, vector<1x4x16xbf16>
    %12 = vector.shape_cast %11 : vector<1x4x16xbf16> to vector<4x16xbf16>
    %cst_15 = arith.constant dense<0.000000e+00> : vector<64x16xf32>
    %13 = tpu.matmul %10, %12, %cst_15 {dimension_numbers = #tpu.dot_dimension_numbers<[1], [0], [0], [1], [0, 0, 1, 1], [], []>} : vector<64x4xbf16>, vector<4x16xbf16>, vector<64x16xf32> -> vector<64x16xf32>
    %14 = arith.addf %7, %13 : vector<64x16xf32>
    %c0_16 = arith.constant 0 : index
    %c0_17 = arith.constant 0 : index
    %c0_18 = arith.constant 0 : index
    %c2 = arith.constant 2 : index
    %c0_19 = arith.constant 0 : index
    %15 = vector.load %arg2[%c0_16, %c0_17, %c0_18, %c2, %c0_19] : memref<1x1x10x10x4xbf16, #tpu.memory_space<vmem>>, vector<1x1x8x8x4xbf16>
    %16 = vector.shape_cast %15 : vector<1x1x8x8x4xbf16> to vector<8x8x4xbf16>
    %17 = vector.shape_cast %16 : vector<8x8x4xbf16> to vector<64x4xbf16>
    %c2_20 = arith.constant 2 : index
    %c0_21 = arith.constant 0 : index
    %c0_22 = arith.constant 0 : index
    %18 = vector.load %arg5[%c2_20, %c0_21, %c0_22] : memref<27x4x16xbf16, #tpu.memory_space<vmem>>, vector<1x4x16xbf16>
    %19 = vector.shape_cast %18 : vector<1x4x16xbf16> to vector<4x16xbf16>
    %cst_23 = arith.constant dense<0.000000e+00> : vector<64x16xf32>
    %20 = tpu.matmul %17, %19, %cst_23 {dimension_numbers = #tpu.dot_dimension_numbers<[1], [0], [0], [1], [0, 0, 1, 1], [], []>} : vector<64x4xbf16>, vector<4x16xbf16>, vector<64x16xf32> -> vector<64x16xf32>
    %21 = arith.addf %14, %20 : vector<64x16xf32>
    %c0_24 = arith.constant 0 : index
    %c0_25 = arith.constant 0 : index
    %c1_26 = arith.constant 1 : index
    %c0_27 = arith.constant 0 : index
    %c0_28 = arith.constant 0 : index
    %22 = vector.load %arg2[%c0_24, %c0_25, %c1_26, %c0_27, %c0_28] : memref<1x1x10x10x4xbf16, #tpu.memory_space<vmem>>, vector<1x1x8x8x4xbf16>
    %23 = vector.shape_cast %22 : vector<1x1x8x8x4xbf16> to vector<8x8x4xbf16>
    %24 = vector.shape_cast %23 : vector<8x8x4xbf16> to vector<64x4xbf16>
    %c3 = arith.constant 3 : index
    %c0_29 = arith.constant 0 : index
    %c0_30 = arith.constant 0 : index
    %25 = vector.load %arg5[%c3, %c0_29, %c0_30] : memref<27x4x16xbf16, #tpu.memory_space<vmem>>, vector<1x4x16xbf16>
    %26 = vector.shape_cast %25 : vector<1x4x16xbf16> to vector<4x16xbf16>
    %cst_31 = arith.constant dense<0.000000e+00> : vector<64x16xf32>
    %27 = tpu.matmul %24, %26, %cst_31 {dimension_numbers = #tpu.dot_dimension_numbers<[1], [0], [0], [1], [0, 0, 1, 1], [], []>} : vector<64x4xbf16>, vector<4x16xbf16>, vector<64x16xf32> -> vector<64x16xf32>
    %28 = arith.addf %21, %27 : vector<64x16xf32>
    %c0_32 = arith.constant 0 : index
    %c0_33 = arith.constant 0 : index
    %c1_34 = arith.constant 1 : index
    %c1_35 = arith.constant 1 : index
    %c0_36 = arith.constant 0 : index
    %29 = vector.load %arg2[%c0_32, %c0_33, %c1_34, %c1_35, %c0_36] : memref<1x1x10x10x4xbf16, #tpu.memory_space<vmem>>, vector<1x1x8x8x4xbf16>
    %30 = vector.shape_cast %29 : vector<1x1x8x8x4xbf16> to vector<8x8x4xbf16>
    %31 = vector.shape_cast %30 : vector<8x8x4xbf16> to vector<64x4xbf16>
    %c4 = arith.constant 4 : index
    %c0_37 = arith.constant 0 : index
    %c0_38 = arith.constant 0 : index
    %32 = vector.load %arg5[%c4, %c0_37, %c0_38] : memref<27x4x16xbf16, #tpu.memory_space<vmem>>, vector<1x4x16xbf16>
    %33 = vector.shape_cast %32 : vector<1x4x16xbf16> to vector<4x16xbf16>
    %cst_39 = arith.constant dense<0.000000e+00> : vector<64x16xf32>
    %34 = tpu.matmul %31, %33, %cst_39 {dimension_numbers = #tpu.dot_dimension_numbers<[1], [0], [0], [1], [0, 0, 1, 1], [], []>} : vector<64x4xbf16>, vector<4x16xbf16>, vector<64x16xf32> -> vector<64x16xf32>
    %35 = arith.addf %28, %34 : vector<64x16xf32>
    %c0_40 = arith.constant 0 : index
    %c0_41 = arith.constant 0 : index
    %c1_42 = arith.constant 1 : index
    %c2_43 = arith.constant 2 : index
    %c0_44 = arith.constant 0 : index
    %36 = vector.load %arg2[%c0_40, %c0_41, %c1_42, %c2_43, %c0_44] : memref<1x1x10x10x4xbf16, #tpu.memory_space<vmem>>, vector<1x1x8x8x4xbf16>
    %37 = vector.shape_cast %36 : vector<1x1x8x8x4xbf16> to vector<8x8x4xbf16>
    %38 = vector.shape_cast %37 : vector<8x8x4xbf16> to vector<64x4xbf16>
    %c5 = arith.constant 5 : index
    %c0_45 = arith.constant 0 : index
    %c0_46 = arith.constant 0 : index
    %39 = vector.load %arg5[%c5, %c0_45, %c0_46] : memref<27x4x16xbf16, #tpu.memory_space<vmem>>, vector<1x4x16xbf16>
    %40 = vector.shape_cast %39 : vector<1x4x16xbf16> to vector<4x16xbf16>
    %cst_47 = arith.constant dense<0.000000e+00> : vector<64x16xf32>
    %41 = tpu.matmul %38, %40, %cst_47 {dimension_numbers = #tpu.dot_dimension_numbers<[1], [0], [0], [1], [0, 0, 1, 1], [], []>} : vector<64x4xbf16>, vector<4x16xbf16>, vector<64x16xf32> -> vector<64x16xf32>
    %42 = arith.addf %35, %41 : vector<64x16xf32>
    %c0_48 = arith.constant 0 : index
    %c0_49 = arith.constant 0 : index
    %c2_50 = arith.constant 2 : index
    %c0_51 = arith.constant 0 : index
    %c0_52 = arith.constant 0 : index
    %43 = vector.load %arg2[%c0_48, %c0_49, %c2_50, %c0_51, %c0_52] : memref<1x1x10x10x4xbf16, #tpu.memory_space<vmem>>, vector<1x1x8x8x4xbf16>
    %44 = vector.shape_cast %43 : vector<1x1x8x8x4xbf16> to vector<8x8x4xbf16>
    %45 = vector.shape_cast %44 : vector<8x8x4xbf16> to vector<64x4xbf16>
    %c6 = arith.constant 6 : index
    %c0_53 = arith.constant 0 : index
    %c0_54 = arith.constant 0 : index
    %46 = vector.load %arg5[%c6, %c0_53, %c0_54] : memref<27x4x16xbf16, #tpu.memory_space<vmem>>, vector<1x4x16xbf16>
    %47 = vector.shape_cast %46 : vector<1x4x16xbf16> to vector<4x16xbf16>
    %cst_55 = arith.constant dense<0.000000e+00> : vector<64x16xf32>
    %48 = tpu.matmul %45, %47, %cst_55 {dimension_numbers = #tpu.dot_dimension_numbers<[1], [0], [0], [1], [0, 0, 1, 1], [], []>} : vector<64x4xbf16>, vector<4x16xbf16>, vector<64x16xf32> -> vector<64x16xf32>
    %49 = arith.addf %42, %48 : vector<64x16xf32>
    %c0_56 = arith.constant 0 : index
    %c0_57 = arith.constant 0 : index
    %c2_58 = arith.constant 2 : index
    %c1_59 = arith.constant 1 : index
    %c0_60 = arith.constant 0 : index
    %50 = vector.load %arg2[%c0_56, %c0_57, %c2_58, %c1_59, %c0_60] : memref<1x1x10x10x4xbf16, #tpu.memory_space<vmem>>, vector<1x1x8x8x4xbf16>
    %51 = vector.shape_cast %50 : vector<1x1x8x8x4xbf16> to vector<8x8x4xbf16>
    %52 = vector.shape_cast %51 : vector<8x8x4xbf16> to vector<64x4xbf16>
    %c7 = arith.constant 7 : index
    %c0_61 = arith.constant 0 : index
    %c0_62 = arith.constant 0 : index
    %53 = vector.load %arg5[%c7, %c0_61, %c0_62] : memref<27x4x16xbf16, #tpu.memory_space<vmem>>, vector<1x4x16xbf16>
    %54 = vector.shape_cast %53 : vector<1x4x16xbf16> to vector<4x16xbf16>
    %cst_63 = arith.constant dense<0.000000e+00> : vector<64x16xf32>
    %55 = tpu.matmul %52, %54, %cst_63 {dimension_numbers = #tpu.dot_dimension_numbers<[1], [0], [0], [1], [0, 0, 1, 1], [], []>} : vector<64x4xbf16>, vector<4x16xbf16>, vector<64x16xf32> -> vector<64x16xf32>
    %56 = arith.addf %49, %55 : vector<64x16xf32>
    %c0_64 = arith.constant 0 : index
    %c0_65 = arith.constant 0 : index
    %c2_66 = arith.constant 2 : index
    %c2_67 = arith.constant 2 : index
    %c0_68 = arith.constant 0 : index
    %57 = vector.load %arg2[%c0_64, %c0_65, %c2_66, %c2_67, %c0_68] : memref<1x1x10x10x4xbf16, #tpu.memory_space<vmem>>, vector<1x1x8x8x4xbf16>
    %58 = vector.shape_cast %57 : vector<1x1x8x8x4xbf16> to vector<8x8x4xbf16>
    %59 = vector.shape_cast %58 : vector<8x8x4xbf16> to vector<64x4xbf16>
    %c8 = arith.constant 8 : index
    %c0_69 = arith.constant 0 : index
    %c0_70 = arith.constant 0 : index
    %60 = vector.load %arg5[%c8, %c0_69, %c0_70] : memref<27x4x16xbf16, #tpu.memory_space<vmem>>, vector<1x4x16xbf16>
    %61 = vector.shape_cast %60 : vector<1x4x16xbf16> to vector<4x16xbf16>
    %cst_71 = arith.constant dense<0.000000e+00> : vector<64x16xf32>
    %62 = tpu.matmul %59, %61, %cst_71 {dimension_numbers = #tpu.dot_dimension_numbers<[1], [0], [0], [1], [0, 0, 1, 1], [], []>} : vector<64x4xbf16>, vector<4x16xbf16>, vector<64x16xf32> -> vector<64x16xf32>
    %63 = arith.addf %56, %62 : vector<64x16xf32>
    %c0_72 = arith.constant 0 : index
    %c0_73 = arith.constant 0 : index
    %c0_74 = arith.constant 0 : index
    %c0_75 = arith.constant 0 : index
    %c0_76 = arith.constant 0 : index
    %64 = vector.load %arg3[%c0_72, %c0_73, %c0_74, %c0_75, %c0_76] : memref<1x1x10x10x4xbf16, #tpu.memory_space<vmem>>, vector<1x1x8x8x4xbf16>
    %65 = vector.shape_cast %64 : vector<1x1x8x8x4xbf16> to vector<8x8x4xbf16>
    %66 = vector.shape_cast %65 : vector<8x8x4xbf16> to vector<64x4xbf16>
    %c9 = arith.constant 9 : index
    %c0_77 = arith.constant 0 : index
    %c0_78 = arith.constant 0 : index
    %67 = vector.load %arg5[%c9, %c0_77, %c0_78] : memref<27x4x16xbf16, #tpu.memory_space<vmem>>, vector<1x4x16xbf16>
    %68 = vector.shape_cast %67 : vector<1x4x16xbf16> to vector<4x16xbf16>
    %cst_79 = arith.constant dense<0.000000e+00> : vector<64x16xf32>
    %69 = tpu.matmul %66, %68, %cst_79 {dimension_numbers = #tpu.dot_dimension_numbers<[1], [0], [0], [1], [0, 0, 1, 1], [], []>} : vector<64x4xbf16>, vector<4x16xbf16>, vector<64x16xf32> -> vector<64x16xf32>
    %70 = arith.addf %63, %69 : vector<64x16xf32>
    %c0_80 = arith.constant 0 : index
    %c0_81 = arith.constant 0 : index
    %c0_82 = arith.constant 0 : index
    %c1_83 = arith.constant 1 : index
    %c0_84 = arith.constant 0 : index
    %71 = vector.load %arg3[%c0_80, %c0_81, %c0_82, %c1_83, %c0_84] : memref<1x1x10x10x4xbf16, #tpu.memory_space<vmem>>, vector<1x1x8x8x4xbf16>
    %72 = vector.shape_cast %71 : vector<1x1x8x8x4xbf16> to vector<8x8x4xbf16>
    %73 = vector.shape_cast %72 : vector<8x8x4xbf16> to vector<64x4xbf16>
    %c10 = arith.constant 10 : index
    %c0_85 = arith.constant 0 : index
    %c0_86 = arith.constant 0 : index
    %74 = vector.load %arg5[%c10, %c0_85, %c0_86] : memref<27x4x16xbf16, #tpu.memory_space<vmem>>, vector<1x4x16xbf16>
    %75 = vector.shape_cast %74 : vector<1x4x16xbf16> to vector<4x16xbf16>
    %cst_87 = arith.constant dense<0.000000e+00> : vector<64x16xf32>
    %76 = tpu.matmul %73, %75, %cst_87 {dimension_numbers = #tpu.dot_dimension_numbers<[1], [0], [0], [1], [0, 0, 1, 1], [], []>} : vector<64x4xbf16>, vector<4x16xbf16>, vector<64x16xf32> -> vector<64x16xf32>
    %77 = arith.addf %70, %76 : vector<64x16xf32>
    %c0_88 = arith.constant 0 : index
    %c0_89 = arith.constant 0 : index
    %c0_90 = arith.constant 0 : index
    %c2_91 = arith.constant 2 : index
    %c0_92 = arith.constant 0 : index
    %78 = vector.load %arg3[%c0_88, %c0_89, %c0_90, %c2_91, %c0_92] : memref<1x1x10x10x4xbf16, #tpu.memory_space<vmem>>, vector<1x1x8x8x4xbf16>
    %79 = vector.shape_cast %78 : vector<1x1x8x8x4xbf16> to vector<8x8x4xbf16>
    %80 = vector.shape_cast %79 : vector<8x8x4xbf16> to vector<64x4xbf16>
    %c11 = arith.constant 11 : index
    %c0_93 = arith.constant 0 : index
    %c0_94 = arith.constant 0 : index
    %81 = vector.load %arg5[%c11, %c0_93, %c0_94] : memref<27x4x16xbf16, #tpu.memory_space<vmem>>, vector<1x4x16xbf16>
    %82 = vector.shape_cast %81 : vector<1x4x16xbf16> to vector<4x16xbf16>
    %cst_95 = arith.constant dense<0.000000e+00> : vector<64x16xf32>
    %83 = tpu.matmul %80, %82, %cst_95 {dimension_numbers = #tpu.dot_dimension_numbers<[1], [0], [0], [1], [0, 0, 1, 1], [], []>} : vector<64x4xbf16>, vector<4x16xbf16>, vector<64x16xf32> -> vector<64x16xf32>
    %84 = arith.addf %77, %83 : vector<64x16xf32>
    %c0_96 = arith.constant 0 : index
    %c0_97 = arith.constant 0 : index
    %c1_98 = arith.constant 1 : index
    %c0_99 = arith.constant 0 : index
    %c0_100 = arith.constant 0 : index
    %85 = vector.load %arg3[%c0_96, %c0_97, %c1_98, %c0_99, %c0_100] : memref<1x1x10x10x4xbf16, #tpu.memory_space<vmem>>, vector<1x1x8x8x4xbf16>
    %86 = vector.shape_cast %85 : vector<1x1x8x8x4xbf16> to vector<8x8x4xbf16>
    %87 = vector.shape_cast %86 : vector<8x8x4xbf16> to vector<64x4xbf16>
    %c12 = arith.constant 12 : index
    %c0_101 = arith.constant 0 : index
    %c0_102 = arith.constant 0 : index
    %88 = vector.load %arg5[%c12, %c0_101, %c0_102] : memref<27x4x16xbf16, #tpu.memory_space<vmem>>, vector<1x4x16xbf16>
    %89 = vector.shape_cast %88 : vector<1x4x16xbf16> to vector<4x16xbf16>
    %cst_103 = arith.constant dense<0.000000e+00> : vector<64x16xf32>
    %90 = tpu.matmul %87, %89, %cst_103 {dimension_numbers = #tpu.dot_dimension_numbers<[1], [0], [0], [1], [0, 0, 1, 1], [], []>} : vector<64x4xbf16>, vector<4x16xbf16>, vector<64x16xf32> -> vector<64x16xf32>
    %91 = arith.addf %84, %90 : vector<64x16xf32>
    %c0_104 = arith.constant 0 : index
    %c0_105 = arith.constant 0 : index
    %c1_106 = arith.constant 1 : index
    %c1_107 = arith.constant 1 : index
    %c0_108 = arith.constant 0 : index
    %92 = vector.load %arg3[%c0_104, %c0_105, %c1_106, %c1_107, %c0_108] : memref<1x1x10x10x4xbf16, #tpu.memory_space<vmem>>, vector<1x1x8x8x4xbf16>
    %93 = vector.shape_cast %92 : vector<1x1x8x8x4xbf16> to vector<8x8x4xbf16>
    %94 = vector.shape_cast %93 : vector<8x8x4xbf16> to vector<64x4xbf16>
    %c13 = arith.constant 13 : index
    %c0_109 = arith.constant 0 : index
    %c0_110 = arith.constant 0 : index
    %95 = vector.load %arg5[%c13, %c0_109, %c0_110] : memref<27x4x16xbf16, #tpu.memory_space<vmem>>, vector<1x4x16xbf16>
    %96 = vector.shape_cast %95 : vector<1x4x16xbf16> to vector<4x16xbf16>
    %cst_111 = arith.constant dense<0.000000e+00> : vector<64x16xf32>
    %97 = tpu.matmul %94, %96, %cst_111 {dimension_numbers = #tpu.dot_dimension_numbers<[1], [0], [0], [1], [0, 0, 1, 1], [], []>} : vector<64x4xbf16>, vector<4x16xbf16>, vector<64x16xf32> -> vector<64x16xf32>
    %98 = arith.addf %91, %97 : vector<64x16xf32>
    %c0_112 = arith.constant 0 : index
    %c0_113 = arith.constant 0 : index
    %c1_114 = arith.constant 1 : index
    %c2_115 = arith.constant 2 : index
    %c0_116 = arith.constant 0 : index
    %99 = vector.load %arg3[%c0_112, %c0_113, %c1_114, %c2_115, %c0_116] : memref<1x1x10x10x4xbf16, #tpu.memory_space<vmem>>, vector<1x1x8x8x4xbf16>
    %100 = vector.shape_cast %99 : vector<1x1x8x8x4xbf16> to vector<8x8x4xbf16>
    %101 = vector.shape_cast %100 : vector<8x8x4xbf16> to vector<64x4xbf16>
    %c14 = arith.constant 14 : index
    %c0_117 = arith.constant 0 : index
    %c0_118 = arith.constant 0 : index
    %102 = vector.load %arg5[%c14, %c0_117, %c0_118] : memref<27x4x16xbf16, #tpu.memory_space<vmem>>, vector<1x4x16xbf16>
    %103 = vector.shape_cast %102 : vector<1x4x16xbf16> to vector<4x16xbf16>
    %cst_119 = arith.constant dense<0.000000e+00> : vector<64x16xf32>
    %104 = tpu.matmul %101, %103, %cst_119 {dimension_numbers = #tpu.dot_dimension_numbers<[1], [0], [0], [1], [0, 0, 1, 1], [], []>} : vector<64x4xbf16>, vector<4x16xbf16>, vector<64x16xf32> -> vector<64x16xf32>
    %105 = arith.addf %98, %104 : vector<64x16xf32>
    %c0_120 = arith.constant 0 : index
    %c0_121 = arith.constant 0 : index
    %c2_122 = arith.constant 2 : index
    %c0_123 = arith.constant 0 : index
    %c0_124 = arith.constant 0 : index
    %106 = vector.load %arg3[%c0_120, %c0_121, %c2_122, %c0_123, %c0_124] : memref<1x1x10x10x4xbf16, #tpu.memory_space<vmem>>, vector<1x1x8x8x4xbf16>
    %107 = vector.shape_cast %106 : vector<1x1x8x8x4xbf16> to vector<8x8x4xbf16>
    %108 = vector.shape_cast %107 : vector<8x8x4xbf16> to vector<64x4xbf16>
    %c15 = arith.constant 15 : index
    %c0_125 = arith.constant 0 : index
    %c0_126 = arith.constant 0 : index
    %109 = vector.load %arg5[%c15, %c0_125, %c0_126] : memref<27x4x16xbf16, #tpu.memory_space<vmem>>, vector<1x4x16xbf16>
    %110 = vector.shape_cast %109 : vector<1x4x16xbf16> to vector<4x16xbf16>
    %cst_127 = arith.constant dense<0.000000e+00> : vector<64x16xf32>
    %111 = tpu.matmul %108, %110, %cst_127 {dimension_numbers = #tpu.dot_dimension_numbers<[1], [0], [0], [1], [0, 0, 1, 1], [], []>} : vector<64x4xbf16>, vector<4x16xbf16>, vector<64x16xf32> -> vector<64x16xf32>
    %112 = arith.addf %105, %111 : vector<64x16xf32>
    %c0_128 = arith.constant 0 : index
    %c0_129 = arith.constant 0 : index
    %c2_130 = arith.constant 2 : index
    %c1_131 = arith.constant 1 : index
    %c0_132 = arith.constant 0 : index
    %113 = vector.load %arg3[%c0_128, %c0_129, %c2_130, %c1_131, %c0_132] : memref<1x1x10x10x4xbf16, #tpu.memory_space<vmem>>, vector<1x1x8x8x4xbf16>
    %114 = vector.shape_cast %113 : vector<1x1x8x8x4xbf16> to vector<8x8x4xbf16>
    %115 = vector.shape_cast %114 : vector<8x8x4xbf16> to vector<64x4xbf16>
    %c16 = arith.constant 16 : index
    %c0_133 = arith.constant 0 : index
    %c0_134 = arith.constant 0 : index
    %116 = vector.load %arg5[%c16, %c0_133, %c0_134] : memref<27x4x16xbf16, #tpu.memory_space<vmem>>, vector<1x4x16xbf16>
    %117 = vector.shape_cast %116 : vector<1x4x16xbf16> to vector<4x16xbf16>
    %cst_135 = arith.constant dense<0.000000e+00> : vector<64x16xf32>
    %118 = tpu.matmul %115, %117, %cst_135 {dimension_numbers = #tpu.dot_dimension_numbers<[1], [0], [0], [1], [0, 0, 1, 1], [], []>} : vector<64x4xbf16>, vector<4x16xbf16>, vector<64x16xf32> -> vector<64x16xf32>
    %119 = arith.addf %112, %118 : vector<64x16xf32>
    %c0_136 = arith.constant 0 : index
    %c0_137 = arith.constant 0 : index
    %c2_138 = arith.constant 2 : index
    %c2_139 = arith.constant 2 : index
    %c0_140 = arith.constant 0 : index
    %120 = vector.load %arg3[%c0_136, %c0_137, %c2_138, %c2_139, %c0_140] : memref<1x1x10x10x4xbf16, #tpu.memory_space<vmem>>, vector<1x1x8x8x4xbf16>
    %121 = vector.shape_cast %120 : vector<1x1x8x8x4xbf16> to vector<8x8x4xbf16>
    %122 = vector.shape_cast %121 : vector<8x8x4xbf16> to vector<64x4xbf16>
    %c17 = arith.constant 17 : index
    %c0_141 = arith.constant 0 : index
    %c0_142 = arith.constant 0 : index
    %123 = vector.load %arg5[%c17, %c0_141, %c0_142] : memref<27x4x16xbf16, #tpu.memory_space<vmem>>, vector<1x4x16xbf16>
    %124 = vector.shape_cast %123 : vector<1x4x16xbf16> to vector<4x16xbf16>
    %cst_143 = arith.constant dense<0.000000e+00> : vector<64x16xf32>
    %125 = tpu.matmul %122, %124, %cst_143 {dimension_numbers = #tpu.dot_dimension_numbers<[1], [0], [0], [1], [0, 0, 1, 1], [], []>} : vector<64x4xbf16>, vector<4x16xbf16>, vector<64x16xf32> -> vector<64x16xf32>
    %126 = arith.addf %119, %125 : vector<64x16xf32>
    %c0_144 = arith.constant 0 : index
    %c0_145 = arith.constant 0 : index
    %c0_146 = arith.constant 0 : index
    %c0_147 = arith.constant 0 : index
    %c0_148 = arith.constant 0 : index
    %127 = vector.load %arg4[%c0_144, %c0_145, %c0_146, %c0_147, %c0_148] : memref<1x1x10x10x4xbf16, #tpu.memory_space<vmem>>, vector<1x1x8x8x4xbf16>
    %128 = vector.shape_cast %127 : vector<1x1x8x8x4xbf16> to vector<8x8x4xbf16>
    %129 = vector.shape_cast %128 : vector<8x8x4xbf16> to vector<64x4xbf16>
    %c18 = arith.constant 18 : index
    %c0_149 = arith.constant 0 : index
    %c0_150 = arith.constant 0 : index
    %130 = vector.load %arg5[%c18, %c0_149, %c0_150] : memref<27x4x16xbf16, #tpu.memory_space<vmem>>, vector<1x4x16xbf16>
    %131 = vector.shape_cast %130 : vector<1x4x16xbf16> to vector<4x16xbf16>
    %cst_151 = arith.constant dense<0.000000e+00> : vector<64x16xf32>
    %132 = tpu.matmul %129, %131, %cst_151 {dimension_numbers = #tpu.dot_dimension_numbers<[1], [0], [0], [1], [0, 0, 1, 1], [], []>} : vector<64x4xbf16>, vector<4x16xbf16>, vector<64x16xf32> -> vector<64x16xf32>
    %133 = arith.addf %126, %132 : vector<64x16xf32>
    %c0_152 = arith.constant 0 : index
    %c0_153 = arith.constant 0 : index
    %c0_154 = arith.constant 0 : index
    %c1_155 = arith.constant 1 : index
    %c0_156 = arith.constant 0 : index
    %134 = vector.load %arg4[%c0_152, %c0_153, %c0_154, %c1_155, %c0_156] : memref<1x1x10x10x4xbf16, #tpu.memory_space<vmem>>, vector<1x1x8x8x4xbf16>
    %135 = vector.shape_cast %134 : vector<1x1x8x8x4xbf16> to vector<8x8x4xbf16>
    %136 = vector.shape_cast %135 : vector<8x8x4xbf16> to vector<64x4xbf16>
    %c19 = arith.constant 19 : index
    %c0_157 = arith.constant 0 : index
    %c0_158 = arith.constant 0 : index
    %137 = vector.load %arg5[%c19, %c0_157, %c0_158] : memref<27x4x16xbf16, #tpu.memory_space<vmem>>, vector<1x4x16xbf16>
    %138 = vector.shape_cast %137 : vector<1x4x16xbf16> to vector<4x16xbf16>
    %cst_159 = arith.constant dense<0.000000e+00> : vector<64x16xf32>
    %139 = tpu.matmul %136, %138, %cst_159 {dimension_numbers = #tpu.dot_dimension_numbers<[1], [0], [0], [1], [0, 0, 1, 1], [], []>} : vector<64x4xbf16>, vector<4x16xbf16>, vector<64x16xf32> -> vector<64x16xf32>
    %140 = arith.addf %133, %139 : vector<64x16xf32>
    %c0_160 = arith.constant 0 : index
    %c0_161 = arith.constant 0 : index
    %c0_162 = arith.constant 0 : index
    %c2_163 = arith.constant 2 : index
    %c0_164 = arith.constant 0 : index
    %141 = vector.load %arg4[%c0_160, %c0_161, %c0_162, %c2_163, %c0_164] : memref<1x1x10x10x4xbf16, #tpu.memory_space<vmem>>, vector<1x1x8x8x4xbf16>
    %142 = vector.shape_cast %141 : vector<1x1x8x8x4xbf16> to vector<8x8x4xbf16>
    %143 = vector.shape_cast %142 : vector<8x8x4xbf16> to vector<64x4xbf16>
    %c20 = arith.constant 20 : index
    %c0_165 = arith.constant 0 : index
    %c0_166 = arith.constant 0 : index
    %144 = vector.load %arg5[%c20, %c0_165, %c0_166] : memref<27x4x16xbf16, #tpu.memory_space<vmem>>, vector<1x4x16xbf16>
    %145 = vector.shape_cast %144 : vector<1x4x16xbf16> to vector<4x16xbf16>
    %cst_167 = arith.constant dense<0.000000e+00> : vector<64x16xf32>
    %146 = tpu.matmul %143, %145, %cst_167 {dimension_numbers = #tpu.dot_dimension_numbers<[1], [0], [0], [1], [0, 0, 1, 1], [], []>} : vector<64x4xbf16>, vector<4x16xbf16>, vector<64x16xf32> -> vector<64x16xf32>
    %147 = arith.addf %140, %146 : vector<64x16xf32>
    %c0_168 = arith.constant 0 : index
    %c0_169 = arith.constant 0 : index
    %c1_170 = arith.constant 1 : index
    %c0_171 = arith.constant 0 : index
    %c0_172 = arith.constant 0 : index
    %148 = vector.load %arg4[%c0_168, %c0_169, %c1_170, %c0_171, %c0_172] : memref<1x1x10x10x4xbf16, #tpu.memory_space<vmem>>, vector<1x1x8x8x4xbf16>
    %149 = vector.shape_cast %148 : vector<1x1x8x8x4xbf16> to vector<8x8x4xbf16>
    %150 = vector.shape_cast %149 : vector<8x8x4xbf16> to vector<64x4xbf16>
    %c21 = arith.constant 21 : index
    %c0_173 = arith.constant 0 : index
    %c0_174 = arith.constant 0 : index
    %151 = vector.load %arg5[%c21, %c0_173, %c0_174] : memref<27x4x16xbf16, #tpu.memory_space<vmem>>, vector<1x4x16xbf16>
    %152 = vector.shape_cast %151 : vector<1x4x16xbf16> to vector<4x16xbf16>
    %cst_175 = arith.constant dense<0.000000e+00> : vector<64x16xf32>
    %153 = tpu.matmul %150, %152, %cst_175 {dimension_numbers = #tpu.dot_dimension_numbers<[1], [0], [0], [1], [0, 0, 1, 1], [], []>} : vector<64x4xbf16>, vector<4x16xbf16>, vector<64x16xf32> -> vector<64x16xf32>
    %154 = arith.addf %147, %153 : vector<64x16xf32>
    %c0_176 = arith.constant 0 : index
    %c0_177 = arith.constant 0 : index
    %c1_178 = arith.constant 1 : index
    %c1_179 = arith.constant 1 : index
    %c0_180 = arith.constant 0 : index
    %155 = vector.load %arg4[%c0_176, %c0_177, %c1_178, %c1_179, %c0_180] : memref<1x1x10x10x4xbf16, #tpu.memory_space<vmem>>, vector<1x1x8x8x4xbf16>
    %156 = vector.shape_cast %155 : vector<1x1x8x8x4xbf16> to vector<8x8x4xbf16>
    %157 = vector.shape_cast %156 : vector<8x8x4xbf16> to vector<64x4xbf16>
    %c22 = arith.constant 22 : index
    %c0_181 = arith.constant 0 : index
    %c0_182 = arith.constant 0 : index
    %158 = vector.load %arg5[%c22, %c0_181, %c0_182] : memref<27x4x16xbf16, #tpu.memory_space<vmem>>, vector<1x4x16xbf16>
    %159 = vector.shape_cast %158 : vector<1x4x16xbf16> to vector<4x16xbf16>
    %cst_183 = arith.constant dense<0.000000e+00> : vector<64x16xf32>
    %160 = tpu.matmul %157, %159, %cst_183 {dimension_numbers = #tpu.dot_dimension_numbers<[1], [0], [0], [1], [0, 0, 1, 1], [], []>} : vector<64x4xbf16>, vector<4x16xbf16>, vector<64x16xf32> -> vector<64x16xf32>
    %161 = arith.addf %154, %160 : vector<64x16xf32>
    %c0_184 = arith.constant 0 : index
    %c0_185 = arith.constant 0 : index
    %c1_186 = arith.constant 1 : index
    %c2_187 = arith.constant 2 : index
    %c0_188 = arith.constant 0 : index
    %162 = vector.load %arg4[%c0_184, %c0_185, %c1_186, %c2_187, %c0_188] : memref<1x1x10x10x4xbf16, #tpu.memory_space<vmem>>, vector<1x1x8x8x4xbf16>
    %163 = vector.shape_cast %162 : vector<1x1x8x8x4xbf16> to vector<8x8x4xbf16>
    %164 = vector.shape_cast %163 : vector<8x8x4xbf16> to vector<64x4xbf16>
    %c23 = arith.constant 23 : index
    %c0_189 = arith.constant 0 : index
    %c0_190 = arith.constant 0 : index
    %165 = vector.load %arg5[%c23, %c0_189, %c0_190] : memref<27x4x16xbf16, #tpu.memory_space<vmem>>, vector<1x4x16xbf16>
    %166 = vector.shape_cast %165 : vector<1x4x16xbf16> to vector<4x16xbf16>
    %cst_191 = arith.constant dense<0.000000e+00> : vector<64x16xf32>
    %167 = tpu.matmul %164, %166, %cst_191 {dimension_numbers = #tpu.dot_dimension_numbers<[1], [0], [0], [1], [0, 0, 1, 1], [], []>} : vector<64x4xbf16>, vector<4x16xbf16>, vector<64x16xf32> -> vector<64x16xf32>
    %168 = arith.addf %161, %167 : vector<64x16xf32>
    %c0_192 = arith.constant 0 : index
    %c0_193 = arith.constant 0 : index
    %c2_194 = arith.constant 2 : index
    %c0_195 = arith.constant 0 : index
    %c0_196 = arith.constant 0 : index
    %169 = vector.load %arg4[%c0_192, %c0_193, %c2_194, %c0_195, %c0_196] : memref<1x1x10x10x4xbf16, #tpu.memory_space<vmem>>, vector<1x1x8x8x4xbf16>
    %170 = vector.shape_cast %169 : vector<1x1x8x8x4xbf16> to vector<8x8x4xbf16>
    %171 = vector.shape_cast %170 : vector<8x8x4xbf16> to vector<64x4xbf16>
    %c24 = arith.constant 24 : index
    %c0_197 = arith.constant 0 : index
    %c0_198 = arith.constant 0 : index
    %172 = vector.load %arg5[%c24, %c0_197, %c0_198] : memref<27x4x16xbf16, #tpu.memory_space<vmem>>, vector<1x4x16xbf16>
    %173 = vector.shape_cast %172 : vector<1x4x16xbf16> to vector<4x16xbf16>
    %cst_199 = arith.constant dense<0.000000e+00> : vector<64x16xf32>
    %174 = tpu.matmul %171, %173, %cst_199 {dimension_numbers = #tpu.dot_dimension_numbers<[1], [0], [0], [1], [0, 0, 1, 1], [], []>} : vector<64x4xbf16>, vector<4x16xbf16>, vector<64x16xf32> -> vector<64x16xf32>
    %175 = arith.addf %168, %174 : vector<64x16xf32>
    %c0_200 = arith.constant 0 : index
    %c0_201 = arith.constant 0 : index
    %c2_202 = arith.constant 2 : index
    %c1_203 = arith.constant 1 : index
    %c0_204 = arith.constant 0 : index
    %176 = vector.load %arg4[%c0_200, %c0_201, %c2_202, %c1_203, %c0_204] : memref<1x1x10x10x4xbf16, #tpu.memory_space<vmem>>, vector<1x1x8x8x4xbf16>
    %177 = vector.shape_cast %176 : vector<1x1x8x8x4xbf16> to vector<8x8x4xbf16>
    %178 = vector.shape_cast %177 : vector<8x8x4xbf16> to vector<64x4xbf16>
    %c25 = arith.constant 25 : index
    %c0_205 = arith.constant 0 : index
    %c0_206 = arith.constant 0 : index
    %179 = vector.load %arg5[%c25, %c0_205, %c0_206] : memref<27x4x16xbf16, #tpu.memory_space<vmem>>, vector<1x4x16xbf16>
    %180 = vector.shape_cast %179 : vector<1x4x16xbf16> to vector<4x16xbf16>
    %cst_207 = arith.constant dense<0.000000e+00> : vector<64x16xf32>
    %181 = tpu.matmul %178, %180, %cst_207 {dimension_numbers = #tpu.dot_dimension_numbers<[1], [0], [0], [1], [0, 0, 1, 1], [], []>} : vector<64x4xbf16>, vector<4x16xbf16>, vector<64x16xf32> -> vector<64x16xf32>
    %182 = arith.addf %175, %181 : vector<64x16xf32>
    %c0_208 = arith.constant 0 : index
    %c0_209 = arith.constant 0 : index
    %c2_210 = arith.constant 2 : index
    %c2_211 = arith.constant 2 : index
    %c0_212 = arith.constant 0 : index
    %183 = vector.load %arg4[%c0_208, %c0_209, %c2_210, %c2_211, %c0_212] : memref<1x1x10x10x4xbf16, #tpu.memory_space<vmem>>, vector<1x1x8x8x4xbf16>
    %184 = vector.shape_cast %183 : vector<1x1x8x8x4xbf16> to vector<8x8x4xbf16>
    %185 = vector.shape_cast %184 : vector<8x8x4xbf16> to vector<64x4xbf16>
    %c26 = arith.constant 26 : index
    %c0_213 = arith.constant 0 : index
    %c0_214 = arith.constant 0 : index
    %186 = vector.load %arg5[%c26, %c0_213, %c0_214] : memref<27x4x16xbf16, #tpu.memory_space<vmem>>, vector<1x4x16xbf16>
    %187 = vector.shape_cast %186 : vector<1x4x16xbf16> to vector<4x16xbf16>
    %cst_215 = arith.constant dense<0.000000e+00> : vector<64x16xf32>
    %188 = tpu.matmul %185, %187, %cst_215 {dimension_numbers = #tpu.dot_dimension_numbers<[1], [0], [0], [1], [0, 0, 1, 1], [], []>} : vector<64x4xbf16>, vector<4x16xbf16>, vector<64x16xf32> -> vector<64x16xf32>
    %189 = arith.addf %182, %188 : vector<64x16xf32>
    %c0_216 = arith.constant 0 : index
    %c0_217 = arith.constant 0 : index
    %190 = vector.load %arg6[%c0_216, %c0_217] : memref<1x16xf32, #tpu.memory_space<vmem>>, vector<1x16xf32>
    %191 = vector.broadcast %190 : vector<1x16xf32> to vector<64x16xf32>
    %192 = arith.mulf %189, %191 : vector<64x16xf32>
    %c0_218 = arith.constant 0 : index
    %c0_219 = arith.constant 0 : index
    %193 = vector.load %arg7[%c0_218, %c0_219] : memref<1x16xf32, #tpu.memory_space<vmem>>, vector<1x16xf32>
    %194 = vector.broadcast %193 : vector<1x16xf32> to vector<64x16xf32>
    %195 = arith.addf %192, %194 : vector<64x16xf32>
    %cst_220 = arith.constant 0.000000e+00 : f32
    %196 = vector.broadcast %cst_220 : f32 to vector<64x16xf32>
    %197 = arith.maximumf %195, %196 : vector<64x16xf32>
    %198 = arith.truncf %197 : vector<64x16xf32> to vector<64x16xbf16>
    %c0_221 = arith.constant 0 : index
    %c0_222 = arith.constant 0 : index
    %c0_223 = arith.constant 0 : index
    %c0_224 = arith.constant 0 : index
    %199 = vector.load %arg8[%c0_221, %c0_222, %c0_223, %c0_224] : memref<1x1x64x16xbf16, #tpu.memory_space<vmem>>, vector<1x1x64x16xbf16>
    %200 = vector.shape_cast %199 : vector<1x1x64x16xbf16> to vector<64x16xbf16>
    %201 = vector.shape_cast %198 : vector<64x16xbf16> to vector<1x1x64x16xbf16>
    tpu.vector_store %arg8[%c0_221, %c0_222, %c0_223, %c0_224], %201 {strides = array<i32>} : memref<1x1x64x16xbf16, #tpu.memory_space<vmem>>, vector<1x1x64x16xbf16>,
    return
  }
  func.func @transform_0(%arg0: i32, %arg1: i32) -> (i32, i32, i32, i32, i32) {
    %c0_i32 = arith.constant 0 : i32
    %0 = arith.addi %arg1, %c0_i32 : i32
    %c0_i32_0 = arith.constant 0 : i32
    %c0_i32_1 = arith.constant 0 : i32
    %c0_i32_2 = arith.constant 0 : i32
    %c0_i32_3 = arith.constant 0 : i32
    return %arg0, %0, %c0_i32_0, %c0_i32_1, %c0_i32_2 : i32, i32, i32, i32, i32
  }
  func.func @transform_1(%arg0: i32, %arg1: i32) -> (i32, i32, i32, i32, i32) {
    %c1_i32 = arith.constant 1 : i32
    %0 = arith.addi %arg1, %c1_i32 : i32
    %c0_i32 = arith.constant 0 : i32
    %c0_i32_0 = arith.constant 0 : i32
    %c0_i32_1 = arith.constant 0 : i32
    %c0_i32_2 = arith.constant 0 : i32
    return %arg0, %0, %c0_i32, %c0_i32_0, %c0_i32_1 : i32, i32, i32, i32, i32
  }
  func.func @transform_2(%arg0: i32, %arg1: i32) -> (i32, i32, i32, i32, i32) {
    %c2_i32 = arith.constant 2 : i32
    %0 = arith.addi %arg1, %c2_i32 : i32
    %c0_i32 = arith.constant 0 : i32
    %c0_i32_0 = arith.constant 0 : i32
    %c0_i32_1 = arith.constant 0 : i32
    %c0_i32_2 = arith.constant 0 : i32
    return %arg0, %0, %c0_i32, %c0_i32_0, %c0_i32_1 : i32, i32, i32, i32, i32
  }
  func.func @transform_3(%arg0: i32, %arg1: i32) -> (i32, i32, i32) {
    %c0_i32 = arith.constant 0 : i32
    %c0_i32_0 = arith.constant 0 : i32
    %c0_i32_1 = arith.constant 0 : i32
    %c0_i32_2 = arith.constant 0 : i32
    return %c0_i32, %c0_i32_0, %c0_i32_1 : i32, i32, i32
  }
  func.func @transform_4(%arg0: i32, %arg1: i32) -> (i32, i32) {
    %c0_i32 = arith.constant 0 : i32
    %c0_i32_0 = arith.constant 0 : i32
    %c0_i32_1 = arith.constant 0 : i32
    return %c0_i32, %c0_i32_0 : i32, i32
  }
  func.func @transform_5(%arg0: i32, %arg1: i32) -> (i32, i32) {
    %c0_i32 = arith.constant 0 : i32
    %c0_i32_0 = arith.constant 0 : i32
    %c0_i32_1 = arith.constant 0 : i32
    return %c0_i32, %c0_i32_0 : i32, i32
  }
  func.func @transform_6(%arg0: i32, %arg1: i32) -> (i32, i32, i32, i32) {
    %c0_i32 = arith.constant 0 : i32
    %c0_i32_0 = arith.constant 0 : i32
    %c0_i32_1 = arith.constant 0 : i32
    return %arg0, %arg1, %c0_i32, %c0_i32_0 : i32, i32, i32, i32
  }
}

</mosaic_0001>

<llo_original>
// kernel: tpu_custom_call.1
$region0: #{tpu_custom_call.1}
  #allocation0 [shape = 'u32[]', space=smem, size = 0x4, offset = 0x4, fixed_abs, tag = 'smem constant byte address 0x4 - core index']
  #allocation1 [shape = 'u32[144,128]{1,0:T(1,128)}', space=vmem, size = 0x12000, scoped, tag = 'internal scratch']
  %s0 = inlined_call_operand.vmem [shape: bf16[2,10,10,10,4], index: 0, kind: input, shape index: {}]
  %s1 = inlined_call_operand.vmem [shape: bf16[2,10,10,10,4], index: 1, kind: input, shape index: {}]
  %s2 = inlined_call_operand.vmem [shape: bf16[2,10,10,10,4], index: 2, kind: input, shape index: {}]
  %s3 = inlined_call_operand.vmem [shape: bf16[27,4,16], index: 3, kind: input, shape index: {}]
  %s4 = inlined_call_operand.vmem [shape: f32[1,16], index: 4, kind: input, shape index: {}]
  %s5 = inlined_call_operand.vmem [shape: f32[1,16], index: 5, kind: input, shape index: {}]
  %s6 = inlined_call_operand.vmem [shape: bf16[2,8,64,16], index: 6, kind: output, shape index: {}]
  %s7 = sld [smem:[#allocation0]]
  $region57: #{tpu_custom_call.1} parent=0
    _
  %s9 = ssub.s32 1, %s7
  %s10 = scalar_select 0, %s9, %s7
  loop: start=0, step=1, limit=18
  $region2: #{tpu_custom_call.1} parent=0 // loop_pre_header
    _
  $region3: #{tpu_custom_call.1} parent=0 // loop_header
    %s12 = sphi 0, %s16
    %p13 = scmp.ge.s32.totalorder %s12, 18
    %s19 = sphi 0, %s31
    %s20 = sphi 0, %s27
    %s21 = sphi 0, %s19
    %s22 = sphi 0, %s20
    %s23 = sphi 0, %s21
    %s24 = sphi 0, %s22
    %s36 = sphi 0, %s38
    %s39 = sphi 0, %s36
    %s40 = sphi 0, %s39
    %s56 = sphi 0, %s40
    %s66 = sphi 0, %s68
    %s69 = sphi 0, %s66
    %s70 = sphi 0, %s69
    %s86 = sphi 0, %s70
    %s96 = sphi 0, %s98
    %s99 = sphi 0, %s96
    %s100 = sphi 0, %s99
    %s116 = sphi 0, %s100
    %s120 = sphi 0, %s120
    %s122 = sphi 0, %s120
    %s123 = sphi 0, %s122
    %s137 = sphi 0, %s123
    %s141 = sphi 0, %s141
    %s143 = sphi 0, %s141
    %s144 = sphi 0, %s143
    %s158 = sphi 0, %s144
    %s162 = sphi 0, %s162
    %s164 = sphi 0, %s162
    %s165 = sphi 0, %s164
    %s179 = sphi 0, %s165
    %s187 = sphi 0, %s189
    %s190 = sphi 0, %s187
    %s191 = sphi 0, %s190
    %s207 = sphi 0, %s191
  $region4: #{tpu_custom_call.1} parent=0 // loop_header_branch
    %15 = sbr.rel (%p13) target = $region8
  $region5: #{tpu_custom_call.1} parent=0 // loop_body
    %s17 = ssub.s32 %s12, 1
    %s18 = ssub.s32 %s12, 2
    %s25 = sadd.s32 1, %s20
    %p26 = scmp.ge.s32.totalorder %s25, 8
    %s27 = scalar_select %p26, 0, %s25
    %s28 = sadd.s32 1, %s19
    %s29 = scalar_select %p26, %s28, %s19
    %p30 = scmp.ge.s32.totalorder %s29, 2
    %s31 = scalar_select %p30, 0, %s29
    %s32 = ssub.s32 %s19, %s31
    %s33 = ssub.s32 %s20, %s27
    %s34 = sor.u32 %s32, %s33
    %p35 = scmp.eq.s32.totalorder %s34, 0
    %s37 = sadd.s32 %s36, 1
    %s38 = scalar_select %p35, %s36, %s37
    %p41 = pneg %p35
    %p42 = scmp.eq.s32.totalorder %s12, 15
    %p43 = por %p41, %p42
    %p44 = scmp.ne.s32.totalorder %s36, %s39
    %p45 = scmp.eq.s32.totalorder %s12, 0
    %p46 = por %p44, %p45
    %p47 = scmp.ne.s32.totalorder %s36, %s39
    %p48 = scmp.eq.s32.totalorder %s17, 15
    %p49 = por %p47, %p48
    %p50 = scmp.ne.s32.totalorder %s39, %s40
    %p51 = scmp.eq.s32.totalorder %s17, 0
    %p52 = por %p50, %p51
    %p53 = scmp.ne.s32.totalorder %s39, %s40
    %p54 = scmp.eq.s32.totalorder %s18, 15
    %p55 = por %p53, %p54
    %p57 = scmp.ne.s32.totalorder %s40, %s56
    %p58 = scmp.eq.s32.totalorder %s18, 0
    %p59 = por %p57, %p58
    %s60 = sadd.s32 %s20, 1
    %s61 = sadd.s32 %s27, 1
    %s62 = ssub.s32 %s19, %s31
    %s63 = ssub.s32 %s60, %s61
    %s64 = sor.u32 %s62, %s63
    %p65 = scmp.eq.s32.totalorder %s64, 0
    %s67 = sadd.s32 %s66, 1
    %s68 = scalar_select %p65, %s66, %s67
    %p71 = pneg %p65
    %p72 = scmp.eq.s32.totalorder %s12, 15
    %p73 = por %p71, %p72
    %p74 = scmp.ne.s32.totalorder %s66, %s69
    %p75 = scmp.eq.s32.totalorder %s12, 0
    %p76 = por %p74, %p75
    %p77 = scmp.ne.s32.totalorder %s66, %s69
    %p78 = scmp.eq.s32.totalorder %s17, 15
    %p79 = por %p77, %p78
    %p80 = scmp.ne.s32.totalorder %s69, %s70
    %p81 = scmp.eq.s32.totalorder %s17, 0
    %p82 = por %p80, %p81
    %p83 = scmp.ne.s32.totalorder %s69, %s70
    %p84 = scmp.eq.s32.totalorder %s18, 15
    %p85 = por %p83, %p84
    %p87 = scmp.ne.s32.totalorder %s70, %s86
    %p88 = scmp.eq.s32.totalorder %s18, 0
    %p89 = por %p87, %p88
    %s90 = sadd.s32 %s20, 2
    %s91 = sadd.s32 %s27, 2
    %s92 = ssub.s32 %s19, %s31
    %s93 = ssub.s32 %s90, %s91
    %s94 = sor.u32 %s92, %s93
    %p95 = scmp.eq.s32.totalorder %s94, 0
    %s97 = sadd.s32 %s96, 1
    %s98 = scalar_select %p95, %s96, %s97
    %p101 = pneg %p95
    %p102 = scmp.eq.s32.totalorder %s12, 15
    %p103 = por %p101, %p102
    %p104 = scmp.ne.s32.totalorder %s96, %s99
    %p105 = scmp.eq.s32.totalorder %s12, 0
    %p106 = por %p104, %p105
    %p107 = scmp.ne.s32.totalorder %s96, %s99
    %p108 = scmp.eq.s32.totalorder %s17, 15
    %p109 = por %p107, %p108
    %p110 = scmp.ne.s32.totalorder %s99, %s100
    %p111 = scmp.eq.s32.totalorder %s17, 0
    %p112 = por %p110, %p111
    %p113 = scmp.ne.s32.totalorder %s99, %s100
    %p114 = scmp.eq.s32.totalorder %s18, 15
    %p115 = por %p113, %p114
    %p117 = scmp.ne.s32.totalorder %s100, %s116
    %p118 = scmp.eq.s32.totalorder %s18, 0
    %p119 = por %p117, %p118
    %s121 = sadd.s32 %s120, 1
    %p124 = scmp.eq.s32.totalorder %s12, 15
    %p125 = scmp.ne.s32.totalorder %s120, %s122
    %p126 = scmp.eq.s32.totalorder %s12, 0
    %p127 = por %p125, %p126
    %p128 = scmp.ne.s32.totalorder %s120, %s122
    %p129 = scmp.eq.s32.totalorder %s17, 15
    %p130 = por %p128, %p129
    %p131 = scmp.ne.s32.totalorder %s122, %s123
    %p132 = scmp.eq.s32.totalorder %s17, 0
    %p133 = por %p131, %p132
    %p134 = scmp.ne.s32.totalorder %s122, %s123
    %p135 = scmp.eq.s32.totalorder %s18, 15
    %p136 = por %p134, %p135
    %p138 = scmp.ne.s32.totalorder %s123, %s137
    %p139 = scmp.eq.s32.totalorder %s18, 0
    %p140 = por %p138, %p139
    %s142 = sadd.s32 %s141, 1
    %p145 = scmp.eq.s32.totalorder %s12, 15
    %p146 = scmp.ne.s32.totalorder %s141, %s143
    %p147 = scmp.eq.s32.totalorder %s12, 0
    %p148 = por %p146, %p147
    %p149 = scmp.ne.s32.totalorder %s141, %s143
    %p150 = scmp.eq.s32.totalorder %s17, 15
    %p151 = por %p149, %p150
    %p152 = scmp.ne.s32.totalorder %s143, %s144
    %p153 = scmp.eq.s32.totalorder %s17, 0
    %p154 = por %p152, %p153
    %p155 = scmp.ne.s32.totalorder %s143, %s144
    %p156 = scmp.eq.s32.totalorder %s18, 15
    %p157 = por %p155, %p156
    %p159 = scmp.ne.s32.totalorder %s144, %s158
    %p160 = scmp.eq.s32.totalorder %s18, 0
    %p161 = por %p159, %p160
    %s163 = sadd.s32 %s162, 1
    %p166 = scmp.eq.s32.totalorder %s12, 15
    %p167 = scmp.ne.s32.totalorder %s162, %s164
    %p168 = scmp.eq.s32.totalorder %s12, 0
    %p169 = por %p167, %p168
    %p170 = scmp.ne.s32.totalorder %s162, %s164
    %p171 = scmp.eq.s32.totalorder %s17, 15
    %p172 = por %p170, %p171
    %p173 = scmp.ne.s32.totalorder %s164, %s165
    %p174 = scmp.eq.s32.totalorder %s17, 0
    %p175 = por %p173, %p174
    %p176 = scmp.ne.s32.totalorder %s164, %s165
    %p177 = scmp.eq.s32.totalorder %s18, 15
    %p178 = por %p176, %p177
    %p180 = scmp.ne.s32.totalorder %s165, %s179
    %p181 = scmp.eq.s32.totalorder %s18, 0
    %p182 = por %p180, %p181
    %s183 = ssub.s32 %s19, %s31
    %s184 = ssub.s32 %s20, %s27
    %s185 = sor.u32 %s183, %s184
    %p186 = scmp.eq.s32.totalorder %s185, 0
    %s188 = sadd.s32 %s187, 1
    %s189 = scalar_select %p186, %s187, %s188
    %p192 = pneg %p186
    %p193 = scmp.eq.s32.totalorder %s12, 15
    %p194 = por %p192, %p193
    %p195 = scmp.ne.s32.totalorder %s187, %s190
    %p196 = scmp.eq.s32.totalorder %s12, 0
    %p197 = por %p195, %p196
    %p198 = scmp.ne.s32.totalorder %s187, %s190
    %p199 = scmp.eq.s32.totalorder %s17, 15
    %p200 = por %p198, %p199
    %p201 = scmp.ne.s32.totalorder %s190, %s191
    %p202 = scmp.eq.s32.totalorder %s17, 0
    %p203 = por %p201, %p202
    %p204 = scmp.ne.s32.totalorder %s190, %s191
    %p205 = scmp.eq.s32.totalorder %s18, 15
    %p206 = por %p204, %p205
    %p208 = scmp.ne.s32.totalorder %s191, %s207
    %p209 = scmp.eq.s32.totalorder %s18, 0
    %p210 = por %p208, %p209
    %p211 = scmp.le.s32.totalorder 1, %s12
    %p212 = scmp.lt.s32.totalorder %s12, 17
    %p213 = pnand %p211, %p212
    %p214 = pneg %p213
    // Predicated region
    $region9: #{tpu_custom_call.1} parent=5 // pred_check
      _
    $region10: #{tpu_custom_call.1} parent=5 // pred_check_branch
      %216 = sbr.rel (%p213) target = $region12
    $region11: #{tpu_custom_call.1} parent=5 // pred_region
      %s217 = ssub.s32 %s12, 1
      // Predicated region
      $region13: #{tpu_custom_call.1} parent=11 // pred_check
        %p218 = pneg %p133
      $region14: #{tpu_custom_call.1} parent=11 // pred_check_branch
        %220 = sbr.rel (%p218) target = $region16
      $region15: #{tpu_custom_call.1} parent=11 // pred_region
        _
      $region16: #{tpu_custom_call.1} parent=11 // pred_fallthru
        _
      // Predicated region
      $region17: #{tpu_custom_call.1} parent=11 // pred_check
        %p221 = pneg %p154
      $region18: #{tpu_custom_call.1} parent=11 // pred_check_branch
        %223 = sbr.rel (%p221) target = $region20
      $region19: #{tpu_custom_call.1} parent=11 // pred_region
        _
      $region20: #{tpu_custom_call.1} parent=11 // pred_fallthru
        _
      // Predicated region
      $region21: #{tpu_custom_call.1} parent=11 // pred_check
        %p224 = pneg %p175
      $region22: #{tpu_custom_call.1} parent=11 // pred_check_branch
        %226 = sbr.rel (%p224) target = $region24
      $region23: #{tpu_custom_call.1} parent=11 // pred_region
        _
      $region24: #{tpu_custom_call.1} parent=11 // pred_fallthru
        _
    $region12: #{tpu_custom_call.1} parent=5 // pred_fallthru
      _
    %p227 = scmp.lt.s32.totalorder %s12, 16
    // Predicated region
    $region25: #{tpu_custom_call.1} parent=5 // pred_check
      %p228 = pneg %p227
    $region26: #{tpu_custom_call.1} parent=5 // pred_check_branch
      %230 = sbr.rel (%p228) target = $region28
    $region27: #{tpu_custom_call.1} parent=5 // pred_region
      // Predicated region
      $region29: #{tpu_custom_call.1} parent=27 // pred_check
        %p231 = pneg %p46
      $region30: #{tpu_custom_call.1} parent=27 // pred_check_branch
        %233 = sbr.rel (%p231) target = $region32
      $region31: #{tpu_custom_call.1} parent=27 // pred_region
        %p234 = scmp.lt.s32.totalorder %s19, 1
        %s235 = scalar_select %p234, %s19, 1
        %p236 = scmp.lt.s32.totalorder %s20, 9
        %s237 = scalar_select %p236, %s20, 9
        %s238 = smul.addr %s237, 20
        %s239 = smul.addr %s235, 200
        %s240 = sadd.s32 %s238, %s239
        %s241 = smul.addr %s240, 4
        %s242 = scalar_lea.vmem %s0, %s241
      $region32: #{tpu_custom_call.1} parent=27 // pred_fallthru
        _
      // Predicated region
      $region33: #{tpu_custom_call.1} parent=27 // pred_check
        %p243 = pneg %p76
      $region34: #{tpu_custom_call.1} parent=27 // pred_check_branch
        %245 = sbr.rel (%p243) target = $region36
      $region35: #{tpu_custom_call.1} parent=27 // pred_region
        %s246 = sadd.s32 %s20, 1
        %p247 = scmp.lt.s32.totalorder %s19, 1
        %s248 = scalar_select %p247, %s19, 1
        %p249 = scmp.lt.s32.totalorder %s246, 9
        %s250 = scalar_select %p249, %s246, 9
        %s251 = smul.addr %s250, 20
        %s252 = smul.addr %s248, 200
        %s253 = sadd.s32 %s251, %s252
        %s254 = smul.addr %s253, 4
        %s255 = scalar_lea.vmem %s1, %s254
        %s256 = sadd.s32 %s20, 1
      $region36: #{tpu_custom_call.1} parent=27 // pred_fallthru
        _
      // Predicated region
      $region37: #{tpu_custom_call.1} parent=27 // pred_check
        %p257 = pneg %p106
      $region38: #{tpu_custom_call.1} parent=27 // pred_check_branch
        %259 = sbr.rel (%p257) target = $region40
      $region39: #{tpu_custom_call.1} parent=27 // pred_region
        %s260 = sadd.s32 %s20, 2
        %p261 = scmp.lt.s32.totalorder %s19, 1
        %s262 = scalar_select %p261, %s19, 1
        %p263 = scmp.lt.s32.totalorder %s260, 9
        %s264 = scalar_select %p263, %s260, 9
        %s265 = smul.addr %s264, 20
        %s266 = smul.addr %s262, 200
        %s267 = sadd.s32 %s265, %s266
        %s268 = smul.addr %s267, 4
        %s269 = scalar_lea.vmem %s2, %s268
        %s270 = sadd.s32 %s20, 2
      $region40: #{tpu_custom_call.1} parent=27 // pred_fallthru
        _
    $region28: #{tpu_custom_call.1} parent=5 // pred_fallthru
      _
    %p271 = scmp.le.s32.totalorder 1, %s12
    %p272 = scmp.lt.s32.totalorder %s12, 17
    %p273 = pnand %p271, %p272
    %p274 = pneg %p273
    // Predicated region
    $region41: #{tpu_custom_call.1} parent=5 // pred_check
      _
    $region42: #{tpu_custom_call.1} parent=5 // pred_check_branch
      %276 = sbr.rel (%p273) target = $region44
    $region43: #{tpu_custom_call.1} parent=5 // pred_region
      %s277 = ssub.s32 %s12, 1
      %p278 = scmp.lt.s32.totalorder %s21, 1
      %s279 = scalar_select %p278, %s21, 1
      %p280 = scmp.lt.s32.totalorder %s22, 9
      %s281 = scalar_select %p280, %s22, 9
      %s282 = smul.addr %s281, 20
      %s283 = smul.addr %s279, 200
      %s284 = sadd.s32 %s282, %s283
      %s285 = smul.addr %s284, 4
      %s286 = scalar_lea.vmem %s0, %s285
      %p287 = pneg %p52
      %p288 = pneg %p49
      %s289 = sadd.s32 %s22, 1
      %p290 = scmp.lt.s32.totalorder %s21, 1
      %s291 = scalar_select %p290, %s21, 1
      %p292 = scmp.lt.s32.totalorder %s289, 9
      %s293 = scalar_select %p292, %s289, 9
      %s294 = smul.addr %s293, 20
      %s295 = smul.addr %s291, 200
      %s296 = sadd.s32 %s294, %s295
      %s297 = smul.addr %s296, 4
      %s298 = scalar_lea.vmem %s1, %s297
      %p299 = pneg %p82
      %p300 = pneg %p79
      %s301 = sadd.s32 %s22, 2
      %p302 = scmp.lt.s32.totalorder %s21, 1
      %s303 = scalar_select %p302, %s21, 1
      %p304 = scmp.lt.s32.totalorder %s301, 9
      %s305 = scalar_select %p304, %s301, 9
      %s306 = smul.addr %s305, 20
      %s307 = smul.addr %s303, 200
      %s308 = sadd.s32 %s306, %s307
      %s309 = smul.addr %s308, 4
      %s310 = scalar_lea.vmem %s2, %s309
      %p311 = pneg %p112
      %p312 = pneg %p109
      %p313 = pneg %p133
      %p314 = pneg %p130
      %p315 = pneg %p154
      %p316 = pneg %p151
      %p317 = pneg %p175
      %p318 = pneg %p172
      %p319 = pneg %p203
      %p320 = pneg %p200
      %p321 = scmp.lt.s32.totalorder %s21, 1
      %s322 = scalar_select %p321, %s21, 1
      %p323 = scmp.lt.s32.totalorder %s22, 7
      %s324 = scalar_select %p323, %s22, 7
      %s325 = smul.addr %s324, 8
      %s326 = smul.addr %s322, 64
      %s327 = sadd.s32 %s325, %s326
      %s328 = smul.addr %s327, 4
      %s329 = scalar_lea.vmem %s6, %s328
      %p330 = scmp.lt.s32.totalorder %s21, 1
      %s331 = scalar_select %p330, %s21, 1
      %p332 = scmp.lt.s32.totalorder %s22, 9
      %s333 = scalar_select %p332, %s22, 9
      %s334 = smul.addr %s333, 20
      %s335 = smul.addr %s331, 200
      %s336 = sadd.s32 %s334, %s335
      %s337 = smul.addr %s336, 4
      %s338 = scalar_lea.vmem %s0, %s337
      %s339 = sadd.s32 %s22, 1
      %p340 = scmp.lt.s32.totalorder %s21, 1
      %s341 = scalar_select %p340, %s21, 1
      %p342 = scmp.lt.s32.totalorder %s339, 9
      %s343 = scalar_select %p342, %s339, 9
      %s344 = smul.addr %s343, 20
      %s345 = smul.addr %s341, 200
      %s346 = sadd.s32 %s344, %s345
      %s347 = smul.addr %s346, 4
      %s348 = scalar_lea.vmem %s1, %s347
      %s349 = sadd.s32 %s22, 1
      %s350 = sadd.s32 %s22, 2
      %p351 = scmp.lt.s32.totalorder %s21, 1
      %s352 = scalar_select %p351, %s21, 1
      %p353 = scmp.lt.s32.totalorder %s350, 9
      %s354 = scalar_select %p353, %s350, 9
      %s355 = smul.addr %s354, 20
      %s356 = smul.addr %s352, 200
      %s357 = sadd.s32 %s355, %s356
      %s358 = smul.addr %s357, 4
      %s359 = scalar_lea.vmem %s2, %s358
      %s360 = sadd.s32 %s22, 2
      %p361 = scmp.lt.s32.totalorder %s21, 1
      %s362 = scalar_select %p361, %s21, 1
      %p363 = scmp.lt.s32.totalorder %s22, 7
      %s364 = scalar_select %p363, %s22, 7
      %s365 = smul.addr %s364, 8
      %s366 = smul.addr %s362, 64
      %s367 = sadd.s32 %s365, %s366
      %s368 = smul.addr %s367, 4
      %s369 = scalar_lea.vmem %s6, %s368
      %v371 = vld [vmem:[%s338] sm:$0xf]
      %v372 = vld [vmem:[%s338 + $0x8] sm:$0xf]
      %v373 = vld [vmem:[%s338 + $0x10] sm:$0xf]
      %v374 = vld [vmem:[%s338 + $0x18] sm:$0xf]
      %v375 = vld [vmem:[%s338 + $0x20] sm:$0xf]
      %v376 = vld [vmem:[%s338 + $0x28] sm:$0xf]
      %v377 = vld [vmem:[%s338 + $0x30] sm:$0xf]
      %v378 = vld [vmem:[%s338 + $0x38] sm:$0xf]
      %v379 = vld [vmem:[%s3] sm:$0x3]
      %v380 = vld [vmem:[%s338 + $0x4] sm:$0x1]
      %v381 = vld [vmem:[%s338 + $0xc] sm:$0x1]
      %v382 = vld [vmem:[%s338 + $0x14] sm:$0x1]
      %v383 = vld [vmem:[%s338 + $0x1c] sm:$0x1]
      %v384 = vld [vmem:[%s338 + $0x24] sm:$0x1]
      %v385 = vld [vmem:[%s338 + $0x2c] sm:$0x1]
      %v386 = vld [vmem:[%s338 + $0x34] sm:$0x1]
      %v387 = vld [vmem:[%s338 + $0x3c] sm:$0x1]
      %vm388 = vsmask.f32 3328
      %vm389 = vsmask.f32 7440
      %vm390 = vmor %vm388, %vm389
      %v392 = vshrl.u32 %v371, 16
      %v394 = vrot.slane %v392, 4
      %v395 = vshll.u32 %v371, 16
      %v397 = vrot.slane %v395, 5
      %v398 = vor.u32 %v394, %v397
      %v399 = vrot.slane %v398, 4
      %v401 = vshll.u32 %v380, 16
      %v403 = vrot.slane %v401, 5
      %v404 = vsel %vm390, %v399, %v403
      %v406 = vshrl.u32 %v372, 16
      %v408 = vrot.slane %v406, 4
      %v409 = vshll.u32 %v372, 16
      %v411 = vrot.slane %v409, 5
      %v412 = vor.u32 %v408, %v411
      %v413 = vrot.slane %v412, 4
      %v415 = vshll.u32 %v381, 16
      %v417 = vrot.slane %v415, 5
      %v418 = vsel %vm390, %v413, %v417
      %v420 = vshrl.u32 %v373, 16
      %v422 = vrot.slane %v420, 4
      %v423 = vshll.u32 %v373, 16
      %v425 = vrot.slane %v423, 5
      %v426 = vor.u32 %v422, %v425
      %v427 = vrot.slane %v426, 4
      %v429 = vshll.u32 %v382, 16
      %v431 = vrot.slane %v429, 5
      %v432 = vsel %vm390, %v427, %v431
      %v434 = vshrl.u32 %v374, 16
      %v436 = vrot.slane %v434, 4
      %v437 = vshll.u32 %v374, 16
      %v439 = vrot.slane %v437, 5
      %v440 = vor.u32 %v436, %v439
      %v441 = vrot.slane %v440, 4
      %v443 = vshll.u32 %v383, 16
      %v445 = vrot.slane %v443, 5
      %v446 = vsel %vm390, %v441, %v445
      %v448 = vshrl.u32 %v375, 16
      %v450 = vrot.slane %v448, 4
      %v451 = vshll.u32 %v375, 16
      %v453 = vrot.slane %v451, 5
      %v454 = vor.u32 %v450, %v453
      %v455 = vrot.slane %v454, 4
      %v457 = vshll.u32 %v384, 16
      %v459 = vrot.slane %v457, 5
      %v460 = vsel %vm390, %v455, %v459
      %v462 = vshrl.u32 %v376, 16
      %v464 = vrot.slane %v462, 4
      %v465 = vshll.u32 %v376, 16
      %v467 = vrot.slane %v465, 5
      %v468 = vor.u32 %v464, %v467
      %v469 = vrot.slane %v468, 4
      %v471 = vshll.u32 %v385, 16
      %v473 = vrot.slane %v471, 5
      %v474 = vsel %vm390, %v469, %v473
      %v476 = vshrl.u32 %v377, 16
      %v478 = vrot.slane %v476, 4
      %v479 = vshll.u32 %v377, 16
      %v481 = vrot.slane %v479, 5
      %v482 = vor.u32 %v478, %v481
      %v483 = vrot.slane %v482, 4
      %v485 = vshll.u32 %v386, 16
      %v487 = vrot.slane %v485, 5
      %v488 = vsel %vm390, %v483, %v487
      %v490 = vshrl.u32 %v378, 16
      %v492 = vrot.slane %v490, 4
      %v493 = vshll.u32 %v378, 16
      %v495 = vrot.slane %v493, 5
      %v496 = vor.u32 %v492, %v495
      %v497 = vrot.slane %v496, 4
      %v499 = vshll.u32 %v387, 16
      %v501 = vrot.slane %v499, 5
      %v502 = vsel %vm390, %v497, %v501
      %s503 = scalar_lea.vmem %s3, 2
      %v504 = vld [vmem:[%s503] sm:$0x3]
      %v505 = vunpack.c.l.b16 %v404
      %v506 = vunpack.c.l.b16 %v418
      %v507 = vunpack.c.l.b16 %v432
      %v508 = vunpack.c.l.b16 %v446
      %v509 = vunpack.c.l.b16 %v460
      %v510 = vunpack.c.l.b16 %v474
      %v511 = vunpack.c.l.b16 %v488
      %v512 = vunpack.c.l.b16 %v502
      %v513 = vpack.c.b16 %v506, %v505
      %v514 = vpack.c.b16 %v508, %v507
      %v515 = vpack.c.b16 %v510, %v509
      %v516 = vpack.c.b16 %v512, %v511
      %vm517 = vcmask 31744
      %v519 = vsel %vm517, %v513, 0
      %v522 = vsel %vm517, %v514, 0
      %v525 = vsel %vm517, %v515, 0
      %v528 = vsel %vm517, %v516, 0
      %vm530 = vcmask 1041408
      %v532 = vsel %vm530, %v504, 0
      %534 = vmatprep.subr.bf16.mxu0 0
      %535 = vmatpush1.bf16.msra.mxu0 %v532
      %536 = vmatprep.subr.bf16.mxu0 0
      %537 = vmatpush1.bf16.msra.mxu0 0
      %538 = vmatprep.subr.bf16.mxu0 0
      %539 = vmatpush1.bf16.msra.mxu0 0
      %540 = vmatprep.subr.bf16.mxu0 0
      %541 = vmatpush1.bf16.msra.mxu0 0
      %542 = vmatprep.subr.bf16.mxu0 0
      %543 = vmatpush1.bf16.msra.mxu0 0
      %544 = vmatprep.subr.bf16.mxu0 0
      %545 = vmatpush1.bf16.msra.mxu0 0
      %546 = vmatprep.subr.bf16.mxu0 0
      %547 = vmatpush1.bf16.msra.mxu0 0
      %548 = vmatprep.subr.bf16.mxu0 0
      %549 = vmatpush1.bf16.msra.mxu0 0
      %550 = vmatprep.subr.bf16.mxu0 0
      %551 = vmatpush1.bf16.msra.mxu0 0
      %552 = vmatprep.subr.bf16.mxu0 0
      %553 = vmatpush1.bf16.msra.mxu0 0
      %554 = vmatprep.subr.bf16.mxu0 0
      %555 = vmatpush1.bf16.msra.mxu0 0
      %556 = vmatprep.subr.bf16.mxu0 0
      %557 = vmatpush1.bf16.msra.mxu0 0
      %558 = vmatprep.subr.bf16.mxu0 0
      %559 = vmatpush1.bf16.msra.mxu0 0
      %560 = vmatprep.subr.bf16.mxu0 0
      %561 = vmatpush1.bf16.msra.mxu0 0
      %562 = vmatprep.subr.bf16.mxu0 0
      %563 = vmatpush1.bf16.msra.mxu0 0
      %564 = vmatprep.subr.bf16.mxu0 0
      %565 = vmatpush1.bf16.msra.mxu0 0
      %566 = vmatprep.mubr.bf16.mxu0 0
      %567 = vmatmul.mubr.bf16.gmra.mrb[0].mxu0 %v519
      %v568 = vpop.f32.mrb[0].mxu0
      %v569 = vadd.f32 0.0, %v568
      %v570 = vpop.f32.mrb[0].mxu0
      %v571 = vpop.f32.mrb[0].mxu0
      %v572 = vadd.f32 0.0, %v571
      %v573 = vpop.f32.mrb[0].mxu0
      %574 = vmatprep.mubr.bf16.mxu0 0
      %575 = vmatmul.mubr.bf16.gmra.mrb[0].mxu0 %v522
      %v576 = vpop.f32.mrb[0].mxu0
      %v577 = vadd.f32 0.0, %v576
      %v578 = vpop.f32.mrb[0].mxu0
      %v579 = vpop.f32.mrb[0].mxu0
      %v580 = vadd.f32 0.0, %v579
      %v581 = vpop.f32.mrb[0].mxu0
      %582 = vmatprep.mubr.bf16.mxu0 0
      %583 = vmatmul.mubr.bf16.gmra.mrb[0].mxu0 %v525
      %v584 = vpop.f32.mrb[0].mxu0
      %v585 = vadd.f32 0.0, %v584
      %v586 = vpop.f32.mrb[0].mxu0
      %v587 = vpop.f32.mrb[0].mxu0
      %v588 = vadd.f32 0.0, %v587
      %v589 = vpop.f32.mrb[0].mxu0
      %590 = vmatprep.mubr.bf16.mxu0 0
      %591 = vmatmul.mubr.bf16.gmra.mrb[0].mxu0 %v528
      %v592 = vpop.f32.mrb[0].mxu0
      %v593 = vadd.f32 0.0, %v592
      %v594 = vpop.f32.mrb[0].mxu0
      %v595 = vpop.f32.mrb[0].mxu0
      %v596 = vadd.f32 0.0, %v595
      %v597 = vpop.f32.mrb[0].mxu0
      %598 = vdwg.mxu0
      %v607 = vunpack.c.l.b16 %v371
      %v608 = vunpack.c.l.b16 %v372
      %v609 = vunpack.c.l.b16 %v373
      %v610 = vunpack.c.l.b16 %v374
      %v611 = vunpack.c.l.b16 %v375
      %v612 = vunpack.c.l.b16 %v376
      %v613 = vunpack.c.l.b16 %v377
      %v614 = vunpack.c.l.b16 %v378
      %v615 = vpack.c.b16 %v608, %v607
      %v616 = vpack.c.b16 %v610, %v609
      %v617 = vpack.c.b16 %v612, %v611
      %v618 = vpack.c.b16 %v614, %v613
      %v620 = vsel %vm517, %v615, 0
      %v623 = vsel %vm517, %v616, 0
      %v626 = vsel %vm517, %v617, 0
      %v629 = vsel %vm517, %v618, 0
      %v632 = vsel %vm530, %v379, 0
      %634 = vmatprep.subr.bf16.mxu0 0
      %635 = vmatpush1.bf16.msra.mxu0 %v632
      %636 = vmatprep.subr.bf16.mxu0 0
      %637 = vmatpush1.bf16.msra.mxu0 0
      %638 = vmatprep.subr.bf16.mxu0 0
      %639 = vmatpush1.bf16.msra.mxu0 0
      %640 = vmatprep.subr.bf16.mxu0 0
      %641 = vmatpush1.bf16.msra.mxu0 0
      %642 = vmatprep.subr.bf16.mxu0 0
      %643 = vmatpush1.bf16.msra.mxu0 0
      %644 = vmatprep.subr.bf16.mxu0 0
      %645 = vmatpush1.bf16.msra.mxu0 0
      %646 = vmatprep.subr.bf16.mxu0 0
      %647 = vmatpush1.bf16.msra.mxu0 0
      %648 = vmatprep.subr.bf16.mxu0 0
      %649 = vmatpush1.bf16.msra.mxu0 0
      %650 = vmatprep.subr.bf16.mxu0 0
      %651 = vmatpush1.bf16.msra.mxu0 0
      %652 = vmatprep.subr.bf16.mxu0 0
      %653 = vmatpush1.bf16.msra.mxu0 0
      %654 = vmatprep.subr.bf16.mxu0 0
      %655 = vmatpush1.bf16.msra.mxu0 0
      %656 = vmatprep.subr.bf16.mxu0 0
      %657 = vmatpush1.bf16.msra.mxu0 0
      %658 = vmatprep.subr.bf16.mxu0 0
      %659 = vmatpush1.bf16.msra.mxu0 0
      %660 = vmatprep.subr.bf16.mxu0 0
      %661 = vmatpush1.bf16.msra.mxu0 0
      %662 = vmatprep.subr.bf16.mxu0 0
      %663 = vmatpush1.bf16.msra.mxu0 0
      %664 = vmatprep.subr.bf16.mxu0 0
      %665 = vmatpush1.bf16.msra.mxu0 0
      %666 = vmatprep.mubr.bf16.mxu0 0
      %667 = vmatmul.mubr.bf16.gmra.mrb[0].mxu0 %v620
      %v668 = vpop.f32.mrb[0].mxu0
      %v669 = vadd.f32 %v569, %v668
      %v670 = vpop.f32.mrb[0].mxu0
      %v671 = vpop.f32.mrb[0].mxu0
      %v672 = vadd.f32 %v572, %v671
      %v673 = vpop.f32.mrb[0].mxu0
      %674 = vmatprep.mubr.bf16.mxu0 0
      %675 = vmatmul.mubr.bf16.gmra.mrb[0].mxu0 %v623
      %v676 = vpop.f32.mrb[0].mxu0
      %v677 = vadd.f32 %v577, %v676
      %v678 = vpop.f32.mrb[0].mxu0
      %v679 = vpop.f32.mrb[0].mxu0
      %v680 = vadd.f32 %v580, %v679
      %v681 = vpop.f32.mrb[0].mxu0
      %682 = vmatprep.mubr.bf16.mxu0 0
      %683 = vmatmul.mubr.bf16.gmra.mrb[0].mxu0 %v626
      %v684 = vpop.f32.mrb[0].mxu0
      %v685 = vadd.f32 %v585, %v684
      %v686 = vpop.f32.mrb[0].mxu0
      %v687 = vpop.f32.mrb[0].mxu0
      %v688 = vadd.f32 %v588, %v687
      %v689 = vpop.f32.mrb[0].mxu0
      %690 = vmatprep.mubr.bf16.mxu0 0
      %691 = vmatmul.mubr.bf16.gmra.mrb[0].mxu0 %v629
      %v692 = vpop.f32.mrb[0].mxu0
      %v693 = vadd.f32 %v593, %v692
      %v694 = vpop.f32.mrb[0].mxu0
      %v695 = vpop.f32.mrb[0].mxu0
      %v696 = vadd.f32 %v596, %v695
      %v697 = vpop.f32.mrb[0].mxu0
      %698 = vdwg.mxu0
      %v699 = vld [vmem:[%s338] sm:$0xe]
      %v700 = vld [vmem:[%s338 + $0x8] sm:$0xe]
      %v701 = vld [vmem:[%s338 + $0x10] sm:$0xe]
      %v702 = vld [vmem:[%s338 + $0x18] sm:$0xe]
      %v703 = vld [vmem:[%s338 + $0x20] sm:$0xe]
      %v704 = vld [vmem:[%s338 + $0x28] sm:$0xe]
      %v705 = vld [vmem:[%s338 + $0x30] sm:$0xe]
      %v706 = vld [vmem:[%s338 + $0x38] sm:$0xe]
      %vm723 = vcmask 1042432
      %vm724 = vcmask 1046532
      %vm725 = vmor %vm723, %vm724
      %v726 = vrot.slane %v699, 5
      %v727 = vrot.slane %v726, 4
      %v728 = vrot.slane %v380, 5
      %v729 = vsel %vm725, %v727, %v728
      %v730 = vrot.slane %v700, 5
      %v731 = vrot.slane %v730, 4
      %v732 = vrot.slane %v381, 5
      %v733 = vsel %vm725, %v731, %v732
      %v734 = vrot.slane %v701, 5
      %v735 = vrot.slane %v734, 4
      %v736 = vrot.slane %v382, 5
      %v737 = vsel %vm725, %v735, %v736
      %v738 = vrot.slane %v702, 5
      %v739 = vrot.slane %v738, 4
      %v740 = vrot.slane %v383, 5
      %v741 = vsel %vm725, %v739, %v740
      %v742 = vrot.slane %v703, 5
      %v743 = vrot.slane %v742, 4
      %v744 = vrot.slane %v384, 5
      %v745 = vsel %vm725, %v743, %v744
      %v746 = vrot.slane %v704, 5
      %v747 = vrot.slane %v746, 4
      %v748 = vrot.slane %v385, 5
      %v749 = vsel %vm725, %v747, %v748
      %v750 = vrot.slane %v705, 5
      %v751 = vrot.slane %v750, 4
      %v752 = vrot.slane %v386, 5
      %v753 = vsel %vm725, %v751, %v752
      %v754 = vrot.slane %v706, 5
      %v755 = vrot.slane %v754, 4
      %v756 = vrot.slane %v387, 5
      %v757 = vsel %vm725, %v755, %v756
      %s758 = scalar_lea.vmem %s3, 4
      %v759 = vld [vmem:[%s758] sm:$0x3]
      %v760 = vunpack.c.l.b16 %v729
      %v761 = vunpack.c.l.b16 %v733
      %v762 = vunpack.c.l.b16 %v737
      %v763 = vunpack.c.l.b16 %v741
      %v764 = vunpack.c.l.b16 %v745
      %v765 = vunpack.c.l.b16 %v749
      %v766 = vunpack.c.l.b16 %v753
      %v767 = vunpack.c.l.b16 %v757
      %v768 = vpack.c.b16 %v761, %v760
      %v769 = vpack.c.b16 %v763, %v762
      %v770 = vpack.c.b16 %v765, %v764
      %v771 = vpack.c.b16 %v767, %v766
      %v773 = vsel %vm517, %v768, 0
      %v776 = vsel %vm517, %v769, 0
      %v779 = vsel %vm517, %v770, 0
      %v782 = vsel %vm517, %v771, 0
      %v785 = vsel %vm530, %v759, 0
      %787 = vmatprep.subr.bf16.mxu0 0
      %788 = vmatpush1.bf16.msra.mxu0 %v785
      %789 = vmatprep.subr.bf16.mxu0 0
      %790 = vmatpush1.bf16.msra.mxu0 0
      %791 = vmatprep.subr.bf16.mxu0 0
      %792 = vmatpush1.bf16.msra.mxu0 0
      %793 = vmatprep.subr.bf16.mxu0 0
      %794 = vmatpush1.bf16.msra.mxu0 0
      %795 = vmatprep.subr.bf16.mxu0 0
      %796 = vmatpush1.bf16.msra.mxu0 0
      %797 = vmatprep.subr.bf16.mxu0 0
      %798 = vmatpush1.bf16.msra.mxu0 0
      %799 = vmatprep.subr.bf16.mxu0 0
      %800 = vmatpush1.bf16.msra.mxu0 0
      %801 = vmatprep.subr.bf16.mxu0 0
      %802 = vmatpush1.bf16.msra.mxu0 0
      %803 = vmatprep.subr.bf16.mxu0 0
      %804 = vmatpush1.bf16.msra.mxu0 0
      %805 = vmatprep.subr.bf16.mxu0 0
      %806 = vmatpush1.bf16.msra.mxu0 0
      %807 = vmatprep.subr.bf16.mxu0 0
      %808 = vmatpush1.bf16.msra.mxu0 0
      %809 = vmatprep.subr.bf16.mxu0 0
      %810 = vmatpush1.bf16.msra.mxu0 0
      %811 = vmatprep.subr.bf16.mxu0 0
      %812 = vmatpush1.bf16.msra.mxu0 0
      %813 = vmatprep.subr.bf16.mxu0 0
      %814 = vmatpush1.bf16.msra.mxu0 0
      %815 = vmatprep.subr.bf16.mxu0 0
      %816 = vmatpush1.bf16.msra.mxu0 0
      %817 = vmatprep.subr.bf16.mxu0 0
      %818 = vmatpush1.bf16.msra.mxu0 0
      %819 = vmatprep.mubr.bf16.mxu0 0
      %820 = vmatmul.mubr.bf16.gmra.mrb[0].mxu0 %v773
      %v821 = vpop.f32.mrb[0].mxu0
      %v822 = vadd.f32 0.0, %v821
      %v823 = vpop.f32.mrb[0].mxu0
      %v824 = vpop.f32.mrb[0].mxu0
      %v825 = vadd.f32 0.0, %v824
      %v826 = vpop.f32.mrb[0].mxu0
      %827 = vmatprep.mubr.bf16.mxu0 0
      %828 = vmatmul.mubr.bf16.gmra.mrb[0].mxu0 %v776
      %v829 = vpop.f32.mrb[0].mxu0
      %v830 = vadd.f32 0.0, %v829
      %v831 = vpop.f32.mrb[0].mxu0
      %v832 = vpop.f32.mrb[0].mxu0
      %v833 = vadd.f32 0.0, %v832
      %v834 = vpop.f32.mrb[0].mxu0
      %835 = vmatprep.mubr.bf16.mxu0 0
      %836 = vmatmul.mubr.bf16.gmra.mrb[0].mxu0 %v779
      %v837 = vpop.f32.mrb[0].mxu0
      %v838 = vadd.f32 0.0, %v837
      %v839 = vpop.f32.mrb[0].mxu0
      %v840 = vpop.f32.mrb[0].mxu0
      %v841 = vadd.f32 0.0, %v840
      %v842 = vpop.f32.mrb[0].mxu0
      %843 = vmatprep.mubr.bf16.mxu0 0
      %844 = vmatmul.mubr.bf16.gmra.mrb[0].mxu0 %v782
      %v845 = vpop.f32.mrb[0].mxu0
      %v846 = vadd.f32 0.0, %v845
      %v847 = vpop.f32.mrb[0].mxu0
      %v848 = vpop.f32.mrb[0].mxu0
      %v849 = vadd.f32 0.0, %v848
      %v850 = vpop.f32.mrb[0].mxu0
      %851 = vdwg.mxu0
      %v852 = vadd.f32 %v669, %v822
      %v853 = vadd.f32 %v672, %v825
      %v854 = vadd.f32 %v677, %v830
      %v855 = vadd.f32 %v680, %v833
      %v856 = vadd.f32 %v685, %v838
      %v857 = vadd.f32 %v688, %v841
      %v858 = vadd.f32 %v693, %v846
      %v859 = vadd.f32 %v696, %v849
      %s860 = scalar_lea.vmem %s338, 8
      %v861 = vld [vmem:[%s860] sm:$0xf]
      %v862 = vld [vmem:[%s860 + $0x8] sm:$0xf]
      %v863 = vld [vmem:[%s860 + $0x10] sm:$0xf]
      %v864 = vld [vmem:[%s860 + $0x18] sm:$0xf]
      %v865 = vld [vmem:[%s860 + $0x20] sm:$0xf]
      %v866 = vld [vmem:[%s860 + $0x28] sm:$0xf]
      %v867 = vld [vmem:[%s860 + $0x30] sm:$0xf]
      %v868 = vld [vmem:[%s860 + $0x38] sm:$0xf]
      %s869 = scalar_lea.vmem %s3, 6
      %v870 = vld [vmem:[%s869] sm:$0x3]
      %v879 = vunpack.c.l.b16 %v861
      %v880 = vunpack.c.l.b16 %v862
      %v881 = vunpack.c.l.b16 %v863
      %v882 = vunpack.c.l.b16 %v864
      %v883 = vunpack.c.l.b16 %v865
      %v884 = vunpack.c.l.b16 %v866
      %v885 = vunpack.c.l.b16 %v867
      %v886 = vunpack.c.l.b16 %v868
      %v887 = vpack.c.b16 %v880, %v879
      %v888 = vpack.c.b16 %v882, %v881
      %v889 = vpack.c.b16 %v884, %v883
      %v890 = vpack.c.b16 %v886, %v885
      %v892 = vsel %vm517, %v887, 0
      %v895 = vsel %vm517, %v888, 0
      %v898 = vsel %vm517, %v889, 0
      %v901 = vsel %vm517, %v890, 0
      %v904 = vsel %vm530, %v870, 0
      %906 = vmatprep.subr.bf16.mxu0 0
      %907 = vmatpush1.bf16.msra.mxu0 %v904
      %908 = vmatprep.subr.bf16.mxu0 0
      %909 = vmatpush1.bf16.msra.mxu0 0
      %910 = vmatprep.subr.bf16.mxu0 0
      %911 = vmatpush1.bf16.msra.mxu0 0
      %912 = vmatprep.subr.bf16.mxu0 0
      %913 = vmatpush1.bf16.msra.mxu0 0
      %914 = vmatprep.subr.bf16.mxu0 0
      %915 = vmatpush1.bf16.msra.mxu0 0
      %916 = vmatprep.subr.bf16.mxu0 0
      %917 = vmatpush1.bf16.msra.mxu0 0
      %918 = vmatprep.subr.bf16.mxu0 0
      %919 = vmatpush1.bf16.msra.mxu0 0
      %920 = vmatprep.subr.bf16.mxu0 0
      %921 = vmatpush1.bf16.msra.mxu0 0
      %922 = vmatprep.subr.bf16.mxu0 0
      %923 = vmatpush1.bf16.msra.mxu0 0
      %924 = vmatprep.subr.bf16.mxu0 0
      %925 = vmatpush1.bf16.msra.mxu0 0
      %926 = vmatprep.subr.bf16.mxu0 0
      %927 = vmatpush1.bf16.msra.mxu0 0
      %928 = vmatprep.subr.bf16.mxu0 0
      %929 = vmatpush1.bf16.msra.mxu0 0
      %930 = vmatprep.subr.bf16.mxu0 0
      %931 = vmatpush1.bf16.msra.mxu0 0
      %932 = vmatprep.subr.bf16.mxu0 0
      %933 = vmatpush1.bf16.msra.mxu0 0
      %934 = vmatprep.subr.bf16.mxu0 0
      %935 = vmatpush1.bf16.msra.mxu0 0
      %936 = vmatprep.subr.bf16.mxu0 0
      %937 = vmatpush1.bf16.msra.mxu0 0
      %938 = vmatprep.mubr.bf16.mxu0 0
      %939 = vmatmul.mubr.bf16.gmra.mrb[0].mxu0 %v892
      %v940 = vpop.f32.mrb[0].mxu0
      %v941 = vadd.f32 0.0, %v940
      %v942 = vpop.f32.mrb[0].mxu0
      %v943 = vpop.f32.mrb[0].mxu0
      %v944 = vadd.f32 0.0, %v943
      %v945 = vpop.f32.mrb[0].mxu0
      %946 = vmatprep.mubr.bf16.mxu0 0
      %947 = vmatmul.mubr.bf16.gmra.mrb[0].mxu0 %v895
      %v948 = vpop.f32.mrb[0].mxu0
      %v949 = vadd.f32 0.0, %v948
      %v950 = vpop.f32.mrb[0].mxu0
      %v951 = vpop.f32.mrb[0].mxu0
      %v952 = vadd.f32 0.0, %v951
      %v953 = vpop.f32.mrb[0].mxu0
      %954 = vmatprep.mubr.bf16.mxu0 0
      %955 = vmatmul.mubr.bf16.gmra.mrb[0].mxu0 %v898
      %v956 = vpop.f32.mrb[0].mxu0
      %v957 = vadd.f32 0.0, %v956
      %v958 = vpop.f32.mrb[0].mxu0
      %v959 = vpop.f32.mrb[0].mxu0
      %v960 = vadd.f32 0.0, %v959
      %v961 = vpop.f32.mrb[0].mxu0
      %962 = vmatprep.mubr.bf16.mxu0 0
      %963 = vmatmul.mubr.bf16.gmra.mrb[0].mxu0 %v901
      %v964 = vpop.f32.mrb[0].mxu0
      %v965 = vadd.f32 0.0, %v964
      %v966 = vpop.f32.mrb[0].mxu0
      %v967 = vpop.f32.mrb[0].mxu0
      %v968 = vadd.f32 0.0, %v967
      %v969 = vpop.f32.mrb[0].mxu0
      %970 = vdwg.mxu0
      %v971 = vadd.f32 %v852, %v941
      %v972 = vadd.f32 %v853, %v944
      %v973 = vadd.f32 %v854, %v949
      %v974 = vadd.f32 %v855, %v952
      %v975 = vadd.f32 %v856, %v957
      %v976 = vadd.f32 %v857, %v960
      %v977 = vadd.f32 %v858, %v965
      %v978 = vadd.f32 %v859, %v968
      %v979 = vld [vmem:[%s860] sm:$0xf]
      %v980 = vld [vmem:[%s860 + $0x4] sm:$0x1]
      %v981 = vld [vmem:[%s860 + $0x8] sm:$0xf]
      %v982 = vld [vmem:[%s860 + $0xc] sm:$0x1]
      %v983 = vld [vmem:[%s860 + $0x10] sm:$0xf]
      %v984 = vld [vmem:[%s860 + $0x14] sm:$0x1]
      %v985 = vld [vmem:[%s860 + $0x18] sm:$0xf]
      %v986 = vld [vmem:[%s860 + $0x1c] sm:$0x1]
      %v987 = vld [vmem:[%s860 + $0x20] sm:$0xf]
      %v988 = vld [vmem:[%s860 + $0x24] sm:$0x1]
      %v989 = vld [vmem:[%s860 + $0x28] sm:$0xf]
      %v990 = vld [vmem:[%s860 + $0x2c] sm:$0x1]
      %v991 = vld [vmem:[%s860 + $0x30] sm:$0xf]
      %v992 = vld [vmem:[%s860 + $0x34] sm:$0x1]
      %v993 = vld [vmem:[%s860 + $0x38] sm:$0xf]
      %v994 = vld [vmem:[%s860 + $0x3c] sm:$0x1]
      %v996 = vshrl.u32 %v979, 16
      %v998 = vrot.slane %v996, 4
      %v999 = vshll.u32 %v979, 16
      %v1001 = vrot.slane %v999, 5
      %v1002 = vor.u32 %v998, %v1001
      %v1003 = vrot.slane %v1002, 4
      %v1005 = vshll.u32 %v980, 16
      %v1007 = vrot.slane %v1005, 5
      %v1008 = vsel %vm390, %v1003, %v1007
      %v1010 = vshrl.u32 %v981, 16
      %v1012 = vrot.slane %v1010, 4
      %v1013 = vshll.u32 %v981, 16
      %v1015 = vrot.slane %v1013, 5
      %v1016 = vor.u32 %v1012, %v1015
      %v1017 = vrot.slane %v1016, 4
      %v1019 = vshll.u32 %v982, 16
      %v1021 = vrot.slane %v1019, 5
      %v1022 = vsel %vm390, %v1017, %v1021
      %v1024 = vshrl.u32 %v983, 16
      %v1026 = vrot.slane %v1024, 4
      %v1027 = vshll.u32 %v983, 16
      %v1029 = vrot.slane %v1027, 5
      %v1030 = vor.u32 %v1026, %v1029
      %v1031 = vrot.slane %v1030, 4
      %v1033 = vshll.u32 %v984, 16
      %v1035 = vrot.slane %v1033, 5
      %v1036 = vsel %vm390, %v1031, %v1035
      %v1038 = vshrl.u32 %v985, 16
      %v1040 = vrot.slane %v1038, 4
      %v1041 = vshll.u32 %v985, 16
      %v1043 = vrot.slane %v1041, 5
      %v1044 = vor.u32 %v1040, %v1043
      %v1045 = vrot.slane %v1044, 4
      %v1047 = vshll.u32 %v986, 16
      %v1049 = vrot.slane %v1047, 5
      %v1050 = vsel %vm390, %v1045, %v1049
      %v1052 = vshrl.u32 %v987, 16
      %v1054 = vrot.slane %v1052, 4
      %v1055 = vshll.u32 %v987, 16
      %v1057 = vrot.slane %v1055, 5
      %v1058 = vor.u32 %v1054, %v1057
      %v1059 = vrot.slane %v1058, 4
      %v1061 = vshll.u32 %v988, 16
      %v1063 = vrot.slane %v1061, 5
      %v1064 = vsel %vm390, %v1059, %v1063
      %v1066 = vshrl.u32 %v989, 16
      %v1068 = vrot.slane %v1066, 4
      %v1069 = vshll.u32 %v989, 16
      %v1071 = vrot.slane %v1069, 5
      %v1072 = vor.u32 %v1068, %v1071
      %v1073 = vrot.slane %v1072, 4
      %v1075 = vshll.u32 %v990, 16
      %v1077 = vrot.slane %v1075, 5
      %v1078 = vsel %vm390, %v1073, %v1077
      %v1080 = vshrl.u32 %v991, 16
      %v1082 = vrot.slane %v1080, 4
      %v1083 = vshll.u32 %v991, 16
      %v1085 = vrot.slane %v1083, 5
      %v1086 = vor.u32 %v1082, %v1085
      %v1087 = vrot.slane %v1086, 4
      %v1089 = vshll.u32 %v992, 16
      %v1091 = vrot.slane %v1089, 5
      %v1092 = vsel %vm390, %v1087, %v1091
      %v1094 = vshrl.u32 %v993, 16
      %v1096 = vrot.slane %v1094, 4
      %v1097 = vshll.u32 %v993, 16
      %v1099 = vrot.slane %v1097, 5
      %v1100 = vor.u32 %v1096, %v1099
      %v1101 = vrot.slane %v1100, 4
      %v1103 = vshll.u32 %v994, 16
      %v1105 = vrot.slane %v1103, 5
      %v1106 = vsel %vm390, %v1101, %v1105
      %s1107 = scalar_lea.vmem %s3, 8
      %v1108 = vld [vmem:[%s1107] sm:$0x3]
      %v1109 = vunpack.c.l.b16 %v1008
      %v1110 = vunpack.c.l.b16 %v1022
      %v1111 = vunpack.c.l.b16 %v1036
      %v1112 = vunpack.c.l.b16 %v1050
      %v1113 = vunpack.c.l.b16 %v1064
      %v1114 = vunpack.c.l.b16 %v1078
      %v1115 = vunpack.c.l.b16 %v1092
      %v1116 = vunpack.c.l.b16 %v1106
      %v1117 = vpack.c.b16 %v1110, %v1109
      %v1118 = vpack.c.b16 %v1112, %v1111
      %v1119 = vpack.c.b16 %v1114, %v1113
      %v1120 = vpack.c.b16 %v1116, %v1115
      %v1122 = vsel %vm517, %v1117, 0
      %v1125 = vsel %vm517, %v1118, 0
      %v1128 = vsel %vm517, %v1119, 0
      %v1131 = vsel %vm517, %v1120, 0
      %v1134 = vsel %vm530, %v1108, 0
      %1136 = vmatprep.subr.bf16.mxu0 0
      %1137 = vmatpush1.bf16.msra.mxu0 %v1134
      %1138 = vmatprep.subr.bf16.mxu0 0
      %1139 = vmatpush1.bf16.msra.mxu0 0
      %1140 = vmatprep.subr.bf16.mxu0 0
      %1141 = vmatpush1.bf16.msra.mxu0 0
      %1142 = vmatprep.subr.bf16.mxu0 0
      %1143 = vmatpush1.bf16.msra.mxu0 0
      %1144 = vmatprep.subr.bf16.mxu0 0
      %1145 = vmatpush1.bf16.msra.mxu0 0
      %1146 = vmatprep.subr.bf16.mxu0 0
      %1147 = vmatpush1.bf16.msra.mxu0 0
      %1148 = vmatprep.subr.bf16.mxu0 0
      %1149 = vmatpush1.bf16.msra.mxu0 0
      %1150 = vmatprep.subr.bf16.mxu0 0
      %1151 = vmatpush1.bf16.msra.mxu0 0
      %1152 = vmatprep.subr.bf16.mxu0 0
      %1153 = vmatpush1.bf16.msra.mxu0 0
      %1154 = vmatprep.subr.bf16.mxu0 0
      %1155 = vmatpush1.bf16.msra.mxu0 0
      %1156 = vmatprep.subr.bf16.mxu0 0
      %1157 = vmatpush1.bf16.msra.mxu0 0
      %1158 = vmatprep.subr.bf16.mxu0 0
      %1159 = vmatpush1.bf16.msra.mxu0 0
      %1160 = vmatprep.subr.bf16.mxu0 0
      %1161 = vmatpush1.bf16.msra.mxu0 0
      %1162 = vmatprep.subr.bf16.mxu0 0
      %1163 = vmatpush1.bf16.msra.mxu0 0
      %1164 = vmatprep.subr.bf16.mxu0 0
      %1165 = vmatpush1.bf16.msra.mxu0 0
      %1166 = vmatprep.subr.bf16.mxu0 0
      %1167 = vmatpush1.bf16.msra.mxu0 0
      %1168 = vmatprep.mubr.bf16.mxu0 0
      %1169 = vmatmul.mubr.bf16.gmra.mrb[0].mxu0 %v1122
      %v1170 = vpop.f32.mrb[0].mxu0
      %v1171 = vadd.f32 0.0, %v1170
      %v1172 = vpop.f32.mrb[0].mxu0
      %v1173 = vpop.f32.mrb[0].mxu0
      %v1174 = vadd.f32 0.0, %v1173
      %v1175 = vpop.f32.mrb[0].mxu0
      %1176 = vmatprep.mubr.bf16.mxu0 0
      %1177 = vmatmul.mubr.bf16.gmra.mrb[0].mxu0 %v1125
      %v1178 = vpop.f32.mrb[0].mxu0
      %v1179 = vadd.f32 0.0, %v1178
      %v1180 = vpop.f32.mrb[0].mxu0
      %v1181 = vpop.f32.mrb[0].mxu0
      %v1182 = vadd.f32 0.0, %v1181
      %v1183 = vpop.f32.mrb[0].mxu0
      %1184 = vmatprep.mubr.bf16.mxu0 0
      %1185 = vmatmul.mubr.bf16.gmra.mrb[0].mxu0 %v1128
      %v1186 = vpop.f32.mrb[0].mxu0
      %v1187 = vadd.f32 0.0, %v1186
      %v1188 = vpop.f32.mrb[0].mxu0
      %v1189 = vpop.f32.mrb[0].mxu0
      %v1190 = vadd.f32 0.0, %v1189
      %v1191 = vpop.f32.mrb[0].mxu0
      %1192 = vmatprep.mubr.bf16.mxu0 0
      %1193 = vmatmul.mubr.bf16.gmra.mrb[0].mxu0 %v1131
      %v1194 = vpop.f32.mrb[0].mxu0
      %v1195 = vadd.f32 0.0, %v1194
      %v1196 = vpop.f32.mrb[0].mxu0
      %v1197 = vpop.f32.mrb[0].mxu0
      %v1198 = vadd.f32 0.0, %v1197
      %v1199 = vpop.f32.mrb[0].mxu0
      %1200 = vdwg.mxu0
      %v1201 = vadd.f32 %v971, %v1171
      %v1202 = vadd.f32 %v972, %v1174
      %v1203 = vadd.f32 %v973, %v1179
      %v1204 = vadd.f32 %v974, %v1182
      %v1205 = vadd.f32 %v975, %v1187
      %v1206 = vadd.f32 %v976, %v1190
      %v1207 = vadd.f32 %v977, %v1195
      %v1208 = vadd.f32 %v978, %v1198
      %v1209 = vld [vmem:[%s860] sm:$0xe]
      %v1210 = vld [vmem:[%s860 + $0x8] sm:$0xe]
      %v1211 = vld [vmem:[%s860 + $0x10] sm:$0xe]
      %v1212 = vld [vmem:[%s860 + $0x18] sm:$0xe]
      %v1213 = vld [vmem:[%s860 + $0x20] sm:$0xe]
      %v1214 = vld [vmem:[%s860 + $0x28] sm:$0xe]
      %v1215 = vld [vmem:[%s860 + $0x30] sm:$0xe]
      %v1216 = vld [vmem:[%s860 + $0x38] sm:$0xe]
      %v1233 = vrot.slane %v1209, 5
      %v1234 = vrot.slane %v1233, 4
      %v1235 = vrot.slane %v980, 5
      %v1236 = vsel %vm725, %v1234, %v1235
      %v1237 = vrot.slane %v1210, 5
      %v1238 = vrot.slane %v1237, 4
      %v1239 = vrot.slane %v982, 5
      %v1240 = vsel %vm725, %v1238, %v1239
      %v1241 = vrot.slane %v1211, 5
      %v1242 = vrot.slane %v1241, 4
      %v1243 = vrot.slane %v984, 5
      %v1244 = vsel %vm725, %v1242, %v1243
      %v1245 = vrot.slane %v1212, 5
      %v1246 = vrot.slane %v1245, 4
      %v1247 = vrot.slane %v986, 5
      %v1248 = vsel %vm725, %v1246, %v1247
      %v1249 = vrot.slane %v1213, 5
      %v1250 = vrot.slane %v1249, 4
      %v1251 = vrot.slane %v988, 5
      %v1252 = vsel %vm725, %v1250, %v1251
      %v1253 = vrot.slane %v1214, 5
      %v1254 = vrot.slane %v1253, 4
      %v1255 = vrot.slane %v990, 5
      %v1256 = vsel %vm725, %v1254, %v1255
      %v1257 = vrot.slane %v1215, 5
      %v1258 = vrot.slane %v1257, 4
      %v1259 = vrot.slane %v992, 5
      %v1260 = vsel %vm725, %v1258, %v1259
      %v1261 = vrot.slane %v1216, 5
      %v1262 = vrot.slane %v1261, 4
      %v1263 = vrot.slane %v994, 5
      %v1264 = vsel %vm725, %v1262, %v1263
      %s1265 = scalar_lea.vmem %s3, 10
      %v1266 = vld [vmem:[%s1265] sm:$0x3]
      %v1267 = vunpack.c.l.b16 %v1236
      %v1268 = vunpack.c.l.b16 %v1240
      %v1269 = vunpack.c.l.b16 %v1244
      %v1270 = vunpack.c.l.b16 %v1248
      %v1271 = vunpack.c.l.b16 %v1252
      %v1272 = vunpack.c.l.b16 %v1256
      %v1273 = vunpack.c.l.b16 %v1260
      %v1274 = vunpack.c.l.b16 %v1264
      %v1275 = vpack.c.b16 %v1268, %v1267
      %v1276 = vpack.c.b16 %v1270, %v1269
      %v1277 = vpack.c.b16 %v1272, %v1271
      %v1278 = vpack.c.b16 %v1274, %v1273
      %v1280 = vsel %vm517, %v1275, 0
      %v1283 = vsel %vm517, %v1276, 0
      %v1286 = vsel %vm517, %v1277, 0
      %v1289 = vsel %vm517, %v1278, 0
      %v1292 = vsel %vm530, %v1266, 0
      %1294 = vmatprep.subr.bf16.mxu0 0
      %1295 = vmatpush1.bf16.msra.mxu0 %v1292
      %1296 = vmatprep.subr.bf16.mxu0 0
      %1297 = vmatpush1.bf16.msra.mxu0 0
      %1298 = vmatprep.subr.bf16.mxu0 0
      %1299 = vmatpush1.bf16.msra.mxu0 0
      %1300 = vmatprep.subr.bf16.mxu0 0
      %1301 = vmatpush1.bf16.msra.mxu0 0
      %1302 = vmatprep.subr.bf16.mxu0 0
      %1303 = vmatpush1.bf16.msra.mxu0 0
      %1304 = vmatprep.subr.bf16.mxu0 0
      %1305 = vmatpush1.bf16.msra.mxu0 0
      %1306 = vmatprep.subr.bf16.mxu0 0
      %1307 = vmatpush1.bf16.msra.mxu0 0
      %1308 = vmatprep.subr.bf16.mxu0 0
      %1309 = vmatpush1.bf16.msra.mxu0 0
      %1310 = vmatprep.subr.bf16.mxu0 0
      %1311 = vmatpush1.bf16.msra.mxu0 0
      %1312 = vmatprep.subr.bf16.mxu0 0
      %1313 = vmatpush1.bf16.msra.mxu0 0
      %1314 = vmatprep.subr.bf16.mxu0 0
      %1315 = vmatpush1.bf16.msra.mxu0 0
      %1316 = vmatprep.subr.bf16.mxu0 0
      %1317 = vmatpush1.bf16.msra.mxu0 0
      %1318 = vmatprep.subr.bf16.mxu0 0
      %1319 = vmatpush1.bf16.msra.mxu0 0
      %1320 = vmatprep.subr.bf16.mxu0 0
      %1321 = vmatpush1.bf16.msra.mxu0 0
      %1322 = vmatprep.subr.bf16.mxu0 0
      %1323 = vmatpush1.bf16.msra.mxu0 0
      %1324 = vmatprep.subr.bf16.mxu0 0
      %1325 = vmatpush1.bf16.msra.mxu0 0
      %1326 = vmatprep.mubr.bf16.mxu0 0
      %1327 = vmatmul.mubr.bf16.gmra.mrb[0].mxu0 %v1280
      %v1328 = vpop.f32.mrb[0].mxu0
      %v1329 = vadd.f32 0.0, %v1328
      %v1330 = vpop.f32.mrb[0].mxu0
      %v1331 = vpop.f32.mrb[0].mxu0
      %v1332 = vadd.f32 0.0, %v1331
      %v1333 = vpop.f32.mrb[0].mxu0
      %1334 = vmatprep.mubr.bf16.mxu0 0
      %1335 = vmatmul.mubr.bf16.gmra.mrb[0].mxu0 %v1283
      %v1336 = vpop.f32.mrb[0].mxu0
      %v1337 = vadd.f32 0.0, %v1336
      %v1338 = vpop.f32.mrb[0].mxu0
      %v1339 = vpop.f32.mrb[0].mxu0
      %v1340 = vadd.f32 0.0, %v1339
      %v1341 = vpop.f32.mrb[0].mxu0
      %1342 = vmatprep.mubr.bf16.mxu0 0
      %1343 = vmatmul.mubr.bf16.gmra.mrb[0].mxu0 %v1286
      %v1344 = vpop.f32.mrb[0].mxu0
      %v1345 = vadd.f32 0.0, %v1344
      %v1346 = vpop.f32.mrb[0].mxu0
      %v1347 = vpop.f32.mrb[0].mxu0
      %v1348 = vadd.f32 0.0, %v1347
      %v1349 = vpop.f32.mrb[0].mxu0
      %1350 = vmatprep.mubr.bf16.mxu0 0
      %1351 = vmatmul.mubr.bf16.gmra.mrb[0].mxu0 %v1289
      %v1352 = vpop.f32.mrb[0].mxu0
      %v1353 = vadd.f32 0.0, %v1352
      %v1354 = vpop.f32.mrb[0].mxu0
      %v1355 = vpop.f32.mrb[0].mxu0
      %v1356 = vadd.f32 0.0, %v1355
      %v1357 = vpop.f32.mrb[0].mxu0
      %1358 = vdwg.mxu0
      %v1359 = vadd.f32 %v1201, %v1329
      %v1360 = vadd.f32 %v1202, %v1332
      %v1361 = vadd.f32 %v1203, %v1337
      %v1362 = vadd.f32 %v1204, %v1340
      %v1363 = vadd.f32 %v1205, %v1345
      %v1364 = vadd.f32 %v1206, %v1348
      %v1365 = vadd.f32 %v1207, %v1353
      %v1366 = vadd.f32 %v1208, %v1356
      %s1367 = scalar_lea.vmem %s338, 16
      %v1368 = vld [vmem:[%s1367] sm:$0xf]
      %v1369 = vld [vmem:[%s1367 + $0x8] sm:$0xf]
      %v1370 = vld [vmem:[%s1367 + $0x10] sm:$0xf]
      %v1371 = vld [vmem:[%s1367 + $0x18] sm:$0xf]
      %v1372 = vld [vmem:[%s1367 + $0x20] sm:$0xf]
      %v1373 = vld [vmem:[%s1367 + $0x28] sm:$0xf]
      %v1374 = vld [vmem:[%s1367 + $0x30] sm:$0xf]
      %v1375 = vld [vmem:[%s1367 + $0x38] sm:$0xf]
      %s1376 = scalar_lea.vmem %s3, 12
      %v1377 = vld [vmem:[%s1376] sm:$0x3]
      %v1386 = vunpack.c.l.b16 %v1368
      %v1387 = vunpack.c.l.b16 %v1369
      %v1388 = vunpack.c.l.b16 %v1370
      %v1389 = vunpack.c.l.b16 %v1371
      %v1390 = vunpack.c.l.b16 %v1372
      %v1391 = vunpack.c.l.b16 %v1373
      %v1392 = vunpack.c.l.b16 %v1374
      %v1393 = vunpack.c.l.b16 %v1375
      %v1394 = vpack.c.b16 %v1387, %v1386
      %v1395 = vpack.c.b16 %v1389, %v1388
      %v1396 = vpack.c.b16 %v1391, %v1390
      %v1397 = vpack.c.b16 %v1393, %v1392
      %v1399 = vsel %vm517, %v1394, 0
      %v1402 = vsel %vm517, %v1395, 0
      %v1405 = vsel %vm517, %v1396, 0
      %v1408 = vsel %vm517, %v1397, 0
      %v1411 = vsel %vm530, %v1377, 0
      %1413 = vmatprep.subr.bf16.mxu0 0
      %1414 = vmatpush1.bf16.msra.mxu0 %v1411
      %1415 = vmatprep.subr.bf16.mxu0 0
      %1416 = vmatpush1.bf16.msra.mxu0 0
      %1417 = vmatprep.subr.bf16.mxu0 0
      %1418 = vmatpush1.bf16.msra.mxu0 0
      %1419 = vmatprep.subr.bf16.mxu0 0
      %1420 = vmatpush1.bf16.msra.mxu0 0
      %1421 = vmatprep.subr.bf16.mxu0 0
      %1422 = vmatpush1.bf16.msra.mxu0 0
      %1423 = vmatprep.subr.bf16.mxu0 0
      %1424 = vmatpush1.bf16.msra.mxu0 0
      %1425 = vmatprep.subr.bf16.mxu0 0
      %1426 = vmatpush1.bf16.msra.mxu0 0
      %1427 = vmatprep.subr.bf16.mxu0 0
      %1428 = vmatpush1.bf16.msra.mxu0 0
      %1429 = vmatprep.subr.bf16.mxu0 0
      %1430 = vmatpush1.bf16.msra.mxu0 0
      %1431 = vmatprep.subr.bf16.mxu0 0
      %1432 = vmatpush1.bf16.msra.mxu0 0
      %1433 = vmatprep.subr.bf16.mxu0 0
      %1434 = vmatpush1.bf16.msra.mxu0 0
      %1435 = vmatprep.subr.bf16.mxu0 0
      %1436 = vmatpush1.bf16.msra.mxu0 0
      %1437 = vmatprep.subr.bf16.mxu0 0
      %1438 = vmatpush1.bf16.msra.mxu0 0
      %1439 = vmatprep.subr.bf16.mxu0 0
      %1440 = vmatpush1.bf16.msra.mxu0 0
      %1441 = vmatprep.subr.bf16.mxu0 0
      %1442 = vmatpush1.bf16.msra.mxu0 0
      %1443 = vmatprep.subr.bf16.mxu0 0
      %1444 = vmatpush1.bf16.msra.mxu0 0
      %1445 = vmatprep.mubr.bf16.mxu0 0
      %1446 = vmatmul.mubr.bf16.gmra.mrb[0].mxu0 %v1399
      %v1447 = vpop.f32.mrb[0].mxu0
      %v1448 = vadd.f32 0.0, %v1447
      %v1449 = vpop.f32.mrb[0].mxu0
      %v1450 = vpop.f32.mrb[0].mxu0
      %v1451 = vadd.f32 0.0, %v1450
      %v1452 = vpop.f32.mrb[0].mxu0
      %1453 = vmatprep.mubr.bf16.mxu0 0
      %1454 = vmatmul.mubr.bf16.gmra.mrb[0].mxu0 %v1402
      %v1455 = vpop.f32.mrb[0].mxu0
      %v1456 = vadd.f32 0.0, %v1455
      %v1457 = vpop.f32.mrb[0].mxu0
      %v1458 = vpop.f32.mrb[0].mxu0
      %v1459 = vadd.f32 0.0, %v1458
      %v1460 = vpop.f32.mrb[0].mxu0
      %1461 = vmatprep.mubr.bf16.mxu0 0
      %1462 = vmatmul.mubr.bf16.gmra.mrb[0].mxu0 %v1405
      %v1463 = vpop.f32.mrb[0].mxu0
      %v1464 = vadd.f32 0.0, %v1463
      %v1465 = vpop.f32.mrb[0].mxu0
      %v1466 = vpop.f32.mrb[0].mxu0
      %v1467 = vadd.f32 0.0, %v1466
      %v1468 = vpop.f32.mrb[0].mxu0
      %1469 = vmatprep.mubr.bf16.mxu0 0
      %1470 = vmatmul.mubr.bf16.gmra.mrb[0].mxu0 %v1408
      %v1471 = vpop.f32.mrb[0].mxu0
      %v1472 = vadd.f32 0.0, %v1471
      %v1473 = vpop.f32.mrb[0].mxu0
      %v1474 = vpop.f32.mrb[0].mxu0
      %v1475 = vadd.f32 0.0, %v1474
      %v1476 = vpop.f32.mrb[0].mxu0
      %1477 = vdwg.mxu0
      %v1478 = vadd.f32 %v1359, %v1448
      %v1479 = vadd.f32 %v1360, %v1451
      %v1480 = vadd.f32 %v1361, %v1456
      %v1481 = vadd.f32 %v1362, %v1459
      %v1482 = vadd.f32 %v1363, %v1464
      %v1483 = vadd.f32 %v1364, %v1467
      %v1484 = vadd.f32 %v1365, %v1472
      %v1485 = vadd.f32 %v1366, %v1475
      %v1486 = vld [vmem:[%s1367] sm:$0xf]
      %v1487 = vld [vmem:[%s1367 + $0x4] sm:$0x1]
      %v1488 = vld [vmem:[%s1367 + $0x8] sm:$0xf]
      %v1489 = vld [vmem:[%s1367 + $0xc] sm:$0x1]
      %v1490 = vld [vmem:[%s1367 + $0x10] sm:$0xf]
      %v1491 = vld [vmem:[%s1367 + $0x14] sm:$0x1]
      %v1492 = vld [vmem:[%s1367 + $0x18] sm:$0xf]
      %v1493 = vld [vmem:[%s1367 + $0x1c] sm:$0x1]
      %v1494 = vld [vmem:[%s1367 + $0x20] sm:$0xf]
      %v1495 = vld [vmem:[%s1367 + $0x24] sm:$0x1]
      %v1496 = vld [vmem:[%s1367 + $0x28] sm:$0xf]
      %v1497 = vld [vmem:[%s1367 + $0x2c] sm:$0x1]
      %v1498 = vld [vmem:[%s1367 + $0x30] sm:$0xf]
      %v1499 = vld [vmem:[%s1367 + $0x34] sm:$0x1]
      %v1500 = vld [vmem:[%s1367 + $0x38] sm:$0xf]
      %v1501 = vld [vmem:[%s1367 + $0x3c] sm:$0x1]
      %v1503 = vshrl.u32 %v1486, 16
      %v1505 = vrot.slane %v1503, 4
      %v1506 = vshll.u32 %v1486, 16
      %v1508 = vrot.slane %v1506, 5
      %v1509 = vor.u32 %v1505, %v1508
      %v1510 = vrot.slane %v1509, 4
      %v1512 = vshll.u32 %v1487, 16
      %v1514 = vrot.slane %v1512, 5
      %v1515 = vsel %vm390, %v1510, %v1514
      %v1517 = vshrl.u32 %v1488, 16
      %v1519 = vrot.slane %v1517, 4
      %v1520 = vshll.u32 %v1488, 16
      %v1522 = vrot.slane %v1520, 5
      %v1523 = vor.u32 %v1519, %v1522
      %v1524 = vrot.slane %v1523, 4
      %v1526 = vshll.u32 %v1489, 16
      %v1528 = vrot.slane %v1526, 5
      %v1529 = vsel %vm390, %v1524, %v1528
      %v1531 = vshrl.u32 %v1490, 16
      %v1533 = vrot.slane %v1531, 4
      %v1534 = vshll.u32 %v1490, 16
      %v1536 = vrot.slane %v1534, 5
      %v1537 = vor.u32 %v1533, %v1536
      %v1538 = vrot.slane %v1537, 4
      %v1540 = vshll.u32 %v1491, 16
      %v1542 = vrot.slane %v1540, 5
      %v1543 = vsel %vm390, %v1538, %v1542
      %v1545 = vshrl.u32 %v1492, 16
      %v1547 = vrot.slane %v1545, 4
      %v1548 = vshll.u32 %v1492, 16
      %v1550 = vrot.slane %v1548, 5
      %v1551 = vor.u32 %v1547, %v1550
      %v1552 = vrot.slane %v1551, 4
      %v1554 = vshll.u32 %v1493, 16
      %v1556 = vrot.slane %v1554, 5
      %v1557 = vsel %vm390, %v1552, %v1556
      %v1559 = vshrl.u32 %v1494, 16
      %v1561 = vrot.slane %v1559, 4
      %v1562 = vshll.u32 %v1494, 16
      %v1564 = vrot.slane %v1562, 5
      %v1565 = vor.u32 %v1561, %v1564
      %v1566 = vrot.slane %v1565, 4
      %v1568 = vshll.u32 %v1495, 16
      %v1570 = vrot.slane %v1568, 5
      %v1571 = vsel %vm390, %v1566, %v1570
      %v1573 = vshrl.u32 %v1496, 16
      %v1575 = vrot.slane %v1573, 4
      %v1576 = vshll.u32 %v1496, 16
      %v1578 = vrot.slane %v1576, 5
      %v1579 = vor.u32 %v1575, %v1578
      %v1580 = vrot.slane %v1579, 4
      %v1582 = vshll.u32 %v1497, 16
      %v1584 = vrot.slane %v1582, 5
      %v1585 = vsel %vm390, %v1580, %v1584
      %v1587 = vshrl.u32 %v1498, 16
      %v1589 = vrot.slane %v1587, 4
      %v1590 = vshll.u32 %v1498, 16
      %v1592 = vrot.slane %v1590, 5
      %v1593 = vor.u32 %v1589, %v1592
      %v1594 = vrot.slane %v1593, 4
      %v1596 = vshll.u32 %v1499, 16
      %v1598 = vrot.slane %v1596, 5
      %v1599 = vsel %vm390, %v1594, %v1598
      %v1601 = vshrl.u32 %v1500, 16
      %v1603 = vrot.slane %v1601, 4
      %v1604 = vshll.u32 %v1500, 16
      %v1606 = vrot.slane %v1604, 5
      %v1607 = vor.u32 %v1603, %v1606
      %v1608 = vrot.slane %v1607, 4
      %v1610 = vshll.u32 %v1501, 16
      %v1612 = vrot.slane %v1610, 5
      %v1613 = vsel %vm390, %v1608, %v1612
      %s1614 = scalar_lea.vmem %s3, 14
      %v1615 = vld [vmem:[%s1614] sm:$0x3]
      %v1616 = vunpack.c.l.b16 %v1515
      %v1617 = vunpack.c.l.b16 %v1529
      %v1618 = vunpack.c.l.b16 %v1543
      %v1619 = vunpack.c.l.b16 %v1557
      %v1620 = vunpack.c.l.b16 %v1571
      %v1621 = vunpack.c.l.b16 %v1585
      %v1622 = vunpack.c.l.b16 %v1599
      %v1623 = vunpack.c.l.b16 %v1613
      %v1624 = vpack.c.b16 %v1617, %v1616
      %v1625 = vpack.c.b16 %v1619, %v1618
      %v1626 = vpack.c.b16 %v1621, %v1620
      %v1627 = vpack.c.b16 %v1623, %v1622
      %v1629 = vsel %vm517, %v1624, 0
      %v1632 = vsel %vm517, %v1625, 0
      %v1635 = vsel %vm517, %v1626, 0
      %v1638 = vsel %vm517, %v1627, 0
      %v1641 = vsel %vm530, %v1615, 0
      %1643 = vmatprep.subr.bf16.mxu0 0
      %1644 = vmatpush1.bf16.msra.mxu0 %v1641
      %1645 = vmatprep.subr.bf16.mxu0 0
      %1646 = vmatpush1.bf16.msra.mxu0 0
      %1647 = vmatprep.subr.bf16.mxu0 0
      %1648 = vmatpush1.bf16.msra.mxu0 0
      %1649 = vmatprep.subr.bf16.mxu0 0
      %1650 = vmatpush1.bf16.msra.mxu0 0
      %1651 = vmatprep.subr.bf16.mxu0 0
      %1652 = vmatpush1.bf16.msra.mxu0 0
      %1653 = vmatprep.subr.bf16.mxu0 0
      %1654 = vmatpush1.bf16.msra.mxu0 0
      %1655 = vmatprep.subr.bf16.mxu0 0
      %1656 = vmatpush1.bf16.msra.mxu0 0
      %1657 = vmatprep.subr.bf16.mxu0 0
      %1658 = vmatpush1.bf16.msra.mxu0 0
      %1659 = vmatprep.subr.bf16.mxu0 0
      %1660 = vmatpush1.bf16.msra.mxu0 0
      %1661 = vmatprep.subr.bf16.mxu0 0
      %1662 = vmatpush1.bf16.msra.mxu0 0
      %1663 = vmatprep.subr.bf16.mxu0 0
      %1664 = vmatpush1.bf16.msra.mxu0 0
      %1665 = vmatprep.subr.bf16.mxu0 0
      %1666 = vmatpush1.bf16.msra.mxu0 0
      %1667 = vmatprep.subr.bf16.mxu0 0
      %1668 = vmatpush1.bf16.msra.mxu0 0
      %1669 = vmatprep.subr.bf16.mxu0 0
      %1670 = vmatpush1.bf16.msra.mxu0 0
      %1671 = vmatprep.subr.bf16.mxu0 0
      %1672 = vmatpush1.bf16.msra.mxu0 0
      %1673 = vmatprep.subr.bf16.mxu0 0
      %1674 = vmatpush1.bf16.msra.mxu0 0
      %1675 = vmatprep.mubr.bf16.mxu0 0
      %1676 = vmatmul.mubr.bf16.gmra.mrb[0].mxu0 %v1629
      %v1677 = vpop.f32.mrb[0].mxu0
      %v1678 = vadd.f32 0.0, %v1677
      %v1679 = vpop.f32.mrb[0].mxu0
      %v1680 = vpop.f32.mrb[0].mxu0
      %v1681 = vadd.f32 0.0, %v1680
      %v1682 = vpop.f32.mrb[0].mxu0
      %1683 = vmatprep.mubr.bf16.mxu0 0
      %1684 = vmatmul.mubr.bf16.gmra.mrb[0].mxu0 %v1632
      %v1685 = vpop.f32.mrb[0].mxu0
      %v1686 = vadd.f32 0.0, %v1685
      %v1687 = vpop.f32.mrb[0].mxu0
      %v1688 = vpop.f32.mrb[0].mxu0
      %v1689 = vadd.f32 0.0, %v1688
      %v1690 = vpop.f32.mrb[0].mxu0
      %1691 = vmatprep.mubr.bf16.mxu0 0
      %1692 = vmatmul.mubr.bf16.gmra.mrb[0].mxu0 %v1635
      %v1693 = vpop.f32.mrb[0].mxu0
      %v1694 = vadd.f32 0.0, %v1693
      %v1695 = vpop.f32.mrb[0].mxu0
      %v1696 = vpop.f32.mrb[0].mxu0
      %v1697 = vadd.f32 0.0, %v1696
      %v1698 = vpop.f32.mrb[0].mxu0
      %1699 = vmatprep.mubr.bf16.mxu0 0
      %1700 = vmatmul.mubr.bf16.gmra.mrb[0].mxu0 %v1638
      %v1701 = vpop.f32.mrb[0].mxu0
      %v1702 = vadd.f32 0.0, %v1701
      %v1703 = vpop.f32.mrb[0].mxu0
      %v1704 = vpop.f32.mrb[0].mxu0
      %v1705 = vadd.f32 0.0, %v1704
      %v1706 = vpop.f32.mrb[0].mxu0
      %1707 = vdwg.mxu0
      %v1708 = vadd.f32 %v1478, %v1678
      %v1709 = vadd.f32 %v1479, %v1681
      %v1710 = vadd.f32 %v1480, %v1686
      %v1711 = vadd.f32 %v1481, %v1689
      %v1712 = vadd.f32 %v1482, %v1694
      %v1713 = vadd.f32 %v1483, %v1697
      %v1714 = vadd.f32 %v1484, %v1702
      %v1715 = vadd.f32 %v1485, %v1705
      %v1716 = vld [vmem:[%s1367] sm:$0xe]
      %v1717 = vld [vmem:[%s1367 + $0x8] sm:$0xe]
      %v1718 = vld [vmem:[%s1367 + $0x10] sm:$0xe]
      %v1719 = vld [vmem:[%s1367 + $0x18] sm:$0xe]
      %v1720 = vld [vmem:[%s1367 + $0x20] sm:$0xe]
      %v1721 = vld [vmem:[%s1367 + $0x28] sm:$0xe]
      %v1722 = vld [vmem:[%s1367 + $0x30] sm:$0xe]
      %v1723 = vld [vmem:[%s1367 + $0x38] sm:$0xe]
      %v1740 = vrot.slane %v1716, 5
      %v1741 = vrot.slane %v1740, 4
      %v1742 = vrot.slane %v1487, 5
      %v1743 = vsel %vm725, %v1741, %v1742
      %v1744 = vrot.slane %v1717, 5
      %v1745 = vrot.slane %v1744, 4
      %v1746 = vrot.slane %v1489, 5
      %v1747 = vsel %vm725, %v1745, %v1746
      %v1748 = vrot.slane %v1718, 5
      %v1749 = vrot.slane %v1748, 4
      %v1750 = vrot.slane %v1491, 5
      %v1751 = vsel %vm725, %v1749, %v1750
      %v1752 = vrot.slane %v1719, 5
      %v1753 = vrot.slane %v1752, 4
      %v1754 = vrot.slane %v1493, 5
      %v1755 = vsel %vm725, %v1753, %v1754
      %v1756 = vrot.slane %v1720, 5
      %v1757 = vrot.slane %v1756, 4
      %v1758 = vrot.slane %v1495, 5
      %v1759 = vsel %vm725, %v1757, %v1758
      %v1760 = vrot.slane %v1721, 5
      %v1761 = vrot.slane %v1760, 4
      %v1762 = vrot.slane %v1497, 5
      %v1763 = vsel %vm725, %v1761, %v1762
      %v1764 = vrot.slane %v1722, 5
      %v1765 = vrot.slane %v1764, 4
      %v1766 = vrot.slane %v1499, 5
      %v1767 = vsel %vm725, %v1765, %v1766
      %v1768 = vrot.slane %v1723, 5
      %v1769 = vrot.slane %v1768, 4
      %v1770 = vrot.slane %v1501, 5
      %v1771 = vsel %vm725, %v1769, %v1770
      %s1772 = scalar_lea.vmem %s3, 16
      %v1773 = vld [vmem:[%s1772] sm:$0x3]
      %v1774 = vunpack.c.l.b16 %v1743
      %v1775 = vunpack.c.l.b16 %v1747
      %v1776 = vunpack.c.l.b16 %v1751
      %v1777 = vunpack.c.l.b16 %v1755
      %v1778 = vunpack.c.l.b16 %v1759
      %v1779 = vunpack.c.l.b16 %v1763
      %v1780 = vunpack.c.l.b16 %v1767
      %v1781 = vunpack.c.l.b16 %v1771
      %v1782 = vpack.c.b16 %v1775, %v1774
      %v1783 = vpack.c.b16 %v1777, %v1776
      %v1784 = vpack.c.b16 %v1779, %v1778
      %v1785 = vpack.c.b16 %v1781, %v1780
      %v1787 = vsel %vm517, %v1782, 0
      %v1790 = vsel %vm517, %v1783, 0
      %v1793 = vsel %vm517, %v1784, 0
      %v1796 = vsel %vm517, %v1785, 0
      %v1799 = vsel %vm530, %v1773, 0
      %1801 = vmatprep.subr.bf16.mxu0 0
      %1802 = vmatpush1.bf16.msra.mxu0 %v1799
      %1803 = vmatprep.subr.bf16.mxu0 0
      %1804 = vmatpush1.bf16.msra.mxu0 0
      %1805 = vmatprep.subr.bf16.mxu0 0
      %1806 = vmatpush1.bf16.msra.mxu0 0
      %1807 = vmatprep.subr.bf16.mxu0 0
      %1808 = vmatpush1.bf16.msra.mxu0 0
      %1809 = vmatprep.subr.bf16.mxu0 0
      %1810 = vmatpush1.bf16.msra.mxu0 0
      %1811 = vmatprep.subr.bf16.mxu0 0
      %1812 = vmatpush1.bf16.msra.mxu0 0
      %1813 = vmatprep.subr.bf16.mxu0 0
      %1814 = vmatpush1.bf16.msra.mxu0 0
      %1815 = vmatprep.subr.bf16.mxu0 0
      %1816 = vmatpush1.bf16.msra.mxu0 0
      %1817 = vmatprep.subr.bf16.mxu0 0
      %1818 = vmatpush1.bf16.msra.mxu0 0
      %1819 = vmatprep.subr.bf16.mxu0 0
      %1820 = vmatpush1.bf16.msra.mxu0 0
      %1821 = vmatprep.subr.bf16.mxu0 0
      %1822 = vmatpush1.bf16.msra.mxu0 0
      %1823 = vmatprep.subr.bf16.mxu0 0
      %1824 = vmatpush1.bf16.msra.mxu0 0
      %1825 = vmatprep.subr.bf16.mxu0 0
      %1826 = vmatpush1.bf16.msra.mxu0 0
      %1827 = vmatprep.subr.bf16.mxu0 0
      %1828 = vmatpush1.bf16.msra.mxu0 0
      %1829 = vmatprep.subr.bf16.mxu0 0
      %1830 = vmatpush1.bf16.msra.mxu0 0
      %1831 = vmatprep.subr.bf16.mxu0 0
      %1832 = vmatpush1.bf16.msra.mxu0 0
      %1833 = vmatprep.mubr.bf16.mxu0 0
      %1834 = vmatmul.mubr.bf16.gmra.mrb[0].mxu0 %v1787
      %v1835 = vpop.f32.mrb[0].mxu0
      %v1836 = vadd.f32 0.0, %v1835
      %v1837 = vpop.f32.mrb[0].mxu0
      %v1838 = vpop.f32.mrb[0].mxu0
      %v1839 = vadd.f32 0.0, %v1838
      %v1840 = vpop.f32.mrb[0].mxu0
      %1841 = vmatprep.mubr.bf16.mxu0 0
      %1842 = vmatmul.mubr.bf16.gmra.mrb[0].mxu0 %v1790
      %v1843 = vpop.f32.mrb[0].mxu0
      %v1844 = vadd.f32 0.0, %v1843
      %v1845 = vpop.f32.mrb[0].mxu0
      %v1846 = vpop.f32.mrb[0].mxu0
      %v1847 = vadd.f32 0.0, %v1846
      %v1848 = vpop.f32.mrb[0].mxu0
      %1849 = vmatprep.mubr.bf16.mxu0 0
      %1850 = vmatmul.mubr.bf16.gmra.mrb[0].mxu0 %v1793
      %v1851 = vpop.f32.mrb[0].mxu0
      %v1852 = vadd.f32 0.0, %v1851
      %v1853 = vpop.f32.mrb[0].mxu0
      %v1854 = vpop.f32.mrb[0].mxu0
      %v1855 = vadd.f32 0.0, %v1854
      %v1856 = vpop.f32.mrb[0].mxu0
      %1857 = vmatprep.mubr.bf16.mxu0 0
      %1858 = vmatmul.mubr.bf16.gmra.mrb[0].mxu0 %v1796
      %v1859 = vpop.f32.mrb[0].mxu0
      %v1860 = vadd.f32 0.0, %v1859
      %v1861 = vpop.f32.mrb[0].mxu0
      %v1862 = vpop.f32.mrb[0].mxu0
      %v1863 = vadd.f32 0.0, %v1862
      %v1864 = vpop.f32.mrb[0].mxu0
      %1865 = vdwg.mxu0
      %v1866 = vadd.f32 %v1708, %v1836
      %v1867 = vadd.f32 %v1709, %v1839
      %v1868 = vadd.f32 %v1710, %v1844
      %v1869 = vadd.f32 %v1711, %v1847
      %v1870 = vadd.f32 %v1712, %v1852
      %v1871 = vadd.f32 %v1713, %v1855
      %v1872 = vadd.f32 %v1714, %v1860
      %v1873 = vadd.f32 %v1715, %v1863
      %v1874 = vld [vmem:[%s348] sm:$0xf]
      %v1875 = vld [vmem:[%s348 + $0x8] sm:$0xf]
      %v1876 = vld [vmem:[%s348 + $0x10] sm:$0xf]
      %v1877 = vld [vmem:[%s348 + $0x18] sm:$0xf]
      %v1878 = vld [vmem:[%s348 + $0x20] sm:$0xf]
      %v1879 = vld [vmem:[%s348 + $0x28] sm:$0xf]
      %v1880 = vld [vmem:[%s348 + $0x30] sm:$0xf]
      %v1881 = vld [vmem:[%s348 + $0x38] sm:$0xf]
      %s1882 = scalar_lea.vmem %s3, 18
      %v1883 = vld [vmem:[%s1882] sm:$0x3]
      %v1892 = vunpack.c.l.b16 %v1874
      %v1893 = vunpack.c.l.b16 %v1875
      %v1894 = vunpack.c.l.b16 %v1876
      %v1895 = vunpack.c.l.b16 %v1877
      %v1896 = vunpack.c.l.b16 %v1878
      %v1897 = vunpack.c.l.b16 %v1879
      %v1898 = vunpack.c.l.b16 %v1880
      %v1899 = vunpack.c.l.b16 %v1881
      %v1900 = vpack.c.b16 %v1893, %v1892
      %v1901 = vpack.c.b16 %v1895, %v1894
      %v1902 = vpack.c.b16 %v1897, %v1896
      %v1903 = vpack.c.b16 %v1899, %v1898
      %v1905 = vsel %vm517, %v1900, 0
      %v1908 = vsel %vm517, %v1901, 0
      %v1911 = vsel %vm517, %v1902, 0
      %v1914 = vsel %vm517, %v1903, 0
      %v1917 = vsel %vm530, %v1883, 0
      %1919 = vmatprep.subr.bf16.mxu0 0
      %1920 = vmatpush1.bf16.msra.mxu0 %v1917
      %1921 = vmatprep.subr.bf16.mxu0 0
      %1922 = vmatpush1.bf16.msra.mxu0 0
      %1923 = vmatprep.subr.bf16.mxu0 0
      %1924 = vmatpush1.bf16.msra.mxu0 0
      %1925 = vmatprep.subr.bf16.mxu0 0
      %1926 = vmatpush1.bf16.msra.mxu0 0
      %1927 = vmatprep.subr.bf16.mxu0 0
      %1928 = vmatpush1.bf16.msra.mxu0 0
      %1929 = vmatprep.subr.bf16.mxu0 0
      %1930 = vmatpush1.bf16.msra.mxu0 0
      %1931 = vmatprep.subr.bf16.mxu0 0
      %1932 = vmatpush1.bf16.msra.mxu0 0
      %1933 = vmatprep.subr.bf16.mxu0 0
      %1934 = vmatpush1.bf16.msra.mxu0 0
      %1935 = vmatprep.subr.bf16.mxu0 0
      %1936 = vmatpush1.bf16.msra.mxu0 0
      %1937 = vmatprep.subr.bf16.mxu0 0
      %1938 = vmatpush1.bf16.msra.mxu0 0
      %1939 = vmatprep.subr.bf16.mxu0 0
      %1940 = vmatpush1.bf16.msra.mxu0 0
      %1941 = vmatprep.subr.bf16.mxu0 0
      %1942 = vmatpush1.bf16.msra.mxu0 0
      %1943 = vmatprep.subr.bf16.mxu0 0
      %1944 = vmatpush1.bf16.msra.mxu0 0
      %1945 = vmatprep.subr.bf16.mxu0 0
      %1946 = vmatpush1.bf16.msra.mxu0 0
      %1947 = vmatprep.subr.bf16.mxu0 0
      %1948 = vmatpush1.bf16.msra.mxu0 0
      %1949 = vmatprep.subr.bf16.mxu0 0
      %1950 = vmatpush1.bf16.msra.mxu0 0
      %1951 = vmatprep.mubr.bf16.mxu0 0
      %1952 = vmatmul.mubr.bf16.gmra.mrb[0].mxu0 %v1905
      %v1953 = vpop.f32.mrb[0].mxu0
      %v1954 = vadd.f32 0.0, %v1953
      %v1955 = vpop.f32.mrb[0].mxu0
      %v1956 = vpop.f32.mrb[0].mxu0
      %v1957 = vadd.f32 0.0, %v1956
      %v1958 = vpop.f32.mrb[0].mxu0
      %1959 = vmatprep.mubr.bf16.mxu0 0
      %1960 = vmatmul.mubr.bf16.gmra.mrb[0].mxu0 %v1908
      %v1961 = vpop.f32.mrb[0].mxu0
      %v1962 = vadd.f32 0.0, %v1961
      %v1963 = vpop.f32.mrb[0].mxu0
      %v1964 = vpop.f32.mrb[0].mxu0
      %v1965 = vadd.f32 0.0, %v1964
      %v1966 = vpop.f32.mrb[0].mxu0
      %1967 = vmatprep.mubr.bf16.mxu0 0
      %1968 = vmatmul.mubr.bf16.gmra.mrb[0].mxu0 %v1911
      %v1969 = vpop.f32.mrb[0].mxu0
      %v1970 = vadd.f32 0.0, %v1969
      %v1971 = vpop.f32.mrb[0].mxu0
      %v1972 = vpop.f32.mrb[0].mxu0
      %v1973 = vadd.f32 0.0, %v1972
      %v1974 = vpop.f32.mrb[0].mxu0
      %1975 = vmatprep.mubr.bf16.mxu0 0
      %1976 = vmatmul.mubr.bf16.gmra.mrb[0].mxu0 %v1914
      %v1977 = vpop.f32.mrb[0].mxu0
      %v1978 = vadd.f32 0.0, %v1977
      %v1979 = vpop.f32.mrb[0].mxu0
      %v1980 = vpop.f32.mrb[0].mxu0
      %v1981 = vadd.f32 0.0, %v1980
      %v1982 = vpop.f32.mrb[0].mxu0
      %1983 = vdwg.mxu0
      %v1984 = vadd.f32 %v1866, %v1954
      %v1985 = vadd.f32 %v1867, %v1957
      %v1986 = vadd.f32 %v1868, %v1962
      %v1987 = vadd.f32 %v1869, %v1965
      %v1988 = vadd.f32 %v1870, %v1970
      %v1989 = vadd.f32 %v1871, %v1973
      %v1990 = vadd.f32 %v1872, %v1978
      %v1991 = vadd.f32 %v1873, %v1981
      %v1992 = vld [vmem:[%s348] sm:$0xf]
      %v1993 = vld [vmem:[%s348 + $0x4] sm:$0x1]
      %v1994 = vld [vmem:[%s348 + $0x8] sm:$0xf]
      %v1995 = vld [vmem:[%s348 + $0xc] sm:$0x1]
      %v1996 = vld [vmem:[%s348 + $0x10] sm:$0xf]
      %v1997 = vld [vmem:[%s348 + $0x14] sm:$0x1]
      %v1998 = vld [vmem:[%s348 + $0x18] sm:$0xf]
      %v1999 = vld [vmem:[%s348 + $0x1c] sm:$0x1]
      %v2000 = vld [vmem:[%s348 + $0x20] sm:$0xf]
      %v2001 = vld [vmem:[%s348 + $0x24] sm:$0x1]
      %v2002 = vld [vmem:[%s348 + $0x28] sm:$0xf]
      %v2003 = vld [vmem:[%s348 + $0x2c] sm:$0x1]
      %v2004 = vld [vmem:[%s348 + $0x30] sm:$0xf]
      %v2005 = vld [vmem:[%s348 + $0x34] sm:$0x1]
      %v2006 = vld [vmem:[%s348 + $0x38] sm:$0xf]
      %v2007 = vld [vmem:[%s348 + $0x3c] sm:$0x1]
      %v2009 = vshrl.u32 %v1992, 16
      %v2011 = vrot.slane %v2009, 4
      %v2012 = vshll.u32 %v1992, 16
      %v2014 = vrot.slane %v2012, 5
      %v2015 = vor.u32 %v2011, %v2014
      %v2016 = vrot.slane %v2015, 4
      %v2018 = vshll.u32 %v1993, 16
      %v2020 = vrot.slane %v2018, 5
      %v2021 = vsel %vm390, %v2016, %v2020
      %v2023 = vshrl.u32 %v1994, 16
      %v2025 = vrot.slane %v2023, 4
      %v2026 = vshll.u32 %v1994, 16
      %v2028 = vrot.slane %v2026, 5
      %v2029 = vor.u32 %v2025, %v2028
      %v2030 = vrot.slane %v2029, 4
      %v2032 = vshll.u32 %v1995, 16
      %v2034 = vrot.slane %v2032, 5
      %v2035 = vsel %vm390, %v2030, %v2034
      %v2037 = vshrl.u32 %v1996, 16
      %v2039 = vrot.slane %v2037, 4
      %v2040 = vshll.u32 %v1996, 16
      %v2042 = vrot.slane %v2040, 5
      %v2043 = vor.u32 %v2039, %v2042
      %v2044 = vrot.slane %v2043, 4
      %v2046 = vshll.u32 %v1997, 16
      %v2048 = vrot.slane %v2046, 5
      %v2049 = vsel %vm390, %v2044, %v2048
      %v2051 = vshrl.u32 %v1998, 16
      %v2053 = vrot.slane %v2051, 4
      %v2054 = vshll.u32 %v1998, 16
      %v2056 = vrot.slane %v2054, 5
      %v2057 = vor.u32 %v2053, %v2056
      %v2058 = vrot.slane %v2057, 4
      %v2060 = vshll.u32 %v1999, 16
      %v2062 = vrot.slane %v2060, 5
      %v2063 = vsel %vm390, %v2058, %v2062
      %v2065 = vshrl.u32 %v2000, 16
      %v2067 = vrot.slane %v2065, 4
      %v2068 = vshll.u32 %v2000, 16
      %v2070 = vrot.slane %v2068, 5
      %v2071 = vor.u32 %v2067, %v2070
      %v2072 = vrot.slane %v2071, 4
      %v2074 = vshll.u32 %v2001, 16
      %v2076 = vrot.slane %v2074, 5
      %v2077 = vsel %vm390, %v2072, %v2076
      %v2079 = vshrl.u32 %v2002, 16
      %v2081 = vrot.slane %v2079, 4
      %v2082 = vshll.u32 %v2002, 16
      %v2084 = vrot.slane %v2082, 5
      %v2085 = vor.u32 %v2081, %v2084
      %v2086 = vrot.slane %v2085, 4
      %v2088 = vshll.u32 %v2003, 16
      %v2090 = vrot.slane %v2088, 5
      %v2091 = vsel %vm390, %v2086, %v2090
      %v2093 = vshrl.u32 %v2004, 16
      %v2095 = vrot.slane %v2093, 4
      %v2096 = vshll.u32 %v2004, 16
      %v2098 = vrot.slane %v2096, 5
      %v2099 = vor.u32 %v2095, %v2098
      %v2100 = vrot.slane %v2099, 4
      %v2102 = vshll.u32 %v2005, 16
      %v2104 = vrot.slane %v2102, 5
      %v2105 = vsel %vm390, %v2100, %v2104
      %v2107 = vshrl.u32 %v2006, 16
      %v2109 = vrot.slane %v2107, 4
      %v2110 = vshll.u32 %v2006, 16
      %v2112 = vrot.slane %v2110, 5
      %v2113 = vor.u32 %v2109, %v2112
      %v2114 = vrot.slane %v2113, 4
      %v2116 = vshll.u32 %v2007, 16
      %v2118 = vrot.slane %v2116, 5
      %v2119 = vsel %vm390, %v2114, %v2118
      %s2120 = scalar_lea.vmem %s3, 20
      %v2121 = vld [vmem:[%s2120] sm:$0x3]
      %v2122 = vunpack.c.l.b16 %v2021
      %v2123 = vunpack.c.l.b16 %v2035
      %v2124 = vunpack.c.l.b16 %v2049
      %v2125 = vunpack.c.l.b16 %v2063
      %v2126 = vunpack.c.l.b16 %v2077
      %v2127 = vunpack.c.l.b16 %v2091
      %v2128 = vunpack.c.l.b16 %v2105
      %v2129 = vunpack.c.l.b16 %v2119
      %v2130 = vpack.c.b16 %v2123, %v2122
      %v2131 = vpack.c.b16 %v2125, %v2124
      %v2132 = vpack.c.b16 %v2127, %v2126
      %v2133 = vpack.c.b16 %v2129, %v2128
      %v2135 = vsel %vm517, %v2130, 0
      %v2138 = vsel %vm517, %v2131, 0
      %v2141 = vsel %vm517, %v2132, 0
      %v2144 = vsel %vm517, %v2133, 0
      %v2147 = vsel %vm530, %v2121, 0
      %2149 = vmatprep.subr.bf16.mxu0 0
      %2150 = vmatpush1.bf16.msra.mxu0 %v2147
      %2151 = vmatprep.subr.bf16.mxu0 0
      %2152 = vmatpush1.bf16.msra.mxu0 0
      %2153 = vmatprep.subr.bf16.mxu0 0
      %2154 = vmatpush1.bf16.msra.mxu0 0
      %2155 = vmatprep.subr.bf16.mxu0 0
      %2156 = vmatpush1.bf16.msra.mxu0 0
      %2157 = vmatprep.subr.bf16.mxu0 0
      %2158 = vmatpush1.bf16.msra.mxu0 0
      %2159 = vmatprep.subr.bf16.mxu0 0
      %2160 = vmatpush1.bf16.msra.mxu0 0
      %2161 = vmatprep.subr.bf16.mxu0 0
      %2162 = vmatpush1.bf16.msra.mxu0 0
      %2163 = vmatprep.subr.bf16.mxu0 0
      %2164 = vmatpush1.bf16.msra.mxu0 0
      %2165 = vmatprep.subr.bf16.mxu0 0
      %2166 = vmatpush1.bf16.msra.mxu0 0
      %2167 = vmatprep.subr.bf16.mxu0 0
      %2168 = vmatpush1.bf16.msra.mxu0 0
      %2169 = vmatprep.subr.bf16.mxu0 0
      %2170 = vmatpush1.bf16.msra.mxu0 0
      %2171 = vmatprep.subr.bf16.mxu0 0
      %2172 = vmatpush1.bf16.msra.mxu0 0
      %2173 = vmatprep.subr.bf16.mxu0 0
      %2174 = vmatpush1.bf16.msra.mxu0 0
      %2175 = vmatprep.subr.bf16.mxu0 0
      %2176 = vmatpush1.bf16.msra.mxu0 0
      %2177 = vmatprep.subr.bf16.mxu0 0
      %2178 = vmatpush1.bf16.msra.mxu0 0
      %2179 = vmatprep.subr.bf16.mxu0 0
      %2180 = vmatpush1.bf16.msra.mxu0 0
      %2181 = vmatprep.mubr.bf16.mxu0 0
      %2182 = vmatmul.mubr.bf16.gmra.mrb[0].mxu0 %v2135
      %v2183 = vpop.f32.mrb[0].mxu0
      %v2184 = vadd.f32 0.0, %v2183
      %v2185 = vpop.f32.mrb[0].mxu0
      %v2186 = vpop.f32.mrb[0].mxu0
      %v2187 = vadd.f32 0.0, %v2186
      %v2188 = vpop.f32.mrb[0].mxu0
      %2189 = vmatprep.mubr.bf16.mxu0 0
      %2190 = vmatmul.mubr.bf16.gmra.mrb[0].mxu0 %v2138
      %v2191 = vpop.f32.mrb[0].mxu0
      %v2192 = vadd.f32 0.0, %v2191
      %v2193 = vpop.f32.mrb[0].mxu0
      %v2194 = vpop.f32.mrb[0].mxu0
      %v2195 = vadd.f32 0.0, %v2194
      %v2196 = vpop.f32.mrb[0].mxu0
      %2197 = vmatprep.mubr.bf16.mxu0 0
      %2198 = vmatmul.mubr.bf16.gmra.mrb[0].mxu0 %v2141
      %v2199 = vpop.f32.mrb[0].mxu0
      %v2200 = vadd.f32 0.0, %v2199
      %v2201 = vpop.f32.mrb[0].mxu0
      %v2202 = vpop.f32.mrb[0].mxu0
      %v2203 = vadd.f32 0.0, %v2202
      %v2204 = vpop.f32.mrb[0].mxu0
      %2205 = vmatprep.mubr.bf16.mxu0 0
      %2206 = vmatmul.mubr.bf16.gmra.mrb[0].mxu0 %v2144
      %v2207 = vpop.f32.mrb[0].mxu0
      %v2208 = vadd.f32 0.0, %v2207
      %v2209 = vpop.f32.mrb[0].mxu0
      %v2210 = vpop.f32.mrb[0].mxu0
      %v2211 = vadd.f32 0.0, %v2210
      %v2212 = vpop.f32.mrb[0].mxu0
      %2213 = vdwg.mxu0
      %v2214 = vadd.f32 %v1984, %v2184
      %v2215 = vadd.f32 %v1985, %v2187
      %v2216 = vadd.f32 %v1986, %v2192
      %v2217 = vadd.f32 %v1987, %v2195
      %v2218 = vadd.f32 %v1988, %v2200
      %v2219 = vadd.f32 %v1989, %v2203
      %v2220 = vadd.f32 %v1990, %v2208
      %v2221 = vadd.f32 %v1991, %v2211
      %v2222 = vld [vmem:[%s348] sm:$0xe]
      %v2223 = vld [vmem:[%s348 + $0x8] sm:$0xe]
      %v2224 = vld [vmem:[%s348 + $0x10] sm:$0xe]
      %v2225 = vld [vmem:[%s348 + $0x18] sm:$0xe]
      %v2226 = vld [vmem:[%s348 + $0x20] sm:$0xe]
      %v2227 = vld [vmem:[%s348 + $0x28] sm:$0xe]
      %v2228 = vld [vmem:[%s348 + $0x30] sm:$0xe]
      %v2229 = vld [vmem:[%s348 + $0x38] sm:$0xe]
      %v2246 = vrot.slane %v2222, 5
      %v2247 = vrot.slane %v2246, 4
      %v2248 = vrot.slane %v1993, 5
      %v2249 = vsel %vm725, %v2247, %v2248
      %v2250 = vrot.slane %v2223, 5
      %v2251 = vrot.slane %v2250, 4
      %v2252 = vrot.slane %v1995, 5
      %v2253 = vsel %vm725, %v2251, %v2252
      %v2254 = vrot.slane %v2224, 5
      %v2255 = vrot.slane %v2254, 4
      %v2256 = vrot.slane %v1997, 5
      %v2257 = vsel %vm725, %v2255, %v2256
      %v2258 = vrot.slane %v2225, 5
      %v2259 = vrot.slane %v2258, 4
      %v2260 = vrot.slane %v1999, 5
      %v2261 = vsel %vm725, %v2259, %v2260
      %v2262 = vrot.slane %v2226, 5
      %v2263 = vrot.slane %v2262, 4
      %v2264 = vrot.slane %v2001, 5
      %v2265 = vsel %vm725, %v2263, %v2264
      %v2266 = vrot.slane %v2227, 5
      %v2267 = vrot.slane %v2266, 4
      %v2268 = vrot.slane %v2003, 5
      %v2269 = vsel %vm725, %v2267, %v2268
      %v2270 = vrot.slane %v2228, 5
      %v2271 = vrot.slane %v2270, 4
      %v2272 = vrot.slane %v2005, 5
      %v2273 = vsel %vm725, %v2271, %v2272
      %v2274 = vrot.slane %v2229, 5
      %v2275 = vrot.slane %v2274, 4
      %v2276 = vrot.slane %v2007, 5
      %v2277 = vsel %vm725, %v2275, %v2276
      %s2278 = scalar_lea.vmem %s3, 22
      %v2279 = vld [vmem:[%s2278] sm:$0x3]
      %v2280 = vunpack.c.l.b16 %v2249
      %v2281 = vunpack.c.l.b16 %v2253
      %v2282 = vunpack.c.l.b16 %v2257
      %v2283 = vunpack.c.l.b16 %v2261
      %v2284 = vunpack.c.l.b16 %v2265
      %v2285 = vunpack.c.l.b16 %v2269
      %v2286 = vunpack.c.l.b16 %v2273
      %v2287 = vunpack.c.l.b16 %v2277
      %v2288 = vpack.c.b16 %v2281, %v2280
      %v2289 = vpack.c.b16 %v2283, %v2282
      %v2290 = vpack.c.b16 %v2285, %v2284
      %v2291 = vpack.c.b16 %v2287, %v2286
      %v2293 = vsel %vm517, %v2288, 0
      %v2296 = vsel %vm517, %v2289, 0
      %v2299 = vsel %vm517, %v2290, 0
      %v2302 = vsel %vm517, %v2291, 0
      %v2305 = vsel %vm530, %v2279, 0
      %2307 = vmatprep.subr.bf16.mxu0 0
      %2308 = vmatpush1.bf16.msra.mxu0 %v2305
      %2309 = vmatprep.subr.bf16.mxu0 0
      %2310 = vmatpush1.bf16.msra.mxu0 0
      %2311 = vmatprep.subr.bf16.mxu0 0
      %2312 = vmatpush1.bf16.msra.mxu0 0
      %2313 = vmatprep.subr.bf16.mxu0 0
      %2314 = vmatpush1.bf16.msra.mxu0 0
      %2315 = vmatprep.subr.bf16.mxu0 0
      %2316 = vmatpush1.bf16.msra.mxu0 0
      %2317 = vmatprep.subr.bf16.mxu0 0
      %2318 = vmatpush1.bf16.msra.mxu0 0
      %2319 = vmatprep.subr.bf16.mxu0 0
      %2320 = vmatpush1.bf16.msra.mxu0 0
      %2321 = vmatprep.subr.bf16.mxu0 0
      %2322 = vmatpush1.bf16.msra.mxu0 0
      %2323 = vmatprep.subr.bf16.mxu0 0
      %2324 = vmatpush1.bf16.msra.mxu0 0
      %2325 = vmatprep.subr.bf16.mxu0 0
      %2326 = vmatpush1.bf16.msra.mxu0 0
      %2327 = vmatprep.subr.bf16.mxu0 0
      %2328 = vmatpush1.bf16.msra.mxu0 0
      %2329 = vmatprep.subr.bf16.mxu0 0
      %2330 = vmatpush1.bf16.msra.mxu0 0
      %2331 = vmatprep.subr.bf16.mxu0 0
      %2332 = vmatpush1.bf16.msra.mxu0 0
      %2333 = vmatprep.subr.bf16.mxu0 0
      %2334 = vmatpush1.bf16.msra.mxu0 0
      %2335 = vmatprep.subr.bf16.mxu0 0
      %2336 = vmatpush1.bf16.msra.mxu0 0
      %2337 = vmatprep.subr.bf16.mxu0 0
      %2338 = vmatpush1.bf16.msra.mxu0 0
      %2339 = vmatprep.mubr.bf16.mxu0 0
      %2340 = vmatmul.mubr.bf16.gmra.mrb[0].mxu0 %v2293
      %v2341 = vpop.f32.mrb[0].mxu0
      %v2342 = vadd.f32 0.0, %v2341
      %v2343 = vpop.f32.mrb[0].mxu0
      %v2344 = vpop.f32.mrb[0].mxu0
      %v2345 = vadd.f32 0.0, %v2344
      %v2346 = vpop.f32.mrb[0].mxu0
      %2347 = vmatprep.mubr.bf16.mxu0 0
      %2348 = vmatmul.mubr.bf16.gmra.mrb[0].mxu0 %v2296
      %v2349 = vpop.f32.mrb[0].mxu0
      %v2350 = vadd.f32 0.0, %v2349
      %v2351 = vpop.f32.mrb[0].mxu0
      %v2352 = vpop.f32.mrb[0].mxu0
      %v2353 = vadd.f32 0.0, %v2352
      %v2354 = vpop.f32.mrb[0].mxu0
      %2355 = vmatprep.mubr.bf16.mxu0 0
      %2356 = vmatmul.mubr.bf16.gmra.mrb[0].mxu0 %v2299
      %v2357 = vpop.f32.mrb[0].mxu0
      %v2358 = vadd.f32 0.0, %v2357
      %v2359 = vpop.f32.mrb[0].mxu0
      %v2360 = vpop.f32.mrb[0].mxu0
      %v2361 = vadd.f32 0.0, %v2360
      %v2362 = vpop.f32.mrb[0].mxu0
      %2363 = vmatprep.mubr.bf16.mxu0 0
      %2364 = vmatmul.mubr.bf16.gmra.mrb[0].mxu0 %v2302
      %v2365 = vpop.f32.mrb[0].mxu0
      %v2366 = vadd.f32 0.0, %v2365
      %v2367 = vpop.f32.mrb[0].mxu0
      %v2368 = vpop.f32.mrb[0].mxu0
      %v2369 = vadd.f32 0.0, %v2368
      %v2370 = vpop.f32.mrb[0].mxu0
      %2371 = vdwg.mxu0
      %v2372 = vadd.f32 %v2214, %v2342
      %v2373 = vadd.f32 %v2215, %v2345
      %v2374 = vadd.f32 %v2216, %v2350
      %v2375 = vadd.f32 %v2217, %v2353
      %v2376 = vadd.f32 %v2218, %v2358
      %v2377 = vadd.f32 %v2219, %v2361
      %v2378 = vadd.f32 %v2220, %v2366
      %v2379 = vadd.f32 %v2221, %v2369
      %s2380 = scalar_lea.vmem %s348, 8
      %v2381 = vld [vmem:[%s2380] sm:$0xf]
      %v2382 = vld [vmem:[%s2380 + $0x8] sm:$0xf]
      %v2383 = vld [vmem:[%s2380 + $0x10] sm:$0xf]
      %v2384 = vld [vmem:[%s2380 + $0x18] sm:$0xf]
      %v2385 = vld [vmem:[%s2380 + $0x20] sm:$0xf]
      %v2386 = vld [vmem:[%s2380 + $0x28] sm:$0xf]
      %v2387 = vld [vmem:[%s2380 + $0x30] sm:$0xf]
      %v2388 = vld [vmem:[%s2380 + $0x38] sm:$0xf]
      %s2389 = scalar_lea.vmem %s3, 24
      %v2390 = vld [vmem:[%s2389] sm:$0x3]
      %v2399 = vunpack.c.l.b16 %v2381
      %v2400 = vunpack.c.l.b16 %v2382
      %v2401 = vunpack.c.l.b16 %v2383
      %v2402 = vunpack.c.l.b16 %v2384
      %v2403 = vunpack.c.l.b16 %v2385
      %v2404 = vunpack.c.l.b16 %v2386
      %v2405 = vunpack.c.l.b16 %v2387
      %v2406 = vunpack.c.l.b16 %v2388
      %v2407 = vpack.c.b16 %v2400, %v2399
      %v2408 = vpack.c.b16 %v2402, %v2401
      %v2409 = vpack.c.b16 %v2404, %v2403
      %v2410 = vpack.c.b16 %v2406, %v2405
      %v2412 = vsel %vm517, %v2407, 0
      %v2415 = vsel %vm517, %v2408, 0
      %v2418 = vsel %vm517, %v2409, 0
      %v2421 = vsel %vm517, %v2410, 0
      %v2424 = vsel %vm530, %v2390, 0
      %2426 = vmatprep.subr.bf16.mxu0 0
      %2427 = vmatpush1.bf16.msra.mxu0 %v2424
      %2428 = vmatprep.subr.bf16.mxu0 0
      %2429 = vmatpush1.bf16.msra.mxu0 0
      %2430 = vmatprep.subr.bf16.mxu0 0
      %2431 = vmatpush1.bf16.msra.mxu0 0
      %2432 = vmatprep.subr.bf16.mxu0 0
      %2433 = vmatpush1.bf16.msra.mxu0 0
      %2434 = vmatprep.subr.bf16.mxu0 0
      %2435 = vmatpush1.bf16.msra.mxu0 0
      %2436 = vmatprep.subr.bf16.mxu0 0
      %2437 = vmatpush1.bf16.msra.mxu0 0
      %2438 = vmatprep.subr.bf16.mxu0 0
      %2439 = vmatpush1.bf16.msra.mxu0 0
      %2440 = vmatprep.subr.bf16.mxu0 0
      %2441 = vmatpush1.bf16.msra.mxu0 0
      %2442 = vmatprep.subr.bf16.mxu0 0
      %2443 = vmatpush1.bf16.msra.mxu0 0
      %2444 = vmatprep.subr.bf16.mxu0 0
      %2445 = vmatpush1.bf16.msra.mxu0 0
      %2446 = vmatprep.subr.bf16.mxu0 0
      %2447 = vmatpush1.bf16.msra.mxu0 0
      %2448 = vmatprep.subr.bf16.mxu0 0
      %2449 = vmatpush1.bf16.msra.mxu0 0
      %2450 = vmatprep.subr.bf16.mxu0 0
      %2451 = vmatpush1.bf16.msra.mxu0 0
      %2452 = vmatprep.subr.bf16.mxu0 0
      %2453 = vmatpush1.bf16.msra.mxu0 0
      %2454 = vmatprep.subr.bf16.mxu0 0
      %2455 = vmatpush1.bf16.msra.mxu0 0
      %2456 = vmatprep.subr.bf16.mxu0 0
      %2457 = vmatpush1.bf16.msra.mxu0 0
      %2458 = vmatprep.mubr.bf16.mxu0 0
      %2459 = vmatmul.mubr.bf16.gmra.mrb[0].mxu0 %v2412
      %v2460 = vpop.f32.mrb[0].mxu0
      %v2461 = vadd.f32 0.0, %v2460
      %v2462 = vpop.f32.mrb[0].mxu0
      %v2463 = vpop.f32.mrb[0].mxu0
      %v2464 = vadd.f32 0.0, %v2463
      %v2465 = vpop.f32.mrb[0].mxu0
      %2466 = vmatprep.mubr.bf16.mxu0 0
      %2467 = vmatmul.mubr.bf16.gmra.mrb[0].mxu0 %v2415
      %v2468 = vpop.f32.mrb[0].mxu0
      %v2469 = vadd.f32 0.0, %v2468
      %v2470 = vpop.f32.mrb[0].mxu0
      %v2471 = vpop.f32.mrb[0].mxu0
      %v2472 = vadd.f32 0.0, %v2471
      %v2473 = vpop.f32.mrb[0].mxu0
      %2474 = vmatprep.mubr.bf16.mxu0 0
      %2475 = vmatmul.mubr.bf16.gmra.mrb[0].mxu0 %v2418
      %v2476 = vpop.f32.mrb[0].mxu0
      %v2477 = vadd.f32 0.0, %v2476
      %v2478 = vpop.f32.mrb[0].mxu0
      %v2479 = vpop.f32.mrb[0].mxu0
      %v2480 = vadd.f32 0.0, %v2479
      %v2481 = vpop.f32.mrb[0].mxu0
      %2482 = vmatprep.mubr.bf16.mxu0 0
      %2483 = vmatmul.mubr.bf16.gmra.mrb[0].mxu0 %v2421
      %v2484 = vpop.f32.mrb[0].mxu0
      %v2485 = vadd.f32 0.0, %v2484
      %v2486 = vpop.f32.mrb[0].mxu0
      %v2487 = vpop.f32.mrb[0].mxu0
      %v2488 = vadd.f32 0.0, %v2487
      %v2489 = vpop.f32.mrb[0].mxu0
      %2490 = vdwg.mxu0
      %v2491 = vadd.f32 %v2372, %v2461
      %v2492 = vadd.f32 %v2373, %v2464
      %v2493 = vadd.f32 %v2374, %v2469
      %v2494 = vadd.f32 %v2375, %v2472
      %v2495 = vadd.f32 %v2376, %v2477
      %v2496 = vadd.f32 %v2377, %v2480
      %v2497 = vadd.f32 %v2378, %v2485
      %v2498 = vadd.f32 %v2379, %v2488
      %v2499 = vld [vmem:[%s2380] sm:$0xf]
      %v2500 = vld [vmem:[%s2380 + $0x4] sm:$0x1]
      %v2501 = vld [vmem:[%s2380 + $0x8] sm:$0xf]
      %v2502 = vld [vmem:[%s2380 + $0xc] sm:$0x1]
      %v2503 = vld [vmem:[%s2380 + $0x10] sm:$0xf]
      %v2504 = vld [vmem:[%s2380 + $0x14] sm:$0x1]
      %v2505 = vld [vmem:[%s2380 + $0x18] sm:$0xf]
      %v2506 = vld [vmem:[%s2380 + $0x1c] sm:$0x1]
      %v2507 = vld [vmem:[%s2380 + $0x20] sm:$0xf]
      %v2508 = vld [vmem:[%s2380 + $0x24] sm:$0x1]
      %v2509 = vld [vmem:[%s2380 + $0x28] sm:$0xf]
      %v2510 = vld [vmem:[%s2380 + $0x2c] sm:$0x1]
      %v2511 = vld [vmem:[%s2380 + $0x30] sm:$0xf]
      %v2512 = vld [vmem:[%s2380 + $0x34] sm:$0x1]
      %v2513 = vld [vmem:[%s2380 + $0x38] sm:$0xf]
      %v2514 = vld [vmem:[%s2380 + $0x3c] sm:$0x1]
      %v2516 = vshrl.u32 %v2499, 16
      %v2518 = vrot.slane %v2516, 4
      %v2519 = vshll.u32 %v2499, 16
      %v2521 = vrot.slane %v2519, 5
      %v2522 = vor.u32 %v2518, %v2521
      %v2523 = vrot.slane %v2522, 4
      %v2525 = vshll.u32 %v2500, 16
      %v2527 = vrot.slane %v2525, 5
      %v2528 = vsel %vm390, %v2523, %v2527
      %v2530 = vshrl.u32 %v2501, 16
      %v2532 = vrot.slane %v2530, 4
      %v2533 = vshll.u32 %v2501, 16
      %v2535 = vrot.slane %v2533, 5
      %v2536 = vor.u32 %v2532, %v2535
      %v2537 = vrot.slane %v2536, 4
      %v2539 = vshll.u32 %v2502, 16
      %v2541 = vrot.slane %v2539, 5
      %v2542 = vsel %vm390, %v2537, %v2541
      %v2544 = vshrl.u32 %v2503, 16
      %v2546 = vrot.slane %v2544, 4
      %v2547 = vshll.u32 %v2503, 16
      %v2549 = vrot.slane %v2547, 5
      %v2550 = vor.u32 %v2546, %v2549
      %v2551 = vrot.slane %v2550, 4
      %v2553 = vshll.u32 %v2504, 16
      %v2555 = vrot.slane %v2553, 5
      %v2556 = vsel %vm390, %v2551, %v2555
      %v2558 = vshrl.u32 %v2505, 16
      %v2560 = vrot.slane %v2558, 4
      %v2561 = vshll.u32 %v2505, 16
      %v2563 = vrot.slane %v2561, 5
      %v2564 = vor.u32 %v2560, %v2563
      %v2565 = vrot.slane %v2564, 4
      %v2567 = vshll.u32 %v2506, 16
      %v2569 = vrot.slane %v2567, 5
      %v2570 = vsel %vm390, %v2565, %v2569
      %v2572 = vshrl.u32 %v2507, 16
      %v2574 = vrot.slane %v2572, 4
      %v2575 = vshll.u32 %v2507, 16
      %v2577 = vrot.slane %v2575, 5
      %v2578 = vor.u32 %v2574, %v2577
      %v2579 = vrot.slane %v2578, 4
      %v2581 = vshll.u32 %v2508, 16
      %v2583 = vrot.slane %v2581, 5
      %v2584 = vsel %vm390, %v2579, %v2583
      %v2586 = vshrl.u32 %v2509, 16
      %v2588 = vrot.slane %v2586, 4
      %v2589 = vshll.u32 %v2509, 16
      %v2591 = vrot.slane %v2589, 5
      %v2592 = vor.u32 %v2588, %v2591
      %v2593 = vrot.slane %v2592, 4
      %v2595 = vshll.u32 %v2510, 16
      %v2597 = vrot.slane %v2595, 5
      %v2598 = vsel %vm390, %v2593, %v2597
      %v2600 = vshrl.u32 %v2511, 16
      %v2602 = vrot.slane %v2600, 4
      %v2603 = vshll.u32 %v2511, 16
      %v2605 = vrot.slane %v2603, 5
      %v2606 = vor.u32 %v2602, %v2605
      %v2607 = vrot.slane %v2606, 4
      %v2609 = vshll.u32 %v2512, 16
      %v2611 = vrot.slane %v2609, 5
      %v2612 = vsel %vm390, %v2607, %v2611
      %v2614 = vshrl.u32 %v2513, 16
      %v2616 = vrot.slane %v2614, 4
      %v2617 = vshll.u32 %v2513, 16
      %v2619 = vrot.slane %v2617, 5
      %v2620 = vor.u32 %v2616, %v2619
      %v2621 = vrot.slane %v2620, 4
      %v2623 = vshll.u32 %v2514, 16
      %v2625 = vrot.slane %v2623, 5
      %v2626 = vsel %vm390, %v2621, %v2625
      %s2627 = scalar_lea.vmem %s3, 26
      %v2628 = vld [vmem:[%s2627] sm:$0x3]
      %v2629 = vunpack.c.l.b16 %v2528
      %v2630 = vunpack.c.l.b16 %v2542
      %v2631 = vunpack.c.l.b16 %v2556
      %v2632 = vunpack.c.l.b16 %v2570
      %v2633 = vunpack.c.l.b16 %v2584
      %v2634 = vunpack.c.l.b16 %v2598
      %v2635 = vunpack.c.l.b16 %v2612
      %v2636 = vunpack.c.l.b16 %v2626
      %v2637 = vpack.c.b16 %v2630, %v2629
      %v2638 = vpack.c.b16 %v2632, %v2631
      %v2639 = vpack.c.b16 %v2634, %v2633
      %v2640 = vpack.c.b16 %v2636, %v2635
      %v2642 = vsel %vm517, %v2637, 0
      %v2645 = vsel %vm517, %v2638, 0
      %v2648 = vsel %vm517, %v2639, 0
      %v2651 = vsel %vm517, %v2640, 0
      %v2654 = vsel %vm530, %v2628, 0
      %2656 = vmatprep.subr.bf16.mxu0 0
      %2657 = vmatpush1.bf16.msra.mxu0 %v2654
      %2658 = vmatprep.subr.bf16.mxu0 0
      %2659 = vmatpush1.bf16.msra.mxu0 0
      %2660 = vmatprep.subr.bf16.mxu0 0
      %2661 = vmatpush1.bf16.msra.mxu0 0
      %2662 = vmatprep.subr.bf16.mxu0 0
      %2663 = vmatpush1.bf16.msra.mxu0 0
      %2664 = vmatprep.subr.bf16.mxu0 0
      %2665 = vmatpush1.bf16.msra.mxu0 0
      %2666 = vmatprep.subr.bf16.mxu0 0
      %2667 = vmatpush1.bf16.msra.mxu0 0
      %2668 = vmatprep.subr.bf16.mxu0 0
      %2669 = vmatpush1.bf16.msra.mxu0 0
      %2670 = vmatprep.subr.bf16.mxu0 0
      %2671 = vmatpush1.bf16.msra.mxu0 0
      %2672 = vmatprep.subr.bf16.mxu0 0
      %2673 = vmatpush1.bf16.msra.mxu0 0
      %2674 = vmatprep.subr.bf16.mxu0 0
      %2675 = vmatpush1.bf16.msra.mxu0 0
      %2676 = vmatprep.subr.bf16.mxu0 0
      %2677 = vmatpush1.bf16.msra.mxu0 0
      %2678 = vmatprep.subr.bf16.mxu0 0
      %2679 = vmatpush1.bf16.msra.mxu0 0
      %2680 = vmatprep.subr.bf16.mxu0 0
      %2681 = vmatpush1.bf16.msra.mxu0 0
      %2682 = vmatprep.subr.bf16.mxu0 0
      %2683 = vmatpush1.bf16.msra.mxu0 0
      %2684 = vmatprep.subr.bf16.mxu0 0
      %2685 = vmatpush1.bf16.msra.mxu0 0
      %2686 = vmatprep.subr.bf16.mxu0 0
      %2687 = vmatpush1.bf16.msra.mxu0 0
      %2688 = vmatprep.mubr.bf16.mxu0 0
      %2689 = vmatmul.mubr.bf16.gmra.mrb[0].mxu0 %v2642
      %v2690 = vpop.f32.mrb[0].mxu0
      %v2691 = vadd.f32 0.0, %v2690
      %v2692 = vpop.f32.mrb[0].mxu0
      %v2693 = vpop.f32.mrb[0].mxu0
      %v2694 = vadd.f32 0.0, %v2693
      %v2695 = vpop.f32.mrb[0].mxu0
      %2696 = vmatprep.mubr.bf16.mxu0 0
      %2697 = vmatmul.mubr.bf16.gmra.mrb[0].mxu0 %v2645
      %v2698 = vpop.f32.mrb[0].mxu0
      %v2699 = vadd.f32 0.0, %v2698
      %v2700 = vpop.f32.mrb[0].mxu0
      %v2701 = vpop.f32.mrb[0].mxu0
      %v2702 = vadd.f32 0.0, %v2701
      %v2703 = vpop.f32.mrb[0].mxu0
      %2704 = vmatprep.mubr.bf16.mxu0 0
      %2705 = vmatmul.mubr.bf16.gmra.mrb[0].mxu0 %v2648
      %v2706 = vpop.f32.mrb[0].mxu0
      %v2707 = vadd.f32 0.0, %v2706
      %v2708 = vpop.f32.mrb[0].mxu0
      %v2709 = vpop.f32.mrb[0].mxu0
      %v2710 = vadd.f32 0.0, %v2709
      %v2711 = vpop.f32.mrb[0].mxu0
      %2712 = vmatprep.mubr.bf16.mxu0 0
      %2713 = vmatmul.mubr.bf16.gmra.mrb[0].mxu0 %v2651
      %v2714 = vpop.f32.mrb[0].mxu0
      %v2715 = vadd.f32 0.0, %v2714
      %v2716 = vpop.f32.mrb[0].mxu0
      %v2717 = vpop.f32.mrb[0].mxu0
      %v2718 = vadd.f32 0.0, %v2717
      %v2719 = vpop.f32.mrb[0].mxu0
      %2720 = vdwg.mxu0
      %v2721 = vadd.f32 %v2491, %v2691
      %v2722 = vadd.f32 %v2492, %v2694
      %v2723 = vadd.f32 %v2493, %v2699
      %v2724 = vadd.f32 %v2494, %v2702
      %v2725 = vadd.f32 %v2495, %v2707
      %v2726 = vadd.f32 %v2496, %v2710
      %v2727 = vadd.f32 %v2497, %v2715
      %v2728 = vadd.f32 %v2498, %v2718
      %v2729 = vld [vmem:[%s2380] sm:$0xe]
      %v2730 = vld [vmem:[%s2380 + $0x8] sm:$0xe]
      %v2731 = vld [vmem:[%s2380 + $0x10] sm:$0xe]
      %v2732 = vld [vmem:[%s2380 + $0x18] sm:$0xe]
      %v2733 = vld [vmem:[%s2380 + $0x20] sm:$0xe]
      %v2734 = vld [vmem:[%s2380 + $0x28] sm:$0xe]
      %v2735 = vld [vmem:[%s2380 + $0x30] sm:$0xe]
      %v2736 = vld [vmem:[%s2380 + $0x38] sm:$0xe]
      %v2753 = vrot.slane %v2729, 5
      %v2754 = vrot.slane %v2753, 4
      %v2755 = vrot.slane %v2500, 5
      %v2756 = vsel %vm725, %v2754, %v2755
      %v2757 = vrot.slane %v2730, 5
      %v2758 = vrot.slane %v2757, 4
      %v2759 = vrot.slane %v2502, 5
      %v2760 = vsel %vm725, %v2758, %v2759
      %v2761 = vrot.slane %v2731, 5
      %v2762 = vrot.slane %v2761, 4
      %v2763 = vrot.slane %v2504, 5
      %v2764 = vsel %vm725, %v2762, %v2763
      %v2765 = vrot.slane %v2732, 5
      %v2766 = vrot.slane %v2765, 4
      %v2767 = vrot.slane %v2506, 5
      %v2768 = vsel %vm725, %v2766, %v2767
      %v2769 = vrot.slane %v2733, 5
      %v2770 = vrot.slane %v2769, 4
      %v2771 = vrot.slane %v2508, 5
      %v2772 = vsel %vm725, %v2770, %v2771
      %v2773 = vrot.slane %v2734, 5
      %v2774 = vrot.slane %v2773, 4
      %v2775 = vrot.slane %v2510, 5
      %v2776 = vsel %vm725, %v2774, %v2775
      %v2777 = vrot.slane %v2735, 5
      %v2778 = vrot.slane %v2777, 4
      %v2779 = vrot.slane %v2512, 5
      %v2780 = vsel %vm725, %v2778, %v2779
      %v2781 = vrot.slane %v2736, 5
      %v2782 = vrot.slane %v2781, 4
      %v2783 = vrot.slane %v2514, 5
      %v2784 = vsel %vm725, %v2782, %v2783
      %s2785 = scalar_lea.vmem %s3, 28
      %v2786 = vld [vmem:[%s2785] sm:$0x3]
      %v2787 = vunpack.c.l.b16 %v2756
      %v2788 = vunpack.c.l.b16 %v2760
      %v2789 = vunpack.c.l.b16 %v2764
      %v2790 = vunpack.c.l.b16 %v2768
      %v2791 = vunpack.c.l.b16 %v2772
      %v2792 = vunpack.c.l.b16 %v2776
      %v2793 = vunpack.c.l.b16 %v2780
      %v2794 = vunpack.c.l.b16 %v2784
      %v2795 = vpack.c.b16 %v2788, %v2787
      %v2796 = vpack.c.b16 %v2790, %v2789
      %v2797 = vpack.c.b16 %v2792, %v2791
      %v2798 = vpack.c.b16 %v2794, %v2793
      %v2800 = vsel %vm517, %v2795, 0
      %v2803 = vsel %vm517, %v2796, 0
      %v2806 = vsel %vm517, %v2797, 0
      %v2809 = vsel %vm517, %v2798, 0
      %v2812 = vsel %vm530, %v2786, 0
      %2814 = vmatprep.subr.bf16.mxu0 0
      %2815 = vmatpush1.bf16.msra.mxu0 %v2812
      %2816 = vmatprep.subr.bf16.mxu0 0
      %2817 = vmatpush1.bf16.msra.mxu0 0
      %2818 = vmatprep.subr.bf16.mxu0 0
      %2819 = vmatpush1.bf16.msra.mxu0 0
      %2820 = vmatprep.subr.bf16.mxu0 0
      %2821 = vmatpush1.bf16.msra.mxu0 0
      %2822 = vmatprep.subr.bf16.mxu0 0
      %2823 = vmatpush1.bf16.msra.mxu0 0
      %2824 = vmatprep.subr.bf16.mxu0 0
      %2825 = vmatpush1.bf16.msra.mxu0 0
      %2826 = vmatprep.subr.bf16.mxu0 0
      %2827 = vmatpush1.bf16.msra.mxu0 0
      %2828 = vmatprep.subr.bf16.mxu0 0
      %2829 = vmatpush1.bf16.msra.mxu0 0
      %2830 = vmatprep.subr.bf16.mxu0 0
      %2831 = vmatpush1.bf16.msra.mxu0 0
      %2832 = vmatprep.subr.bf16.mxu0 0
      %2833 = vmatpush1.bf16.msra.mxu0 0
      %2834 = vmatprep.subr.bf16.mxu0 0
      %2835 = vmatpush1.bf16.msra.mxu0 0
      %2836 = vmatprep.subr.bf16.mxu0 0
      %2837 = vmatpush1.bf16.msra.mxu0 0
      %2838 = vmatprep.subr.bf16.mxu0 0
      %2839 = vmatpush1.bf16.msra.mxu0 0
      %2840 = vmatprep.subr.bf16.mxu0 0
      %2841 = vmatpush1.bf16.msra.mxu0 0
      %2842 = vmatprep.subr.bf16.mxu0 0
      %2843 = vmatpush1.bf16.msra.mxu0 0
      %2844 = vmatprep.subr.bf16.mxu0 0
      %2845 = vmatpush1.bf16.msra.mxu0 0
      %2846 = vmatprep.mubr.bf16.mxu0 0
      %2847 = vmatmul.mubr.bf16.gmra.mrb[0].mxu0 %v2800
      %v2848 = vpop.f32.mrb[0].mxu0
      %v2849 = vadd.f32 0.0, %v2848
      %v2850 = vpop.f32.mrb[0].mxu0
      %v2851 = vpop.f32.mrb[0].mxu0
      %v2852 = vadd.f32 0.0, %v2851
      %v2853 = vpop.f32.mrb[0].mxu0
      %2854 = vmatprep.mubr.bf16.mxu0 0
      %2855 = vmatmul.mubr.bf16.gmra.mrb[0].mxu0 %v2803
      %v2856 = vpop.f32.mrb[0].mxu0
      %v2857 = vadd.f32 0.0, %v2856
      %v2858 = vpop.f32.mrb[0].mxu0
      %v2859 = vpop.f32.mrb[0].mxu0
      %v2860 = vadd.f32 0.0, %v2859
      %v2861 = vpop.f32.mrb[0].mxu0
      %2862 = vmatprep.mubr.bf16.mxu0 0
      %2863 = vmatmul.mubr.bf16.gmra.mrb[0].mxu0 %v2806
      %v2864 = vpop.f32.mrb[0].mxu0
      %v2865 = vadd.f32 0.0, %v2864
      %v2866 = vpop.f32.mrb[0].mxu0
      %v2867 = vpop.f32.mrb[0].mxu0
      %v2868 = vadd.f32 0.0, %v2867
      %v2869 = vpop.f32.mrb[0].mxu0
      %2870 = vmatprep.mubr.bf16.mxu0 0
      %2871 = vmatmul.mubr.bf16.gmra.mrb[0].mxu0 %v2809
      %v2872 = vpop.f32.mrb[0].mxu0
      %v2873 = vadd.f32 0.0, %v2872
      %v2874 = vpop.f32.mrb[0].mxu0
      %v2875 = vpop.f32.mrb[0].mxu0
      %v2876 = vadd.f32 0.0, %v2875
      %v2877 = vpop.f32.mrb[0].mxu0
      %2878 = vdwg.mxu0
      %v2879 = vadd.f32 %v2721, %v2849
      %v2880 = vadd.f32 %v2722, %v2852
      %v2881 = vadd.f32 %v2723, %v2857
      %v2882 = vadd.f32 %v2724, %v2860
      %v2883 = vadd.f32 %v2725, %v2865
      %v2884 = vadd.f32 %v2726, %v2868
      %v2885 = vadd.f32 %v2727, %v2873
      %v2886 = vadd.f32 %v2728, %v2876
      %s2887 = scalar_lea.vmem %s348, 16
      %v2888 = vld [vmem:[%s2887] sm:$0xf]
      %v2889 = vld [vmem:[%s2887 + $0x8] sm:$0xf]
      %v2890 = vld [vmem:[%s2887 + $0x10] sm:$0xf]
      %v2891 = vld [vmem:[%s2887 + $0x18] sm:$0xf]
      %v2892 = vld [vmem:[%s2887 + $0x20] sm:$0xf]
      %v2893 = vld [vmem:[%s2887 + $0x28] sm:$0xf]
      %v2894 = vld [vmem:[%s2887 + $0x30] sm:$0xf]
      %v2895 = vld [vmem:[%s2887 + $0x38] sm:$0xf]
      %s2896 = scalar_lea.vmem %s3, 30
      %v2897 = vld [vmem:[%s2896] sm:$0x3]
      %v2906 = vunpack.c.l.b16 %v2888
      %v2907 = vunpack.c.l.b16 %v2889
      %v2908 = vunpack.c.l.b16 %v2890
      %v2909 = vunpack.c.l.b16 %v2891
      %v2910 = vunpack.c.l.b16 %v2892
      %v2911 = vunpack.c.l.b16 %v2893
      %v2912 = vunpack.c.l.b16 %v2894
      %v2913 = vunpack.c.l.b16 %v2895
      %v2914 = vpack.c.b16 %v2907, %v2906
      %v2915 = vpack.c.b16 %v2909, %v2908
      %v2916 = vpack.c.b16 %v2911, %v2910
      %v2917 = vpack.c.b16 %v2913, %v2912
      %v2919 = vsel %vm517, %v2914, 0
      %v2922 = vsel %vm517, %v2915, 0
      %v2925 = vsel %vm517, %v2916, 0
      %v2928 = vsel %vm517, %v2917, 0
      %v2931 = vsel %vm530, %v2897, 0
      %2933 = vmatprep.subr.bf16.mxu0 0
      %2934 = vmatpush1.bf16.msra.mxu0 %v2931
      %2935 = vmatprep.subr.bf16.mxu0 0
      %2936 = vmatpush1.bf16.msra.mxu0 0
      %2937 = vmatprep.subr.bf16.mxu0 0
      %2938 = vmatpush1.bf16.msra.mxu0 0
      %2939 = vmatprep.subr.bf16.mxu0 0
      %2940 = vmatpush1.bf16.msra.mxu0 0
      %2941 = vmatprep.subr.bf16.mxu0 0
      %2942 = vmatpush1.bf16.msra.mxu0 0
      %2943 = vmatprep.subr.bf16.mxu0 0
      %2944 = vmatpush1.bf16.msra.mxu0 0
      %2945 = vmatprep.subr.bf16.mxu0 0
      %2946 = vmatpush1.bf16.msra.mxu0 0
      %2947 = vmatprep.subr.bf16.mxu0 0
      %2948 = vmatpush1.bf16.msra.mxu0 0
      %2949 = vmatprep.subr.bf16.mxu0 0
      %2950 = vmatpush1.bf16.msra.mxu0 0
      %2951 = vmatprep.subr.bf16.mxu0 0
      %2952 = vmatpush1.bf16.msra.mxu0 0
      %2953 = vmatprep.subr.bf16.mxu0 0
      %2954 = vmatpush1.bf16.msra.mxu0 0
      %2955 = vmatprep.subr.bf16.mxu0 0
      %2956 = vmatpush1.bf16.msra.mxu0 0
      %2957 = vmatprep.subr.bf16.mxu0 0
      %2958 = vmatpush1.bf16.msra.mxu0 0
      %2959 = vmatprep.subr.bf16.mxu0 0
      %2960 = vmatpush1.bf16.msra.mxu0 0
      %2961 = vmatprep.subr.bf16.mxu0 0
      %2962 = vmatpush1.bf16.msra.mxu0 0
      %2963 = vmatprep.subr.bf16.mxu0 0
      %2964 = vmatpush1.bf16.msra.mxu0 0
      %2965 = vmatprep.mubr.bf16.mxu0 0
      %2966 = vmatmul.mubr.bf16.gmra.mrb[0].mxu0 %v2919
      %v2967 = vpop.f32.mrb[0].mxu0
      %v2968 = vadd.f32 0.0, %v2967
      %v2969 = vpop.f32.mrb[0].mxu0
      %v2970 = vpop.f32.mrb[0].mxu0
      %v2971 = vadd.f32 0.0, %v2970
      %v2972 = vpop.f32.mrb[0].mxu0
      %2973 = vmatprep.mubr.bf16.mxu0 0
      %2974 = vmatmul.mubr.bf16.gmra.mrb[0].mxu0 %v2922
      %v2975 = vpop.f32.mrb[0].mxu0
      %v2976 = vadd.f32 0.0, %v2975
      %v2977 = vpop.f32.mrb[0].mxu0
      %v2978 = vpop.f32.mrb[0].mxu0
      %v2979 = vadd.f32 0.0, %v2978
      %v2980 = vpop.f32.mrb[0].mxu0
      %2981 = vmatprep.mubr.bf16.mxu0 0
      %2982 = vmatmul.mubr.bf16.gmra.mrb[0].mxu0 %v2925
      %v2983 = vpop.f32.mrb[0].mxu0
      %v2984 = vadd.f32 0.0, %v2983
      %v2985 = vpop.f32.mrb[0].mxu0
      %v2986 = vpop.f32.mrb[0].mxu0
      %v2987 = vadd.f32 0.0, %v2986
      %v2988 = vpop.f32.mrb[0].mxu0
      %2989 = vmatprep.mubr.bf16.mxu0 0
      %2990 = vmatmul.mubr.bf16.gmra.mrb[0].mxu0 %v2928
      %v2991 = vpop.f32.mrb[0].mxu0
      %v2992 = vadd.f32 0.0, %v2991
      %v2993 = vpop.f32.mrb[0].mxu0
      %v2994 = vpop.f32.mrb[0].mxu0
      %v2995 = vadd.f32 0.0, %v2994
      %v2996 = vpop.f32.mrb[0].mxu0
      %2997 = vdwg.mxu0
      %v2998 = vadd.f32 %v2879, %v2968
      %v2999 = vadd.f32 %v2880, %v2971
      %v3000 = vadd.f32 %v2881, %v2976
      %v3001 = vadd.f32 %v2882, %v2979
      %v3002 = vadd.f32 %v2883, %v2984
      %v3003 = vadd.f32 %v2884, %v2987
      %v3004 = vadd.f32 %v2885, %v2992
      %v3005 = vadd.f32 %v2886, %v2995
      %v3006 = vld [vmem:[%s2887] sm:$0xf]
      %v3007 = vld [vmem:[%s2887 + $0x4] sm:$0x1]
      %v3008 = vld [vmem:[%s2887 + $0x8] sm:$0xf]
      %v3009 = vld [vmem:[%s2887 + $0xc] sm:$0x1]
      %v3010 = vld [vmem:[%s2887 + $0x10] sm:$0xf]
      %v3011 = vld [vmem:[%s2887 + $0x14] sm:$0x1]
      %v3012 = vld [vmem:[%s2887 + $0x18] sm:$0xf]
      %v3013 = vld [vmem:[%s2887 + $0x1c] sm:$0x1]
      %v3014 = vld [vmem:[%s2887 + $0x20] sm:$0xf]
      %v3015 = vld [vmem:[%s2887 + $0x24] sm:$0x1]
      %v3016 = vld [vmem:[%s2887 + $0x28] sm:$0xf]
      %v3017 = vld [vmem:[%s2887 + $0x2c] sm:$0x1]
      %v3018 = vld [vmem:[%s2887 + $0x30] sm:$0xf]
      %v3019 = vld [vmem:[%s2887 + $0x34] sm:$0x1]
      %v3020 = vld [vmem:[%s2887 + $0x38] sm:$0xf]
      %v3021 = vld [vmem:[%s2887 + $0x3c] sm:$0x1]
      %v3023 = vshrl.u32 %v3006, 16
      %v3025 = vrot.slane %v3023, 4
      %v3026 = vshll.u32 %v3006, 16
      %v3028 = vrot.slane %v3026, 5
      %v3029 = vor.u32 %v3025, %v3028
      %v3030 = vrot.slane %v3029, 4
      %v3032 = vshll.u32 %v3007, 16
      %v3034 = vrot.slane %v3032, 5
      %v3035 = vsel %vm390, %v3030, %v3034
      %v3037 = vshrl.u32 %v3008, 16
      %v3039 = vrot.slane %v3037, 4
      %v3040 = vshll.u32 %v3008, 16
      %v3042 = vrot.slane %v3040, 5
      %v3043 = vor.u32 %v3039, %v3042
      %v3044 = vrot.slane %v3043, 4
      %v3046 = vshll.u32 %v3009, 16
      %v3048 = vrot.slane %v3046, 5
      %v3049 = vsel %vm390, %v3044, %v3048
      %v3051 = vshrl.u32 %v3010, 16
      %v3053 = vrot.slane %v3051, 4
      %v3054 = vshll.u32 %v3010, 16
      %v3056 = vrot.slane %v3054, 5
      %v3057 = vor.u32 %v3053, %v3056
      %v3058 = vrot.slane %v3057, 4
      %v3060 = vshll.u32 %v3011, 16
      %v3062 = vrot.slane %v3060, 5
      %v3063 = vsel %vm390, %v3058, %v3062
      %v3065 = vshrl.u32 %v3012, 16
      %v3067 = vrot.slane %v3065, 4
      %v3068 = vshll.u32 %v3012, 16
      %v3070 = vrot.slane %v3068, 5
      %v3071 = vor.u32 %v3067, %v3070
      %v3072 = vrot.slane %v3071, 4
      %v3074 = vshll.u32 %v3013, 16
      %v3076 = vrot.slane %v3074, 5
      %v3077 = vsel %vm390, %v3072, %v3076
      %v3079 = vshrl.u32 %v3014, 16
      %v3081 = vrot.slane %v3079, 4
      %v3082 = vshll.u32 %v3014, 16
      %v3084 = vrot.slane %v3082, 5
      %v3085 = vor.u32 %v3081, %v3084
      %v3086 = vrot.slane %v3085, 4
      %v3088 = vshll.u32 %v3015, 16
      %v3090 = vrot.slane %v3088, 5
      %v3091 = vsel %vm390, %v3086, %v3090
      %v3093 = vshrl.u32 %v3016, 16
      %v3095 = vrot.slane %v3093, 4
      %v3096 = vshll.u32 %v3016, 16
      %v3098 = vrot.slane %v3096, 5
      %v3099 = vor.u32 %v3095, %v3098
      %v3100 = vrot.slane %v3099, 4
      %v3102 = vshll.u32 %v3017, 16
      %v3104 = vrot.slane %v3102, 5
      %v3105 = vsel %vm390, %v3100, %v3104
      %v3107 = vshrl.u32 %v3018, 16
      %v3109 = vrot.slane %v3107, 4
      %v3110 = vshll.u32 %v3018, 16
      %v3112 = vrot.slane %v3110, 5
      %v3113 = vor.u32 %v3109, %v3112
      %v3114 = vrot.slane %v3113, 4
      %v3116 = vshll.u32 %v3019, 16
      %v3118 = vrot.slane %v3116, 5
      %v3119 = vsel %vm390, %v3114, %v3118
      %v3121 = vshrl.u32 %v3020, 16
      %v3123 = vrot.slane %v3121, 4
      %v3124 = vshll.u32 %v3020, 16
      %v3126 = vrot.slane %v3124, 5
      %v3127 = vor.u32 %v3123, %v3126
      %v3128 = vrot.slane %v3127, 4
      %v3130 = vshll.u32 %v3021, 16
      %v3132 = vrot.slane %v3130, 5
      %v3133 = vsel %vm390, %v3128, %v3132
      %s3134 = scalar_lea.vmem %s3, 32
      %v3135 = vld [vmem:[%s3134] sm:$0x3]
      %v3136 = vunpack.c.l.b16 %v3035
      %v3137 = vunpack.c.l.b16 %v3049
      %v3138 = vunpack.c.l.b16 %v3063
      %v3139 = vunpack.c.l.b16 %v3077
      %v3140 = vunpack.c.l.b16 %v3091
      %v3141 = vunpack.c.l.b16 %v3105
      %v3142 = vunpack.c.l.b16 %v3119
      %v3143 = vunpack.c.l.b16 %v3133
      %v3144 = vpack.c.b16 %v3137, %v3136
      %v3145 = vpack.c.b16 %v3139, %v3138
      %v3146 = vpack.c.b16 %v3141, %v3140
      %v3147 = vpack.c.b16 %v3143, %v3142
      %v3149 = vsel %vm517, %v3144, 0
      %v3152 = vsel %vm517, %v3145, 0
      %v3155 = vsel %vm517, %v3146, 0
      %v3158 = vsel %vm517, %v3147, 0
      %v3161 = vsel %vm530, %v3135, 0
      %3163 = vmatprep.subr.bf16.mxu0 0
      %3164 = vmatpush1.bf16.msra.mxu0 %v3161
      %3165 = vmatprep.subr.bf16.mxu0 0
      %3166 = vmatpush1.bf16.msra.mxu0 0
      %3167 = vmatprep.subr.bf16.mxu0 0
      %3168 = vmatpush1.bf16.msra.mxu0 0
      %3169 = vmatprep.subr.bf16.mxu0 0
      %3170 = vmatpush1.bf16.msra.mxu0 0
      %3171 = vmatprep.subr.bf16.mxu0 0
      %3172 = vmatpush1.bf16.msra.mxu0 0
      %3173 = vmatprep.subr.bf16.mxu0 0
      %3174 = vmatpush1.bf16.msra.mxu0 0
      %3175 = vmatprep.subr.bf16.mxu0 0
      %3176 = vmatpush1.bf16.msra.mxu0 0
      %3177 = vmatprep.subr.bf16.mxu0 0
      %3178 = vmatpush1.bf16.msra.mxu0 0
      %3179 = vmatprep.subr.bf16.mxu0 0
      %3180 = vmatpush1.bf16.msra.mxu0 0
      %3181 = vmatprep.subr.bf16.mxu0 0
      %3182 = vmatpush1.bf16.msra.mxu0 0
      %3183 = vmatprep.subr.bf16.mxu0 0
      %3184 = vmatpush1.bf16.msra.mxu0 0
      %3185 = vmatprep.subr.bf16.mxu0 0
      %3186 = vmatpush1.bf16.msra.mxu0 0
      %3187 = vmatprep.subr.bf16.mxu0 0
      %3188 = vmatpush1.bf16.msra.mxu0 0
      %3189 = vmatprep.subr.bf16.mxu0 0
      %3190 = vmatpush1.bf16.msra.mxu0 0
      %3191 = vmatprep.subr.bf16.mxu0 0
      %3192 = vmatpush1.bf16.msra.mxu0 0
      %3193 = vmatprep.subr.bf16.mxu0 0
      %3194 = vmatpush1.bf16.msra.mxu0 0
      %3195 = vmatprep.mubr.bf16.mxu0 0
      %3196 = vmatmul.mubr.bf16.gmra.mrb[0].mxu0 %v3149
      %v3197 = vpop.f32.mrb[0].mxu0
      %v3198 = vadd.f32 0.0, %v3197
      %v3199 = vpop.f32.mrb[0].mxu0
      %v3200 = vpop.f32.mrb[0].mxu0
      %v3201 = vadd.f32 0.0, %v3200
      %v3202 = vpop.f32.mrb[0].mxu0
      %3203 = vmatprep.mubr.bf16.mxu0 0
      %3204 = vmatmul.mubr.bf16.gmra.mrb[0].mxu0 %v3152
      %v3205 = vpop.f32.mrb[0].mxu0
      %v3206 = vadd.f32 0.0, %v3205
      %v3207 = vpop.f32.mrb[0].mxu0
      %v3208 = vpop.f32.mrb[0].mxu0
      %v3209 = vadd.f32 0.0, %v3208
      %v3210 = vpop.f32.mrb[0].mxu0
      %3211 = vmatprep.mubr.bf16.mxu0 0
      %3212 = vmatmul.mubr.bf16.gmra.mrb[0].mxu0 %v3155
      %v3213 = vpop.f32.mrb[0].mxu0
      %v3214 = vadd.f32 0.0, %v3213
      %v3215 = vpop.f32.mrb[0].mxu0
      %v3216 = vpop.f32.mrb[0].mxu0
      %v3217 = vadd.f32 0.0, %v3216
      %v3218 = vpop.f32.mrb[0].mxu0
      %3219 = vmatprep.mubr.bf16.mxu0 0
      %3220 = vmatmul.mubr.bf16.gmra.mrb[0].mxu0 %v3158
      %v3221 = vpop.f32.mrb[0].mxu0
      %v3222 = vadd.f32 0.0, %v3221
      %v3223 = vpop.f32.mrb[0].mxu0
      %v3224 = vpop.f32.mrb[0].mxu0
      %v3225 = vadd.f32 0.0, %v3224
      %v3226 = vpop.f32.mrb[0].mxu0
      %3227 = vdwg.mxu0
      %v3228 = vadd.f32 %v2998, %v3198
      %v3229 = vadd.f32 %v2999, %v3201
      %v3230 = vadd.f32 %v3000, %v3206
      %v3231 = vadd.f32 %v3001, %v3209
      %v3232 = vadd.f32 %v3002, %v3214
      %v3233 = vadd.f32 %v3003, %v3217
      %v3234 = vadd.f32 %v3004, %v3222
      %v3235 = vadd.f32 %v3005, %v3225
      %v3236 = vld [vmem:[%s2887] sm:$0xe]
      %v3237 = vld [vmem:[%s2887 + $0x8] sm:$0xe]
      %v3238 = vld [vmem:[%s2887 + $0x10] sm:$0xe]
      %v3239 = vld [vmem:[%s2887 + $0x18] sm:$0xe]
      %v3240 = vld [vmem:[%s2887 + $0x20] sm:$0xe]
      %v3241 = vld [vmem:[%s2887 + $0x28] sm:$0xe]
      %v3242 = vld [vmem:[%s2887 + $0x30] sm:$0xe]
      %v3243 = vld [vmem:[%s2887 + $0x38] sm:$0xe]
      %v3260 = vrot.slane %v3236, 5
      %v3261 = vrot.slane %v3260, 4
      %v3262 = vrot.slane %v3007, 5
      %v3263 = vsel %vm725, %v3261, %v3262
      %v3264 = vrot.slane %v3237, 5
      %v3265 = vrot.slane %v3264, 4
      %v3266 = vrot.slane %v3009, 5
      %v3267 = vsel %vm725, %v3265, %v3266
      %v3268 = vrot.slane %v3238, 5
      %v3269 = vrot.slane %v3268, 4
      %v3270 = vrot.slane %v3011, 5
      %v3271 = vsel %vm725, %v3269, %v3270
      %v3272 = vrot.slane %v3239, 5
      %v3273 = vrot.slane %v3272, 4
      %v3274 = vrot.slane %v3013, 5
      %v3275 = vsel %vm725, %v3273, %v3274
      %v3276 = vrot.slane %v3240, 5
      %v3277 = vrot.slane %v3276, 4
      %v3278 = vrot.slane %v3015, 5
      %v3279 = vsel %vm725, %v3277, %v3278
      %v3280 = vrot.slane %v3241, 5
      %v3281 = vrot.slane %v3280, 4
      %v3282 = vrot.slane %v3017, 5
      %v3283 = vsel %vm725, %v3281, %v3282
      %v3284 = vrot.slane %v3242, 5
      %v3285 = vrot.slane %v3284, 4
      %v3286 = vrot.slane %v3019, 5
      %v3287 = vsel %vm725, %v3285, %v3286
      %v3288 = vrot.slane %v3243, 5
      %v3289 = vrot.slane %v3288, 4
      %v3290 = vrot.slane %v3021, 5
      %v3291 = vsel %vm725, %v3289, %v3290
      %s3292 = scalar_lea.vmem %s3, 34
      %v3293 = vld [vmem:[%s3292] sm:$0x3]
      %v3294 = vunpack.c.l.b16 %v3263
      %v3295 = vunpack.c.l.b16 %v3267
      %v3296 = vunpack.c.l.b16 %v3271
      %v3297 = vunpack.c.l.b16 %v3275
      %v3298 = vunpack.c.l.b16 %v3279
      %v3299 = vunpack.c.l.b16 %v3283
      %v3300 = vunpack.c.l.b16 %v3287
      %v3301 = vunpack.c.l.b16 %v3291
      %v3302 = vpack.c.b16 %v3295, %v3294
      %v3303 = vpack.c.b16 %v3297, %v3296
      %v3304 = vpack.c.b16 %v3299, %v3298
      %v3305 = vpack.c.b16 %v3301, %v3300
      %v3307 = vsel %vm517, %v3302, 0
      %v3310 = vsel %vm517, %v3303, 0
      %v3313 = vsel %vm517, %v3304, 0
      %v3316 = vsel %vm517, %v3305, 0
      %v3319 = vsel %vm530, %v3293, 0
      %3321 = vmatprep.subr.bf16.mxu0 0
      %3322 = vmatpush1.bf16.msra.mxu0 %v3319
      %3323 = vmatprep.subr.bf16.mxu0 0
      %3324 = vmatpush1.bf16.msra.mxu0 0
      %3325 = vmatprep.subr.bf16.mxu0 0
      %3326 = vmatpush1.bf16.msra.mxu0 0
      %3327 = vmatprep.subr.bf16.mxu0 0
      %3328 = vmatpush1.bf16.msra.mxu0 0
      %3329 = vmatprep.subr.bf16.mxu0 0
      %3330 = vmatpush1.bf16.msra.mxu0 0
      %3331 = vmatprep.subr.bf16.mxu0 0
      %3332 = vmatpush1.bf16.msra.mxu0 0
      %3333 = vmatprep.subr.bf16.mxu0 0
      %3334 = vmatpush1.bf16.msra.mxu0 0
      %3335 = vmatprep.subr.bf16.mxu0 0
      %3336 = vmatpush1.bf16.msra.mxu0 0
      %3337 = vmatprep.subr.bf16.mxu0 0
      %3338 = vmatpush1.bf16.msra.mxu0 0
      %3339 = vmatprep.subr.bf16.mxu0 0
      %3340 = vmatpush1.bf16.msra.mxu0 0
      %3341 = vmatprep.subr.bf16.mxu0 0
      %3342 = vmatpush1.bf16.msra.mxu0 0
      %3343 = vmatprep.subr.bf16.mxu0 0
      %3344 = vmatpush1.bf16.msra.mxu0 0
      %3345 = vmatprep.subr.bf16.mxu0 0
      %3346 = vmatpush1.bf16.msra.mxu0 0
      %3347 = vmatprep.subr.bf16.mxu0 0
      %3348 = vmatpush1.bf16.msra.mxu0 0
      %3349 = vmatprep.subr.bf16.mxu0 0
      %3350 = vmatpush1.bf16.msra.mxu0 0
      %3351 = vmatprep.subr.bf16.mxu0 0
      %3352 = vmatpush1.bf16.msra.mxu0 0
      %3353 = vmatprep.mubr.bf16.mxu0 0
      %3354 = vmatmul.mubr.bf16.gmra.mrb[0].mxu0 %v3307
      %v3355 = vpop.f32.mrb[0].mxu0
      %v3356 = vadd.f32 0.0, %v3355
      %v3357 = vpop.f32.mrb[0].mxu0
      %v3358 = vpop.f32.mrb[0].mxu0
      %v3359 = vadd.f32 0.0, %v3358
      %v3360 = vpop.f32.mrb[0].mxu0
      %3361 = vmatprep.mubr.bf16.mxu0 0
      %3362 = vmatmul.mubr.bf16.gmra.mrb[0].mxu0 %v3310
      %v3363 = vpop.f32.mrb[0].mxu0
      %v3364 = vadd.f32 0.0, %v3363
      %v3365 = vpop.f32.mrb[0].mxu0
      %v3366 = vpop.f32.mrb[0].mxu0
      %v3367 = vadd.f32 0.0, %v3366
      %v3368 = vpop.f32.mrb[0].mxu0
      %3369 = vmatprep.mubr.bf16.mxu0 0
      %3370 = vmatmul.mubr.bf16.gmra.mrb[0].mxu0 %v3313
      %v3371 = vpop.f32.mrb[0].mxu0
      %v3372 = vadd.f32 0.0, %v3371
      %v3373 = vpop.f32.mrb[0].mxu0
      %v3374 = vpop.f32.mrb[0].mxu0
      %v3375 = vadd.f32 0.0, %v3374
      %v3376 = vpop.f32.mrb[0].mxu0
      %3377 = vmatprep.mubr.bf16.mxu0 0
      %3378 = vmatmul.mubr.bf16.gmra.mrb[0].mxu0 %v3316
      %v3379 = vpop.f32.mrb[0].mxu0
      %v3380 = vadd.f32 0.0, %v3379
      %v3381 = vpop.f32.mrb[0].mxu0
      %v3382 = vpop.f32.mrb[0].mxu0
      %v3383 = vadd.f32 0.0, %v3382
      %v3384 = vpop.f32.mrb[0].mxu0
      %3385 = vdwg.mxu0
      %v3386 = vadd.f32 %v3228, %v3356
      %v3387 = vadd.f32 %v3229, %v3359
      %v3388 = vadd.f32 %v3230, %v3364
      %v3389 = vadd.f32 %v3231, %v3367
      %v3390 = vadd.f32 %v3232, %v3372
      %v3391 = vadd.f32 %v3233, %v3375
      %v3392 = vadd.f32 %v3234, %v3380
      %v3393 = vadd.f32 %v3235, %v3383
      %v3394 = vld [vmem:[%s359] sm:$0xf]
      %v3395 = vld [vmem:[%s359 + $0x8] sm:$0xf]
      %v3396 = vld [vmem:[%s359 + $0x10] sm:$0xf]
      %v3397 = vld [vmem:[%s359 + $0x18] sm:$0xf]
      %v3398 = vld [vmem:[%s359 + $0x20] sm:$0xf]
      %v3399 = vld [vmem:[%s359 + $0x28] sm:$0xf]
      %v3400 = vld [vmem:[%s359 + $0x30] sm:$0xf]
      %v3401 = vld [vmem:[%s359 + $0x38] sm:$0xf]
      %s3402 = scalar_lea.vmem %s3, 36
      %v3403 = vld [vmem:[%s3402] sm:$0x3]
      %v3412 = vunpack.c.l.b16 %v3394
      %v3413 = vunpack.c.l.b16 %v3395
      %v3414 = vunpack.c.l.b16 %v3396
      %v3415 = vunpack.c.l.b16 %v3397
      %v3416 = vunpack.c.l.b16 %v3398
      %v3417 = vunpack.c.l.b16 %v3399
      %v3418 = vunpack.c.l.b16 %v3400
      %v3419 = vunpack.c.l.b16 %v3401
      %v3420 = vpack.c.b16 %v3413, %v3412
      %v3421 = vpack.c.b16 %v3415, %v3414
      %v3422 = vpack.c.b16 %v3417, %v3416
      %v3423 = vpack.c.b16 %v3419, %v3418
      %v3425 = vsel %vm517, %v3420, 0
      %v3428 = vsel %vm517, %v3421, 0
      %v3431 = vsel %vm517, %v3422, 0
      %v3434 = vsel %vm517, %v3423, 0
      %v3437 = vsel %vm530, %v3403, 0
      %3439 = vmatprep.subr.bf16.mxu0 0
      %3440 = vmatpush1.bf16.msra.mxu0 %v3437
      %3441 = vmatprep.subr.bf16.mxu0 0
      %3442 = vmatpush1.bf16.msra.mxu0 0
      %3443 = vmatprep.subr.bf16.mxu0 0
      %3444 = vmatpush1.bf16.msra.mxu0 0
      %3445 = vmatprep.subr.bf16.mxu0 0
      %3446 = vmatpush1.bf16.msra.mxu0 0
      %3447 = vmatprep.subr.bf16.mxu0 0
      %3448 = vmatpush1.bf16.msra.mxu0 0
      %3449 = vmatprep.subr.bf16.mxu0 0
      %3450 = vmatpush1.bf16.msra.mxu0 0
      %3451 = vmatprep.subr.bf16.mxu0 0
      %3452 = vmatpush1.bf16.msra.mxu0 0
      %3453 = vmatprep.subr.bf16.mxu0 0
      %3454 = vmatpush1.bf16.msra.mxu0 0
      %3455 = vmatprep.subr.bf16.mxu0 0
      %3456 = vmatpush1.bf16.msra.mxu0 0
      %3457 = vmatprep.subr.bf16.mxu0 0
      %3458 = vmatpush1.bf16.msra.mxu0 0
      %3459 = vmatprep.subr.bf16.mxu0 0
      %3460 = vmatpush1.bf16.msra.mxu0 0
      %3461 = vmatprep.subr.bf16.mxu0 0
      %3462 = vmatpush1.bf16.msra.mxu0 0
      %3463 = vmatprep.subr.bf16.mxu0 0
      %3464 = vmatpush1.bf16.msra.mxu0 0
      %3465 = vmatprep.subr.bf16.mxu0 0
      %3466 = vmatpush1.bf16.msra.mxu0 0
      %3467 = vmatprep.subr.bf16.mxu0 0
      %3468 = vmatpush1.bf16.msra.mxu0 0
      %3469 = vmatprep.subr.bf16.mxu0 0
      %3470 = vmatpush1.bf16.msra.mxu0 0
      %3471 = vmatprep.mubr.bf16.mxu0 0
      %3472 = vmatmul.mubr.bf16.gmra.mrb[0].mxu0 %v3425
      %v3473 = vpop.f32.mrb[0].mxu0
      %v3474 = vadd.f32 0.0, %v3473
      %v3475 = vpop.f32.mrb[0].mxu0
      %v3476 = vpop.f32.mrb[0].mxu0
      %v3477 = vadd.f32 0.0, %v3476
      %v3478 = vpop.f32.mrb[0].mxu0
      %3479 = vmatprep.mubr.bf16.mxu0 0
      %3480 = vmatmul.mubr.bf16.gmra.mrb[0].mxu0 %v3428
      %v3481 = vpop.f32.mrb[0].mxu0
      %v3482 = vadd.f32 0.0, %v3481
      %v3483 = vpop.f32.mrb[0].mxu0
      %v3484 = vpop.f32.mrb[0].mxu0
      %v3485 = vadd.f32 0.0, %v3484
      %v3486 = vpop.f32.mrb[0].mxu0
      %3487 = vmatprep.mubr.bf16.mxu0 0
      %3488 = vmatmul.mubr.bf16.gmra.mrb[0].mxu0 %v3431
      %v3489 = vpop.f32.mrb[0].mxu0
      %v3490 = vadd.f32 0.0, %v3489
      %v3491 = vpop.f32.mrb[0].mxu0
      %v3492 = vpop.f32.mrb[0].mxu0
      %v3493 = vadd.f32 0.0, %v3492
      %v3494 = vpop.f32.mrb[0].mxu0
      %3495 = vmatprep.mubr.bf16.mxu0 0
      %3496 = vmatmul.mubr.bf16.gmra.mrb[0].mxu0 %v3434
      %v3497 = vpop.f32.mrb[0].mxu0
      %v3498 = vadd.f32 0.0, %v3497
      %v3499 = vpop.f32.mrb[0].mxu0
      %v3500 = vpop.f32.mrb[0].mxu0
      %v3501 = vadd.f32 0.0, %v3500
      %v3502 = vpop.f32.mrb[0].mxu0
      %3503 = vdwg.mxu0
      %v3504 = vadd.f32 %v3386, %v3474
      %v3505 = vadd.f32 %v3387, %v3477
      %v3506 = vadd.f32 %v3388, %v3482
      %v3507 = vadd.f32 %v3389, %v3485
      %v3508 = vadd.f32 %v3390, %v3490
      %v3509 = vadd.f32 %v3391, %v3493
      %v3510 = vadd.f32 %v3392, %v3498
      %v3511 = vadd.f32 %v3393, %v3501
      %v3512 = vld [vmem:[%s359] sm:$0xf]
      %v3513 = vld [vmem:[%s359 + $0x4] sm:$0x1]
      %v3514 = vld [vmem:[%s359 + $0x8] sm:$0xf]
      %v3515 = vld [vmem:[%s359 + $0xc] sm:$0x1]
      %v3516 = vld [vmem:[%s359 + $0x10] sm:$0xf]
      %v3517 = vld [vmem:[%s359 + $0x14] sm:$0x1]
      %v3518 = vld [vmem:[%s359 + $0x18] sm:$0xf]
      %v3519 = vld [vmem:[%s359 + $0x1c] sm:$0x1]
      %v3520 = vld [vmem:[%s359 + $0x20] sm:$0xf]
      %v3521 = vld [vmem:[%s359 + $0x24] sm:$0x1]
      %v3522 = vld [vmem:[%s359 + $0x28] sm:$0xf]
      %v3523 = vld [vmem:[%s359 + $0x2c] sm:$0x1]
      %v3524 = vld [vmem:[%s359 + $0x30] sm:$0xf]
      %v3525 = vld [vmem:[%s359 + $0x34] sm:$0x1]
      %v3526 = vld [vmem:[%s359 + $0x38] sm:$0xf]
      %v3527 = vld [vmem:[%s359 + $0x3c] sm:$0x1]
      %v3529 = vshrl.u32 %v3512, 16
      %v3531 = vrot.slane %v3529, 4
      %v3532 = vshll.u32 %v3512, 16
      %v3534 = vrot.slane %v3532, 5
      %v3535 = vor.u32 %v3531, %v3534
      %v3536 = vrot.slane %v3535, 4
      %v3538 = vshll.u32 %v3513, 16
      %v3540 = vrot.slane %v3538, 5
      %v3541 = vsel %vm390, %v3536, %v3540
      %v3543 = vshrl.u32 %v3514, 16
      %v3545 = vrot.slane %v3543, 4
      %v3546 = vshll.u32 %v3514, 16
      %v3548 = vrot.slane %v3546, 5
      %v3549 = vor.u32 %v3545, %v3548
      %v3550 = vrot.slane %v3549, 4
      %v3552 = vshll.u32 %v3515, 16
      %v3554 = vrot.slane %v3552, 5
      %v3555 = vsel %vm390, %v3550, %v3554
      %v3557 = vshrl.u32 %v3516, 16
      %v3559 = vrot.slane %v3557, 4
      %v3560 = vshll.u32 %v3516, 16
      %v3562 = vrot.slane %v3560, 5
      %v3563 = vor.u32 %v3559, %v3562
      %v3564 = vrot.slane %v3563, 4
      %v3566 = vshll.u32 %v3517, 16
      %v3568 = vrot.slane %v3566, 5
      %v3569 = vsel %vm390, %v3564, %v3568
      %v3571 = vshrl.u32 %v3518, 16
      %v3573 = vrot.slane %v3571, 4
      %v3574 = vshll.u32 %v3518, 16
      %v3576 = vrot.slane %v3574, 5
      %v3577 = vor.u32 %v3573, %v3576
      %v3578 = vrot.slane %v3577, 4
      %v3580 = vshll.u32 %v3519, 16
      %v3582 = vrot.slane %v3580, 5
      %v3583 = vsel %vm390, %v3578, %v3582
      %v3585 = vshrl.u32 %v3520, 16
      %v3587 = vrot.slane %v3585, 4
      %v3588 = vshll.u32 %v3520, 16
      %v3590 = vrot.slane %v3588, 5
      %v3591 = vor.u32 %v3587, %v3590
      %v3592 = vrot.slane %v3591, 4
      %v3594 = vshll.u32 %v3521, 16
      %v3596 = vrot.slane %v3594, 5
      %v3597 = vsel %vm390, %v3592, %v3596
      %v3599 = vshrl.u32 %v3522, 16
      %v3601 = vrot.slane %v3599, 4
      %v3602 = vshll.u32 %v3522, 16
      %v3604 = vrot.slane %v3602, 5
      %v3605 = vor.u32 %v3601, %v3604
      %v3606 = vrot.slane %v3605, 4
      %v3608 = vshll.u32 %v3523, 16
      %v3610 = vrot.slane %v3608, 5
      %v3611 = vsel %vm390, %v3606, %v3610
      %v3613 = vshrl.u32 %v3524, 16
      %v3615 = vrot.slane %v3613, 4
      %v3616 = vshll.u32 %v3524, 16
      %v3618 = vrot.slane %v3616, 5
      %v3619 = vor.u32 %v3615, %v3618
      %v3620 = vrot.slane %v3619, 4
      %v3622 = vshll.u32 %v3525, 16
      %v3624 = vrot.slane %v3622, 5
      %v3625 = vsel %vm390, %v3620, %v3624
      %v3627 = vshrl.u32 %v3526, 16
      %v3629 = vrot.slane %v3627, 4
      %v3630 = vshll.u32 %v3526, 16
      %v3632 = vrot.slane %v3630, 5
      %v3633 = vor.u32 %v3629, %v3632
      %v3634 = vrot.slane %v3633, 4
      %v3636 = vshll.u32 %v3527, 16
      %v3638 = vrot.slane %v3636, 5
      %v3639 = vsel %vm390, %v3634, %v3638
      %s3640 = scalar_lea.vmem %s3, 38
      %v3641 = vld [vmem:[%s3640] sm:$0x3]
      %v3642 = vunpack.c.l.b16 %v3541
      %v3643 = vunpack.c.l.b16 %v3555
      %v3644 = vunpack.c.l.b16 %v3569
      %v3645 = vunpack.c.l.b16 %v3583
      %v3646 = vunpack.c.l.b16 %v3597
      %v3647 = vunpack.c.l.b16 %v3611
      %v3648 = vunpack.c.l.b16 %v3625
      %v3649 = vunpack.c.l.b16 %v3639
      %v3650 = vpack.c.b16 %v3643, %v3642
      %v3651 = vpack.c.b16 %v3645, %v3644
      %v3652 = vpack.c.b16 %v3647, %v3646
      %v3653 = vpack.c.b16 %v3649, %v3648
      %v3655 = vsel %vm517, %v3650, 0
      %v3658 = vsel %vm517, %v3651, 0
      %v3661 = vsel %vm517, %v3652, 0
      %v3664 = vsel %vm517, %v3653, 0
      %v3667 = vsel %vm530, %v3641, 0
      %3669 = vmatprep.subr.bf16.mxu0 0
      %3670 = vmatpush1.bf16.msra.mxu0 %v3667
      %3671 = vmatprep.subr.bf16.mxu0 0
      %3672 = vmatpush1.bf16.msra.mxu0 0
      %3673 = vmatprep.subr.bf16.mxu0 0
      %3674 = vmatpush1.bf16.msra.mxu0 0
      %3675 = vmatprep.subr.bf16.mxu0 0
      %3676 = vmatpush1.bf16.msra.mxu0 0
      %3677 = vmatprep.subr.bf16.mxu0 0
      %3678 = vmatpush1.bf16.msra.mxu0 0
      %3679 = vmatprep.subr.bf16.mxu0 0
      %3680 = vmatpush1.bf16.msra.mxu0 0
      %3681 = vmatprep.subr.bf16.mxu0 0
      %3682 = vmatpush1.bf16.msra.mxu0 0
      %3683 = vmatprep.subr.bf16.mxu0 0
      %3684 = vmatpush1.bf16.msra.mxu0 0
      %3685 = vmatprep.subr.bf16.mxu0 0
      %3686 = vmatpush1.bf16.msra.mxu0 0
      %3687 = vmatprep.subr.bf16.mxu0 0
      %3688 = vmatpush1.bf16.msra.mxu0 0
      %3689 = vmatprep.subr.bf16.mxu0 0
      %3690 = vmatpush1.bf16.msra.mxu0 0
      %3691 = vmatprep.subr.bf16.mxu0 0
      %3692 = vmatpush1.bf16.msra.mxu0 0
      %3693 = vmatprep.subr.bf16.mxu0 0
      %3694 = vmatpush1.bf16.msra.mxu0 0
      %3695 = vmatprep.subr.bf16.mxu0 0
      %3696 = vmatpush1.bf16.msra.mxu0 0
      %3697 = vmatprep.subr.bf16.mxu0 0
      %3698 = vmatpush1.bf16.msra.mxu0 0
      %3699 = vmatprep.subr.bf16.mxu0 0
      %3700 = vmatpush1.bf16.msra.mxu0 0
      %3701 = vmatprep.mubr.bf16.mxu0 0
      %3702 = vmatmul.mubr.bf16.gmra.mrb[0].mxu0 %v3655
      %v3703 = vpop.f32.mrb[0].mxu0
      %v3704 = vadd.f32 0.0, %v3703
      %v3705 = vpop.f32.mrb[0].mxu0
      %v3706 = vpop.f32.mrb[0].mxu0
      %v3707 = vadd.f32 0.0, %v3706
      %v3708 = vpop.f32.mrb[0].mxu0
      %3709 = vmatprep.mubr.bf16.mxu0 0
      %3710 = vmatmul.mubr.bf16.gmra.mrb[0].mxu0 %v3658
      %v3711 = vpop.f32.mrb[0].mxu0
      %v3712 = vadd.f32 0.0, %v3711
      %v3713 = vpop.f32.mrb[0].mxu0
      %v3714 = vpop.f32.mrb[0].mxu0
      %v3715 = vadd.f32 0.0, %v3714
      %v3716 = vpop.f32.mrb[0].mxu0
      %3717 = vmatprep.mubr.bf16.mxu0 0
      %3718 = vmatmul.mubr.bf16.gmra.mrb[0].mxu0 %v3661
      %v3719 = vpop.f32.mrb[0].mxu0
      %v3720 = vadd.f32 0.0, %v3719
      %v3721 = vpop.f32.mrb[0].mxu0
      %v3722 = vpop.f32.mrb[0].mxu0
      %v3723 = vadd.f32 0.0, %v3722
      %v3724 = vpop.f32.mrb[0].mxu0
      %3725 = vmatprep.mubr.bf16.mxu0 0
      %3726 = vmatmul.mubr.bf16.gmra.mrb[0].mxu0 %v3664
      %v3727 = vpop.f32.mrb[0].mxu0
      %v3728 = vadd.f32 0.0, %v3727
      %v3729 = vpop.f32.mrb[0].mxu0
      %v3730 = vpop.f32.mrb[0].mxu0
      %v3731 = vadd.f32 0.0, %v3730
      %v3732 = vpop.f32.mrb[0].mxu0
      %3733 = vdwg.mxu0
      %v3734 = vadd.f32 %v3504, %v3704
      %v3735 = vadd.f32 %v3505, %v3707
      %v3736 = vadd.f32 %v3506, %v3712
      %v3737 = vadd.f32 %v3507, %v3715
      %v3738 = vadd.f32 %v3508, %v3720
      %v3739 = vadd.f32 %v3509, %v3723
      %v3740 = vadd.f32 %v3510, %v3728
      %v3741 = vadd.f32 %v3511, %v3731
      %v3742 = vld [vmem:[%s359] sm:$0xe]
      %v3743 = vld [vmem:[%s359 + $0x8] sm:$0xe]
      %v3744 = vld [vmem:[%s359 + $0x10] sm:$0xe]
      %v3745 = vld [vmem:[%s359 + $0x18] sm:$0xe]
      %v3746 = vld [vmem:[%s359 + $0x20] sm:$0xe]
      %v3747 = vld [vmem:[%s359 + $0x28] sm:$0xe]
      %v3748 = vld [vmem:[%s359 + $0x30] sm:$0xe]
      %v3749 = vld [vmem:[%s359 + $0x38] sm:$0xe]
      %v3766 = vrot.slane %v3742, 5
      %v3767 = vrot.slane %v3766, 4
      %v3768 = vrot.slane %v3513, 5
      %v3769 = vsel %vm725, %v3767, %v3768
      %v3770 = vrot.slane %v3743, 5
      %v3771 = vrot.slane %v3770, 4
      %v3772 = vrot.slane %v3515, 5
      %v3773 = vsel %vm725, %v3771, %v3772
      %v3774 = vrot.slane %v3744, 5
      %v3775 = vrot.slane %v3774, 4
      %v3776 = vrot.slane %v3517, 5
      %v3777 = vsel %vm725, %v3775, %v3776
      %v3778 = vrot.slane %v3745, 5
      %v3779 = vrot.slane %v3778, 4
      %v3780 = vrot.slane %v3519, 5
      %v3781 = vsel %vm725, %v3779, %v3780
      %v3782 = vrot.slane %v3746, 5
      %v3783 = vrot.slane %v3782, 4
      %v3784 = vrot.slane %v3521, 5
      %v3785 = vsel %vm725, %v3783, %v3784
      %v3786 = vrot.slane %v3747, 5
      %v3787 = vrot.slane %v3786, 4
      %v3788 = vrot.slane %v3523, 5
      %v3789 = vsel %vm725, %v3787, %v3788
      %v3790 = vrot.slane %v3748, 5
      %v3791 = vrot.slane %v3790, 4
      %v3792 = vrot.slane %v3525, 5
      %v3793 = vsel %vm725, %v3791, %v3792
      %v3794 = vrot.slane %v3749, 5
      %v3795 = vrot.slane %v3794, 4
      %v3796 = vrot.slane %v3527, 5
      %v3797 = vsel %vm725, %v3795, %v3796
      %s3798 = scalar_lea.vmem %s3, 40
      %v3799 = vld [vmem:[%s3798] sm:$0x3]
      %v3800 = vunpack.c.l.b16 %v3769
      %v3801 = vunpack.c.l.b16 %v3773
      %v3802 = vunpack.c.l.b16 %v3777
      %v3803 = vunpack.c.l.b16 %v3781
      %v3804 = vunpack.c.l.b16 %v3785
      %v3805 = vunpack.c.l.b16 %v3789
      %v3806 = vunpack.c.l.b16 %v3793
      %v3807 = vunpack.c.l.b16 %v3797
      %v3808 = vpack.c.b16 %v3801, %v3800
      %v3809 = vpack.c.b16 %v3803, %v3802
      %v3810 = vpack.c.b16 %v3805, %v3804
      %v3811 = vpack.c.b16 %v3807, %v3806
      %v3813 = vsel %vm517, %v3808, 0
      %v3816 = vsel %vm517, %v3809, 0
      %v3819 = vsel %vm517, %v3810, 0
      %v3822 = vsel %vm517, %v3811, 0
      %v3825 = vsel %vm530, %v3799, 0
      %3827 = vmatprep.subr.bf16.mxu0 0
      %3828 = vmatpush1.bf16.msra.mxu0 %v3825
      %3829 = vmatprep.subr.bf16.mxu0 0
      %3830 = vmatpush1.bf16.msra.mxu0 0
      %3831 = vmatprep.subr.bf16.mxu0 0
      %3832 = vmatpush1.bf16.msra.mxu0 0
      %3833 = vmatprep.subr.bf16.mxu0 0
      %3834 = vmatpush1.bf16.msra.mxu0 0
      %3835 = vmatprep.subr.bf16.mxu0 0
      %3836 = vmatpush1.bf16.msra.mxu0 0
      %3837 = vmatprep.subr.bf16.mxu0 0
      %3838 = vmatpush1.bf16.msra.mxu0 0
      %3839 = vmatprep.subr.bf16.mxu0 0
      %3840 = vmatpush1.bf16.msra.mxu0 0
      %3841 = vmatprep.subr.bf16.mxu0 0
      %3842 = vmatpush1.bf16.msra.mxu0 0
      %3843 = vmatprep.subr.bf16.mxu0 0
      %3844 = vmatpush1.bf16.msra.mxu0 0
      %3845 = vmatprep.subr.bf16.mxu0 0
      %3846 = vmatpush1.bf16.msra.mxu0 0
      %3847 = vmatprep.subr.bf16.mxu0 0
      %3848 = vmatpush1.bf16.msra.mxu0 0
      %3849 = vmatprep.subr.bf16.mxu0 0
      %3850 = vmatpush1.bf16.msra.mxu0 0
      %3851 = vmatprep.subr.bf16.mxu0 0
      %3852 = vmatpush1.bf16.msra.mxu0 0
      %3853 = vmatprep.subr.bf16.mxu0 0
      %3854 = vmatpush1.bf16.msra.mxu0 0
      %3855 = vmatprep.subr.bf16.mxu0 0
      %3856 = vmatpush1.bf16.msra.mxu0 0
      %3857 = vmatprep.subr.bf16.mxu0 0
      %3858 = vmatpush1.bf16.msra.mxu0 0
      %3859 = vmatprep.mubr.bf16.mxu0 0
      %3860 = vmatmul.mubr.bf16.gmra.mrb[0].mxu0 %v3813
      %v3861 = vpop.f32.mrb[0].mxu0
      %v3862 = vadd.f32 0.0, %v3861
      %v3863 = vpop.f32.mrb[0].mxu0
      %v3864 = vpop.f32.mrb[0].mxu0
      %v3865 = vadd.f32 0.0, %v3864
      %v3866 = vpop.f32.mrb[0].mxu0
      %3867 = vmatprep.mubr.bf16.mxu0 0
      %3868 = vmatmul.mubr.bf16.gmra.mrb[0].mxu0 %v3816
      %v3869 = vpop.f32.mrb[0].mxu0
      %v3870 = vadd.f32 0.0, %v3869
      %v3871 = vpop.f32.mrb[0].mxu0
      %v3872 = vpop.f32.mrb[0].mxu0
      %v3873 = vadd.f32 0.0, %v3872
      %v3874 = vpop.f32.mrb[0].mxu0
      %3875 = vmatprep.mubr.bf16.mxu0 0
      %3876 = vmatmul.mubr.bf16.gmra.mrb[0].mxu0 %v3819
      %v3877 = vpop.f32.mrb[0].mxu0
      %v3878 = vadd.f32 0.0, %v3877
      %v3879 = vpop.f32.mrb[0].mxu0
      %v3880 = vpop.f32.mrb[0].mxu0
      %v3881 = vadd.f32 0.0, %v3880
      %v3882 = vpop.f32.mrb[0].mxu0
      %3883 = vmatprep.mubr.bf16.mxu0 0
      %3884 = vmatmul.mubr.bf16.gmra.mrb[0].mxu0 %v3822
      %v3885 = vpop.f32.mrb[0].mxu0
      %v3886 = vadd.f32 0.0, %v3885
      %v3887 = vpop.f32.mrb[0].mxu0
      %v3888 = vpop.f32.mrb[0].mxu0
      %v3889 = vadd.f32 0.0, %v3888
      %v3890 = vpop.f32.mrb[0].mxu0
      %3891 = vdwg.mxu0
      %v3892 = vadd.f32 %v3734, %v3862
      %v3893 = vadd.f32 %v3735, %v3865
      %v3894 = vadd.f32 %v3736, %v3870
      %v3895 = vadd.f32 %v3737, %v3873
      %v3896 = vadd.f32 %v3738, %v3878
      %v3897 = vadd.f32 %v3739, %v3881
      %v3898 = vadd.f32 %v3740, %v3886
      %v3899 = vadd.f32 %v3741, %v3889
      %s3900 = scalar_lea.vmem %s359, 8
      %v3901 = vld [vmem:[%s3900] sm:$0xf]
      %v3902 = vld [vmem:[%s3900 + $0x8] sm:$0xf]
      %v3903 = vld [vmem:[%s3900 + $0x10] sm:$0xf]
      %v3904 = vld [vmem:[%s3900 + $0x18] sm:$0xf]
      %v3905 = vld [vmem:[%s3900 + $0x20] sm:$0xf]
      %v3906 = vld [vmem:[%s3900 + $0x28] sm:$0xf]
      %v3907 = vld [vmem:[%s3900 + $0x30] sm:$0xf]
      %v3908 = vld [vmem:[%s3900 + $0x38] sm:$0xf]
      %s3909 = scalar_lea.vmem %s3, 42
      %v3910 = vld [vmem:[%s3909] sm:$0x3]
      %v3919 = vunpack.c.l.b16 %v3901
      %v3920 = vunpack.c.l.b16 %v3902
      %v3921 = vunpack.c.l.b16 %v3903
      %v3922 = vunpack.c.l.b16 %v3904
      %v3923 = vunpack.c.l.b16 %v3905
      %v3924 = vunpack.c.l.b16 %v3906
      %v3925 = vunpack.c.l.b16 %v3907
      %v3926 = vunpack.c.l.b16 %v3908
      %v3927 = vpack.c.b16 %v3920, %v3919
      %v3928 = vpack.c.b16 %v3922, %v3921
      %v3929 = vpack.c.b16 %v3924, %v3923
      %v3930 = vpack.c.b16 %v3926, %v3925
      %v3932 = vsel %vm517, %v3927, 0
      %v3935 = vsel %vm517, %v3928, 0
      %v3938 = vsel %vm517, %v3929, 0
      %v3941 = vsel %vm517, %v3930, 0
      %v3944 = vsel %vm530, %v3910, 0
      %3946 = vmatprep.subr.bf16.mxu0 0
      %3947 = vmatpush1.bf16.msra.mxu0 %v3944
      %3948 = vmatprep.subr.bf16.mxu0 0
      %3949 = vmatpush1.bf16.msra.mxu0 0
      %3950 = vmatprep.subr.bf16.mxu0 0
      %3951 = vmatpush1.bf16.msra.mxu0 0
      %3952 = vmatprep.subr.bf16.mxu0 0
      %3953 = vmatpush1.bf16.msra.mxu0 0
      %3954 = vmatprep.subr.bf16.mxu0 0
      %3955 = vmatpush1.bf16.msra.mxu0 0
      %3956 = vmatprep.subr.bf16.mxu0 0
      %3957 = vmatpush1.bf16.msra.mxu0 0
      %3958 = vmatprep.subr.bf16.mxu0 0
      %3959 = vmatpush1.bf16.msra.mxu0 0
      %3960 = vmatprep.subr.bf16.mxu0 0
      %3961 = vmatpush1.bf16.msra.mxu0 0
      %3962 = vmatprep.subr.bf16.mxu0 0
      %3963 = vmatpush1.bf16.msra.mxu0 0
      %3964 = vmatprep.subr.bf16.mxu0 0
      %3965 = vmatpush1.bf16.msra.mxu0 0
      %3966 = vmatprep.subr.bf16.mxu0 0
      %3967 = vmatpush1.bf16.msra.mxu0 0
      %3968 = vmatprep.subr.bf16.mxu0 0
      %3969 = vmatpush1.bf16.msra.mxu0 0
      %3970 = vmatprep.subr.bf16.mxu0 0
      %3971 = vmatpush1.bf16.msra.mxu0 0
      %3972 = vmatprep.subr.bf16.mxu0 0
      %3973 = vmatpush1.bf16.msra.mxu0 0
      %3974 = vmatprep.subr.bf16.mxu0 0
      %3975 = vmatpush1.bf16.msra.mxu0 0
      %3976 = vmatprep.subr.bf16.mxu0 0
      %3977 = vmatpush1.bf16.msra.mxu0 0
      %3978 = vmatprep.mubr.bf16.mxu0 0
      %3979 = vmatmul.mubr.bf16.gmra.mrb[0].mxu0 %v3932
      %v3980 = vpop.f32.mrb[0].mxu0
      %v3981 = vadd.f32 0.0, %v3980
      %v3982 = vpop.f32.mrb[0].mxu0
      %v3983 = vpop.f32.mrb[0].mxu0
      %v3984 = vadd.f32 0.0, %v3983
      %v3985 = vpop.f32.mrb[0].mxu0
      %3986 = vmatprep.mubr.bf16.mxu0 0
      %3987 = vmatmul.mubr.bf16.gmra.mrb[0].mxu0 %v3935
      %v3988 = vpop.f32.mrb[0].mxu0
      %v3989 = vadd.f32 0.0, %v3988
      %v3990 = vpop.f32.mrb[0].mxu0
      %v3991 = vpop.f32.mrb[0].mxu0
      %v3992 = vadd.f32 0.0, %v3991
      %v3993 = vpop.f32.mrb[0].mxu0
      %3994 = vmatprep.mubr.bf16.mxu0 0
      %3995 = vmatmul.mubr.bf16.gmra.mrb[0].mxu0 %v3938
      %v3996 = vpop.f32.mrb[0].mxu0
      %v3997 = vadd.f32 0.0, %v3996
      %v3998 = vpop.f32.mrb[0].mxu0
      %v3999 = vpop.f32.mrb[0].mxu0
      %v4000 = vadd.f32 0.0, %v3999
      %v4001 = vpop.f32.mrb[0].mxu0
      %4002 = vmatprep.mubr.bf16.mxu0 0
      %4003 = vmatmul.mubr.bf16.gmra.mrb[0].mxu0 %v3941
      %v4004 = vpop.f32.mrb[0].mxu0
      %v4005 = vadd.f32 0.0, %v4004
      %v4006 = vpop.f32.mrb[0].mxu0
      %v4007 = vpop.f32.mrb[0].mxu0
      %v4008 = vadd.f32 0.0, %v4007
      %v4009 = vpop.f32.mrb[0].mxu0
      %4010 = vdwg.mxu0
      %v4011 = vadd.f32 %v3892, %v3981
      %v4012 = vadd.f32 %v3893, %v3984
      %v4013 = vadd.f32 %v3894, %v3989
      %v4014 = vadd.f32 %v3895, %v3992
      %v4015 = vadd.f32 %v3896, %v3997
      %v4016 = vadd.f32 %v3897, %v4000
      %v4017 = vadd.f32 %v3898, %v4005
      %v4018 = vadd.f32 %v3899, %v4008
      %v4019 = vld [vmem:[%s3900] sm:$0xf]
      %v4020 = vld [vmem:[%s3900 + $0x4] sm:$0x1]
      %v4021 = vld [vmem:[%s3900 + $0x8] sm:$0xf]
      %v4022 = vld [vmem:[%s3900 + $0xc] sm:$0x1]
      %v4023 = vld [vmem:[%s3900 + $0x10] sm:$0xf]
      %v4024 = vld [vmem:[%s3900 + $0x14] sm:$0x1]
      %v4025 = vld [vmem:[%s3900 + $0x18] sm:$0xf]
      %v4026 = vld [vmem:[%s3900 + $0x1c] sm:$0x1]
      %v4027 = vld [vmem:[%s3900 + $0x20] sm:$0xf]
      %v4028 = vld [vmem:[%s3900 + $0x24] sm:$0x1]
      %v4029 = vld [vmem:[%s3900 + $0x28] sm:$0xf]
      %v4030 = vld [vmem:[%s3900 + $0x2c] sm:$0x1]
      %v4031 = vld [vmem:[%s3900 + $0x30] sm:$0xf]
      %v4032 = vld [vmem:[%s3900 + $0x34] sm:$0x1]
      %v4033 = vld [vmem:[%s3900 + $0x38] sm:$0xf]
      %v4034 = vld [vmem:[%s3900 + $0x3c] sm:$0x1]
      %v4036 = vshrl.u32 %v4019, 16
      %v4038 = vrot.slane %v4036, 4
      %v4039 = vshll.u32 %v4019, 16
      %v4041 = vrot.slane %v4039, 5
      %v4042 = vor.u32 %v4038, %v4041
      %v4043 = vrot.slane %v4042, 4
      %v4045 = vshll.u32 %v4020, 16
      %v4047 = vrot.slane %v4045, 5
      %v4048 = vsel %vm390, %v4043, %v4047
      %v4050 = vshrl.u32 %v4021, 16
      %v4052 = vrot.slane %v4050, 4
      %v4053 = vshll.u32 %v4021, 16
      %v4055 = vrot.slane %v4053, 5
      %v4056 = vor.u32 %v4052, %v4055
      %v4057 = vrot.slane %v4056, 4
      %v4059 = vshll.u32 %v4022, 16
      %v4061 = vrot.slane %v4059, 5
      %v4062 = vsel %vm390, %v4057, %v4061
      %v4064 = vshrl.u32 %v4023, 16
      %v4066 = vrot.slane %v4064, 4
      %v4067 = vshll.u32 %v4023, 16
      %v4069 = vrot.slane %v4067, 5
      %v4070 = vor.u32 %v4066, %v4069
      %v4071 = vrot.slane %v4070, 4
      %v4073 = vshll.u32 %v4024, 16
      %v4075 = vrot.slane %v4073, 5
      %v4076 = vsel %vm390, %v4071, %v4075
      %v4078 = vshrl.u32 %v4025, 16
      %v4080 = vrot.slane %v4078, 4
      %v4081 = vshll.u32 %v4025, 16
      %v4083 = vrot.slane %v4081, 5
      %v4084 = vor.u32 %v4080, %v4083
      %v4085 = vrot.slane %v4084, 4
      %v4087 = vshll.u32 %v4026, 16
      %v4089 = vrot.slane %v4087, 5
      %v4090 = vsel %vm390, %v4085, %v4089
      %v4092 = vshrl.u32 %v4027, 16
      %v4094 = vrot.slane %v4092, 4
      %v4095 = vshll.u32 %v4027, 16
      %v4097 = vrot.slane %v4095, 5
      %v4098 = vor.u32 %v4094, %v4097
      %v4099 = vrot.slane %v4098, 4
      %v4101 = vshll.u32 %v4028, 16
      %v4103 = vrot.slane %v4101, 5
      %v4104 = vsel %vm390, %v4099, %v4103
      %v4106 = vshrl.u32 %v4029, 16
      %v4108 = vrot.slane %v4106, 4
      %v4109 = vshll.u32 %v4029, 16
      %v4111 = vrot.slane %v4109, 5
      %v4112 = vor.u32 %v4108, %v4111
      %v4113 = vrot.slane %v4112, 4
      %v4115 = vshll.u32 %v4030, 16
      %v4117 = vrot.slane %v4115, 5
      %v4118 = vsel %vm390, %v4113, %v4117
      %v4120 = vshrl.u32 %v4031, 16
      %v4122 = vrot.slane %v4120, 4
      %v4123 = vshll.u32 %v4031, 16
      %v4125 = vrot.slane %v4123, 5
      %v4126 = vor.u32 %v4122, %v4125
      %v4127 = vrot.slane %v4126, 4
      %v4129 = vshll.u32 %v4032, 16
      %v4131 = vrot.slane %v4129, 5
      %v4132 = vsel %vm390, %v4127, %v4131
      %v4134 = vshrl.u32 %v4033, 16
      %v4136 = vrot.slane %v4134, 4
      %v4137 = vshll.u32 %v4033, 16
      %v4139 = vrot.slane %v4137, 5
      %v4140 = vor.u32 %v4136, %v4139
      %v4141 = vrot.slane %v4140, 4
      %v4143 = vshll.u32 %v4034, 16
      %v4145 = vrot.slane %v4143, 5
      %v4146 = vsel %vm390, %v4141, %v4145
      %s4147 = scalar_lea.vmem %s3, 44
      %v4148 = vld [vmem:[%s4147] sm:$0x3]
      %v4149 = vunpack.c.l.b16 %v4048
      %v4150 = vunpack.c.l.b16 %v4062
      %v4151 = vunpack.c.l.b16 %v4076
      %v4152 = vunpack.c.l.b16 %v4090
      %v4153 = vunpack.c.l.b16 %v4104
      %v4154 = vunpack.c.l.b16 %v4118
      %v4155 = vunpack.c.l.b16 %v4132
      %v4156 = vunpack.c.l.b16 %v4146
      %v4157 = vpack.c.b16 %v4150, %v4149
      %v4158 = vpack.c.b16 %v4152, %v4151
      %v4159 = vpack.c.b16 %v4154, %v4153
      %v4160 = vpack.c.b16 %v4156, %v4155
      %v4162 = vsel %vm517, %v4157, 0
      %v4165 = vsel %vm517, %v4158, 0
      %v4168 = vsel %vm517, %v4159, 0
      %v4171 = vsel %vm517, %v4160, 0
      %v4174 = vsel %vm530, %v4148, 0
      %4176 = vmatprep.subr.bf16.mxu0 0
      %4177 = vmatpush1.bf16.msra.mxu0 %v4174
      %4178 = vmatprep.subr.bf16.mxu0 0
      %4179 = vmatpush1.bf16.msra.mxu0 0
      %4180 = vmatprep.subr.bf16.mxu0 0
      %4181 = vmatpush1.bf16.msra.mxu0 0
      %4182 = vmatprep.subr.bf16.mxu0 0
      %4183 = vmatpush1.bf16.msra.mxu0 0
      %4184 = vmatprep.subr.bf16.mxu0 0
      %4185 = vmatpush1.bf16.msra.mxu0 0
      %4186 = vmatprep.subr.bf16.mxu0 0
      %4187 = vmatpush1.bf16.msra.mxu0 0
      %4188 = vmatprep.subr.bf16.mxu0 0
      %4189 = vmatpush1.bf16.msra.mxu0 0
      %4190 = vmatprep.subr.bf16.mxu0 0
      %4191 = vmatpush1.bf16.msra.mxu0 0
      %4192 = vmatprep.subr.bf16.mxu0 0
      %4193 = vmatpush1.bf16.msra.mxu0 0
      %4194 = vmatprep.subr.bf16.mxu0 0
      %4195 = vmatpush1.bf16.msra.mxu0 0
      %4196 = vmatprep.subr.bf16.mxu0 0
      %4197 = vmatpush1.bf16.msra.mxu0 0
      %4198 = vmatprep.subr.bf16.mxu0 0
      %4199 = vmatpush1.bf16.msra.mxu0 0
      %4200 = vmatprep.subr.bf16.mxu0 0
      %4201 = vmatpush1.bf16.msra.mxu0 0
      %4202 = vmatprep.subr.bf16.mxu0 0
      %4203 = vmatpush1.bf16.msra.mxu0 0
      %4204 = vmatprep.subr.bf16.mxu0 0
      %4205 = vmatpush1.bf16.msra.mxu0 0
      %4206 = vmatprep.subr.bf16.mxu0 0
      %4207 = vmatpush1.bf16.msra.mxu0 0
      %4208 = vmatprep.mubr.bf16.mxu0 0
      %4209 = vmatmul.mubr.bf16.gmra.mrb[0].mxu0 %v4162
      %v4210 = vpop.f32.mrb[0].mxu0
      %v4211 = vadd.f32 0.0, %v4210
      %v4212 = vpop.f32.mrb[0].mxu0
      %v4213 = vpop.f32.mrb[0].mxu0
      %v4214 = vadd.f32 0.0, %v4213
      %v4215 = vpop.f32.mrb[0].mxu0
      %4216 = vmatprep.mubr.bf16.mxu0 0
      %4217 = vmatmul.mubr.bf16.gmra.mrb[0].mxu0 %v4165
      %v4218 = vpop.f32.mrb[0].mxu0
      %v4219 = vadd.f32 0.0, %v4218
      %v4220 = vpop.f32.mrb[0].mxu0
      %v4221 = vpop.f32.mrb[0].mxu0
      %v4222 = vadd.f32 0.0, %v4221
      %v4223 = vpop.f32.mrb[0].mxu0
      %4224 = vmatprep.mubr.bf16.mxu0 0
      %4225 = vmatmul.mubr.bf16.gmra.mrb[0].mxu0 %v4168
      %v4226 = vpop.f32.mrb[0].mxu0
      %v4227 = vadd.f32 0.0, %v4226
      %v4228 = vpop.f32.mrb[0].mxu0
      %v4229 = vpop.f32.mrb[0].mxu0
      %v4230 = vadd.f32 0.0, %v4229
      %v4231 = vpop.f32.mrb[0].mxu0
      %4232 = vmatprep.mubr.bf16.mxu0 0
      %4233 = vmatmul.mubr.bf16.gmra.mrb[0].mxu0 %v4171
      %v4234 = vpop.f32.mrb[0].mxu0
      %v4235 = vadd.f32 0.0, %v4234
      %v4236 = vpop.f32.mrb[0].mxu0
      %v4237 = vpop.f32.mrb[0].mxu0
      %v4238 = vadd.f32 0.0, %v4237
      %v4239 = vpop.f32.mrb[0].mxu0
      %4240 = vdwg.mxu0
      %v4241 = vadd.f32 %v4011, %v4211
      %v4242 = vadd.f32 %v4012, %v4214
      %v4243 = vadd.f32 %v4013, %v4219
      %v4244 = vadd.f32 %v4014, %v4222
      %v4245 = vadd.f32 %v4015, %v4227
      %v4246 = vadd.f32 %v4016, %v4230
      %v4247 = vadd.f32 %v4017, %v4235
      %v4248 = vadd.f32 %v4018, %v4238
      %v4249 = vld [vmem:[%s3900] sm:$0xe]
      %v4250 = vld [vmem:[%s3900 + $0x8] sm:$0xe]
      %v4251 = vld [vmem:[%s3900 + $0x10] sm:$0xe]
      %v4252 = vld [vmem:[%s3900 + $0x18] sm:$0xe]
      %v4253 = vld [vmem:[%s3900 + $0x20] sm:$0xe]
      %v4254 = vld [vmem:[%s3900 + $0x28] sm:$0xe]
      %v4255 = vld [vmem:[%s3900 + $0x30] sm:$0xe]
      %v4256 = vld [vmem:[%s3900 + $0x38] sm:$0xe]
      %v4273 = vrot.slane %v4249, 5
      %v4274 = vrot.slane %v4273, 4
      %v4275 = vrot.slane %v4020, 5
      %v4276 = vsel %vm725, %v4274, %v4275
      %v4277 = vrot.slane %v4250, 5
      %v4278 = vrot.slane %v4277, 4
      %v4279 = vrot.slane %v4022, 5
      %v4280 = vsel %vm725, %v4278, %v4279
      %v4281 = vrot.slane %v4251, 5
      %v4282 = vrot.slane %v4281, 4
      %v4283 = vrot.slane %v4024, 5
      %v4284 = vsel %vm725, %v4282, %v4283
      %v4285 = vrot.slane %v4252, 5
      %v4286 = vrot.slane %v4285, 4
      %v4287 = vrot.slane %v4026, 5
      %v4288 = vsel %vm725, %v4286, %v4287
      %v4289 = vrot.slane %v4253, 5
      %v4290 = vrot.slane %v4289, 4
      %v4291 = vrot.slane %v4028, 5
      %v4292 = vsel %vm725, %v4290, %v4291
      %v4293 = vrot.slane %v4254, 5
      %v4294 = vrot.slane %v4293, 4
      %v4295 = vrot.slane %v4030, 5
      %v4296 = vsel %vm725, %v4294, %v4295
      %v4297 = vrot.slane %v4255, 5
      %v4298 = vrot.slane %v4297, 4
      %v4299 = vrot.slane %v4032, 5
      %v4300 = vsel %vm725, %v4298, %v4299
      %v4301 = vrot.slane %v4256, 5
      %v4302 = vrot.slane %v4301, 4
      %v4303 = vrot.slane %v4034, 5
      %v4304 = vsel %vm725, %v4302, %v4303
      %s4305 = scalar_lea.vmem %s3, 46
      %v4306 = vld [vmem:[%s4305] sm:$0x3]
      %v4307 = vunpack.c.l.b16 %v4276
      %v4308 = vunpack.c.l.b16 %v4280
      %v4309 = vunpack.c.l.b16 %v4284
      %v4310 = vunpack.c.l.b16 %v4288
      %v4311 = vunpack.c.l.b16 %v4292
      %v4312 = vunpack.c.l.b16 %v4296
      %v4313 = vunpack.c.l.b16 %v4300
      %v4314 = vunpack.c.l.b16 %v4304
      %v4315 = vpack.c.b16 %v4308, %v4307
      %v4316 = vpack.c.b16 %v4310, %v4309
      %v4317 = vpack.c.b16 %v4312, %v4311
      %v4318 = vpack.c.b16 %v4314, %v4313
      %v4320 = vsel %vm517, %v4315, 0
      %v4323 = vsel %vm517, %v4316, 0
      %v4326 = vsel %vm517, %v4317, 0
      %v4329 = vsel %vm517, %v4318, 0
      %v4332 = vsel %vm530, %v4306, 0
      %4334 = vmatprep.subr.bf16.mxu0 0
      %4335 = vmatpush1.bf16.msra.mxu0 %v4332
      %4336 = vmatprep.subr.bf16.mxu0 0
      %4337 = vmatpush1.bf16.msra.mxu0 0
      %4338 = vmatprep.subr.bf16.mxu0 0
      %4339 = vmatpush1.bf16.msra.mxu0 0
      %4340 = vmatprep.subr.bf16.mxu0 0
      %4341 = vmatpush1.bf16.msra.mxu0 0
      %4342 = vmatprep.subr.bf16.mxu0 0
      %4343 = vmatpush1.bf16.msra.mxu0 0
      %4344 = vmatprep.subr.bf16.mxu0 0
      %4345 = vmatpush1.bf16.msra.mxu0 0
      %4346 = vmatprep.subr.bf16.mxu0 0
      %4347 = vmatpush1.bf16.msra.mxu0 0
      %4348 = vmatprep.subr.bf16.mxu0 0
      %4349 = vmatpush1.bf16.msra.mxu0 0
      %4350 = vmatprep.subr.bf16.mxu0 0
      %4351 = vmatpush1.bf16.msra.mxu0 0
      %4352 = vmatprep.subr.bf16.mxu0 0
      %4353 = vmatpush1.bf16.msra.mxu0 0
      %4354 = vmatprep.subr.bf16.mxu0 0
      %4355 = vmatpush1.bf16.msra.mxu0 0
      %4356 = vmatprep.subr.bf16.mxu0 0
      %4357 = vmatpush1.bf16.msra.mxu0 0
      %4358 = vmatprep.subr.bf16.mxu0 0
      %4359 = vmatpush1.bf16.msra.mxu0 0
      %4360 = vmatprep.subr.bf16.mxu0 0
      %4361 = vmatpush1.bf16.msra.mxu0 0
      %4362 = vmatprep.subr.bf16.mxu0 0
      %4363 = vmatpush1.bf16.msra.mxu0 0
      %4364 = vmatprep.subr.bf16.mxu0 0
      %4365 = vmatpush1.bf16.msra.mxu0 0
      %4366 = vmatprep.mubr.bf16.mxu0 0
      %4367 = vmatmul.mubr.bf16.gmra.mrb[0].mxu0 %v4320
      %v4368 = vpop.f32.mrb[0].mxu0
      %v4369 = vadd.f32 0.0, %v4368
      %v4370 = vpop.f32.mrb[0].mxu0
      %v4371 = vpop.f32.mrb[0].mxu0
      %v4372 = vadd.f32 0.0, %v4371
      %v4373 = vpop.f32.mrb[0].mxu0
      %4374 = vmatprep.mubr.bf16.mxu0 0
      %4375 = vmatmul.mubr.bf16.gmra.mrb[0].mxu0 %v4323
      %v4376 = vpop.f32.mrb[0].mxu0
      %v4377 = vadd.f32 0.0, %v4376
      %v4378 = vpop.f32.mrb[0].mxu0
      %v4379 = vpop.f32.mrb[0].mxu0
      %v4380 = vadd.f32 0.0, %v4379
      %v4381 = vpop.f32.mrb[0].mxu0
      %4382 = vmatprep.mubr.bf16.mxu0 0
      %4383 = vmatmul.mubr.bf16.gmra.mrb[0].mxu0 %v4326
      %v4384 = vpop.f32.mrb[0].mxu0
      %v4385 = vadd.f32 0.0, %v4384
      %v4386 = vpop.f32.mrb[0].mxu0
      %v4387 = vpop.f32.mrb[0].mxu0
      %v4388 = vadd.f32 0.0, %v4387
      %v4389 = vpop.f32.mrb[0].mxu0
      %4390 = vmatprep.mubr.bf16.mxu0 0
      %4391 = vmatmul.mubr.bf16.gmra.mrb[0].mxu0 %v4329
      %v4392 = vpop.f32.mrb[0].mxu0
      %v4393 = vadd.f32 0.0, %v4392
      %v4394 = vpop.f32.mrb[0].mxu0
      %v4395 = vpop.f32.mrb[0].mxu0
      %v4396 = vadd.f32 0.0, %v4395
      %v4397 = vpop.f32.mrb[0].mxu0
      %4398 = vdwg.mxu0
      %v4399 = vadd.f32 %v4241, %v4369
      %v4400 = vadd.f32 %v4242, %v4372
      %v4401 = vadd.f32 %v4243, %v4377
      %v4402 = vadd.f32 %v4244, %v4380
      %v4403 = vadd.f32 %v4245, %v4385
      %v4404 = vadd.f32 %v4246, %v4388
      %v4405 = vadd.f32 %v4247, %v4393
      %v4406 = vadd.f32 %v4248, %v4396
      %s4407 = scalar_lea.vmem %s359, 16
      %v4408 = vld [vmem:[%s4407] sm:$0xf]
      %v4409 = vld [vmem:[%s4407 + $0x8] sm:$0xf]
      %v4410 = vld [vmem:[%s4407 + $0x10] sm:$0xf]
      %v4411 = vld [vmem:[%s4407 + $0x18] sm:$0xf]
      %v4412 = vld [vmem:[%s4407 + $0x20] sm:$0xf]
      %v4413 = vld [vmem:[%s4407 + $0x28] sm:$0xf]
      %v4414 = vld [vmem:[%s4407 + $0x30] sm:$0xf]
      %v4415 = vld [vmem:[%s4407 + $0x38] sm:$0xf]
      %s4416 = scalar_lea.vmem %s3, 48
      %v4417 = vld [vmem:[%s4416] sm:$0x3]
      %v4426 = vunpack.c.l.b16 %v4408
      %v4427 = vunpack.c.l.b16 %v4409
      %v4428 = vunpack.c.l.b16 %v4410
      %v4429 = vunpack.c.l.b16 %v4411
      %v4430 = vunpack.c.l.b16 %v4412
      %v4431 = vunpack.c.l.b16 %v4413
      %v4432 = vunpack.c.l.b16 %v4414
      %v4433 = vunpack.c.l.b16 %v4415
      %v4434 = vpack.c.b16 %v4427, %v4426
      %v4435 = vpack.c.b16 %v4429, %v4428
      %v4436 = vpack.c.b16 %v4431, %v4430
      %v4437 = vpack.c.b16 %v4433, %v4432
      %v4439 = vsel %vm517, %v4434, 0
      %v4442 = vsel %vm517, %v4435, 0
      %v4445 = vsel %vm517, %v4436, 0
      %v4448 = vsel %vm517, %v4437, 0
      %v4451 = vsel %vm530, %v4417, 0
      %4453 = vmatprep.subr.bf16.mxu0 0
      %4454 = vmatpush1.bf16.msra.mxu0 %v4451
      %4455 = vmatprep.subr.bf16.mxu0 0
      %4456 = vmatpush1.bf16.msra.mxu0 0
      %4457 = vmatprep.subr.bf16.mxu0 0
      %4458 = vmatpush1.bf16.msra.mxu0 0
      %4459 = vmatprep.subr.bf16.mxu0 0
      %4460 = vmatpush1.bf16.msra.mxu0 0
      %4461 = vmatprep.subr.bf16.mxu0 0
      %4462 = vmatpush1.bf16.msra.mxu0 0
      %4463 = vmatprep.subr.bf16.mxu0 0
      %4464 = vmatpush1.bf16.msra.mxu0 0
      %4465 = vmatprep.subr.bf16.mxu0 0
      %4466 = vmatpush1.bf16.msra.mxu0 0
      %4467 = vmatprep.subr.bf16.mxu0 0
      %4468 = vmatpush1.bf16.msra.mxu0 0
      %4469 = vmatprep.subr.bf16.mxu0 0
      %4470 = vmatpush1.bf16.msra.mxu0 0
      %4471 = vmatprep.subr.bf16.mxu0 0
      %4472 = vmatpush1.bf16.msra.mxu0 0
      %4473 = vmatprep.subr.bf16.mxu0 0
      %4474 = vmatpush1.bf16.msra.mxu0 0
      %4475 = vmatprep.subr.bf16.mxu0 0
      %4476 = vmatpush1.bf16.msra.mxu0 0
      %4477 = vmatprep.subr.bf16.mxu0 0
      %4478 = vmatpush1.bf16.msra.mxu0 0
      %4479 = vmatprep.subr.bf16.mxu0 0
      %4480 = vmatpush1.bf16.msra.mxu0 0
      %4481 = vmatprep.subr.bf16.mxu0 0
      %4482 = vmatpush1.bf16.msra.mxu0 0
      %4483 = vmatprep.subr.bf16.mxu0 0
      %4484 = vmatpush1.bf16.msra.mxu0 0
      %4485 = vmatprep.mubr.bf16.mxu0 0
      %4486 = vmatmul.mubr.bf16.gmra.mrb[0].mxu0 %v4439
      %v4487 = vpop.f32.mrb[0].mxu0
      %v4488 = vadd.f32 0.0, %v4487
      %v4489 = vpop.f32.mrb[0].mxu0
      %v4490 = vpop.f32.mrb[0].mxu0
      %v4491 = vadd.f32 0.0, %v4490
      %v4492 = vpop.f32.mrb[0].mxu0
      %4493 = vmatprep.mubr.bf16.mxu0 0
      %4494 = vmatmul.mubr.bf16.gmra.mrb[0].mxu0 %v4442
      %v4495 = vpop.f32.mrb[0].mxu0
      %v4496 = vadd.f32 0.0, %v4495
      %v4497 = vpop.f32.mrb[0].mxu0
      %v4498 = vpop.f32.mrb[0].mxu0
      %v4499 = vadd.f32 0.0, %v4498
      %v4500 = vpop.f32.mrb[0].mxu0
      %4501 = vmatprep.mubr.bf16.mxu0 0
      %4502 = vmatmul.mubr.bf16.gmra.mrb[0].mxu0 %v4445
      %v4503 = vpop.f32.mrb[0].mxu0
      %v4504 = vadd.f32 0.0, %v4503
      %v4505 = vpop.f32.mrb[0].mxu0
      %v4506 = vpop.f32.mrb[0].mxu0
      %v4507 = vadd.f32 0.0, %v4506
      %v4508 = vpop.f32.mrb[0].mxu0
      %4509 = vmatprep.mubr.bf16.mxu0 0
      %4510 = vmatmul.mubr.bf16.gmra.mrb[0].mxu0 %v4448
      %v4511 = vpop.f32.mrb[0].mxu0
      %v4512 = vadd.f32 0.0, %v4511
      %v4513 = vpop.f32.mrb[0].mxu0
      %v4514 = vpop.f32.mrb[0].mxu0
      %v4515 = vadd.f32 0.0, %v4514
      %v4516 = vpop.f32.mrb[0].mxu0
      %4517 = vdwg.mxu0
      %v4518 = vadd.f32 %v4399, %v4488
      %v4519 = vadd.f32 %v4400, %v4491
      %v4520 = vadd.f32 %v4401, %v4496
      %v4521 = vadd.f32 %v4402, %v4499
      %v4522 = vadd.f32 %v4403, %v4504
      %v4523 = vadd.f32 %v4404, %v4507
      %v4524 = vadd.f32 %v4405, %v4512
      %v4525 = vadd.f32 %v4406, %v4515
      %v4526 = vld [vmem:[%s4407] sm:$0xf]
      %v4527 = vld [vmem:[%s4407 + $0x4] sm:$0x1]
      %v4528 = vld [vmem:[%s4407 + $0x8] sm:$0xf]
      %v4529 = vld [vmem:[%s4407 + $0xc] sm:$0x1]
      %v4530 = vld [vmem:[%s4407 + $0x10] sm:$0xf]
      %v4531 = vld [vmem:[%s4407 + $0x14] sm:$0x1]
      %v4532 = vld [vmem:[%s4407 + $0x18] sm:$0xf]
      %v4533 = vld [vmem:[%s4407 + $0x1c] sm:$0x1]
      %v4534 = vld [vmem:[%s4407 + $0x20] sm:$0xf]
      %v4535 = vld [vmem:[%s4407 + $0x24] sm:$0x1]
      %v4536 = vld [vmem:[%s4407 + $0x28] sm:$0xf]
      %v4537 = vld [vmem:[%s4407 + $0x2c] sm:$0x1]
      %v4538 = vld [vmem:[%s4407 + $0x30] sm:$0xf]
      %v4539 = vld [vmem:[%s4407 + $0x34] sm:$0x1]
      %v4540 = vld [vmem:[%s4407 + $0x38] sm:$0xf]
      %v4541 = vld [vmem:[%s4407 + $0x3c] sm:$0x1]
      %v4543 = vshrl.u32 %v4526, 16
      %v4545 = vrot.slane %v4543, 4
      %v4546 = vshll.u32 %v4526, 16
      %v4548 = vrot.slane %v4546, 5
      %v4549 = vor.u32 %v4545, %v4548
      %v4550 = vrot.slane %v4549, 4
      %v4552 = vshll.u32 %v4527, 16
      %v4554 = vrot.slane %v4552, 5
      %v4555 = vsel %vm390, %v4550, %v4554
      %v4557 = vshrl.u32 %v4528, 16
      %v4559 = vrot.slane %v4557, 4
      %v4560 = vshll.u32 %v4528, 16
      %v4562 = vrot.slane %v4560, 5
      %v4563 = vor.u32 %v4559, %v4562
      %v4564 = vrot.slane %v4563, 4
      %v4566 = vshll.u32 %v4529, 16
      %v4568 = vrot.slane %v4566, 5
      %v4569 = vsel %vm390, %v4564, %v4568
      %v4571 = vshrl.u32 %v4530, 16
      %v4573 = vrot.slane %v4571, 4
      %v4574 = vshll.u32 %v4530, 16
      %v4576 = vrot.slane %v4574, 5
      %v4577 = vor.u32 %v4573, %v4576
      %v4578 = vrot.slane %v4577, 4
      %v4580 = vshll.u32 %v4531, 16
      %v4582 = vrot.slane %v4580, 5
      %v4583 = vsel %vm390, %v4578, %v4582
      %v4585 = vshrl.u32 %v4532, 16
      %v4587 = vrot.slane %v4585, 4
      %v4588 = vshll.u32 %v4532, 16
      %v4590 = vrot.slane %v4588, 5
      %v4591 = vor.u32 %v4587, %v4590
      %v4592 = vrot.slane %v4591, 4
      %v4594 = vshll.u32 %v4533, 16
      %v4596 = vrot.slane %v4594, 5
      %v4597 = vsel %vm390, %v4592, %v4596
      %v4599 = vshrl.u32 %v4534, 16
      %v4601 = vrot.slane %v4599, 4
      %v4602 = vshll.u32 %v4534, 16
      %v4604 = vrot.slane %v4602, 5
      %v4605 = vor.u32 %v4601, %v4604
      %v4606 = vrot.slane %v4605, 4
      %v4608 = vshll.u32 %v4535, 16
      %v4610 = vrot.slane %v4608, 5
      %v4611 = vsel %vm390, %v4606, %v4610
      %v4613 = vshrl.u32 %v4536, 16
      %v4615 = vrot.slane %v4613, 4
      %v4616 = vshll.u32 %v4536, 16
      %v4618 = vrot.slane %v4616, 5
      %v4619 = vor.u32 %v4615, %v4618
      %v4620 = vrot.slane %v4619, 4
      %v4622 = vshll.u32 %v4537, 16
      %v4624 = vrot.slane %v4622, 5
      %v4625 = vsel %vm390, %v4620, %v4624
      %v4627 = vshrl.u32 %v4538, 16
      %v4629 = vrot.slane %v4627, 4
      %v4630 = vshll.u32 %v4538, 16
      %v4632 = vrot.slane %v4630, 5
      %v4633 = vor.u32 %v4629, %v4632
      %v4634 = vrot.slane %v4633, 4
      %v4636 = vshll.u32 %v4539, 16
      %v4638 = vrot.slane %v4636, 5
      %v4639 = vsel %vm390, %v4634, %v4638
      %v4641 = vshrl.u32 %v4540, 16
      %v4643 = vrot.slane %v4641, 4
      %v4644 = vshll.u32 %v4540, 16
      %v4646 = vrot.slane %v4644, 5
      %v4647 = vor.u32 %v4643, %v4646
      %v4648 = vrot.slane %v4647, 4
      %v4650 = vshll.u32 %v4541, 16
      %v4652 = vrot.slane %v4650, 5
      %v4653 = vsel %vm390, %v4648, %v4652
      %s4654 = scalar_lea.vmem %s3, 50
      %v4655 = vld [vmem:[%s4654] sm:$0x3]
      %v4656 = vunpack.c.l.b16 %v4555
      %v4657 = vunpack.c.l.b16 %v4569
      %v4658 = vunpack.c.l.b16 %v4583
      %v4659 = vunpack.c.l.b16 %v4597
      %v4660 = vunpack.c.l.b16 %v4611
      %v4661 = vunpack.c.l.b16 %v4625
      %v4662 = vunpack.c.l.b16 %v4639
      %v4663 = vunpack.c.l.b16 %v4653
      %v4664 = vpack.c.b16 %v4657, %v4656
      %v4665 = vpack.c.b16 %v4659, %v4658
      %v4666 = vpack.c.b16 %v4661, %v4660
      %v4667 = vpack.c.b16 %v4663, %v4662
      %v4669 = vsel %vm517, %v4664, 0
      %v4672 = vsel %vm517, %v4665, 0
      %v4675 = vsel %vm517, %v4666, 0
      %v4678 = vsel %vm517, %v4667, 0
      %v4681 = vsel %vm530, %v4655, 0
      %4683 = vmatprep.subr.bf16.mxu0 0
      %4684 = vmatpush1.bf16.msra.mxu0 %v4681
      %4685 = vmatprep.subr.bf16.mxu0 0
      %4686 = vmatpush1.bf16.msra.mxu0 0
      %4687 = vmatprep.subr.bf16.mxu0 0
      %4688 = vmatpush1.bf16.msra.mxu0 0
      %4689 = vmatprep.subr.bf16.mxu0 0
      %4690 = vmatpush1.bf16.msra.mxu0 0
      %4691 = vmatprep.subr.bf16.mxu0 0
      %4692 = vmatpush1.bf16.msra.mxu0 0
      %4693 = vmatprep.subr.bf16.mxu0 0
      %4694 = vmatpush1.bf16.msra.mxu0 0
      %4695 = vmatprep.subr.bf16.mxu0 0
      %4696 = vmatpush1.bf16.msra.mxu0 0
      %4697 = vmatprep.subr.bf16.mxu0 0
      %4698 = vmatpush1.bf16.msra.mxu0 0
      %4699 = vmatprep.subr.bf16.mxu0 0
      %4700 = vmatpush1.bf16.msra.mxu0 0
      %4701 = vmatprep.subr.bf16.mxu0 0
      %4702 = vmatpush1.bf16.msra.mxu0 0
      %4703 = vmatprep.subr.bf16.mxu0 0
      %4704 = vmatpush1.bf16.msra.mxu0 0
      %4705 = vmatprep.subr.bf16.mxu0 0
      %4706 = vmatpush1.bf16.msra.mxu0 0
      %4707 = vmatprep.subr.bf16.mxu0 0
      %4708 = vmatpush1.bf16.msra.mxu0 0
      %4709 = vmatprep.subr.bf16.mxu0 0
      %4710 = vmatpush1.bf16.msra.mxu0 0
      %4711 = vmatprep.subr.bf16.mxu0 0
      %4712 = vmatpush1.bf16.msra.mxu0 0
      %4713 = vmatprep.subr.bf16.mxu0 0
      %4714 = vmatpush1.bf16.msra.mxu0 0
      %4715 = vmatprep.mubr.bf16.mxu0 0
      %4716 = vmatmul.mubr.bf16.gmra.mrb[0].mxu0 %v4669
      %v4717 = vpop.f32.mrb[0].mxu0
      %v4718 = vadd.f32 0.0, %v4717
      %v4719 = vpop.f32.mrb[0].mxu0
      %v4720 = vpop.f32.mrb[0].mxu0
      %v4721 = vadd.f32 0.0, %v4720
      %v4722 = vpop.f32.mrb[0].mxu0
      %4723 = vmatprep.mubr.bf16.mxu0 0
      %4724 = vmatmul.mubr.bf16.gmra.mrb[0].mxu0 %v4672
      %v4725 = vpop.f32.mrb[0].mxu0
      %v4726 = vadd.f32 0.0, %v4725
      %v4727 = vpop.f32.mrb[0].mxu0
      %v4728 = vpop.f32.mrb[0].mxu0
      %v4729 = vadd.f32 0.0, %v4728
      %v4730 = vpop.f32.mrb[0].mxu0
      %4731 = vmatprep.mubr.bf16.mxu0 0
      %4732 = vmatmul.mubr.bf16.gmra.mrb[0].mxu0 %v4675
      %v4733 = vpop.f32.mrb[0].mxu0
      %v4734 = vadd.f32 0.0, %v4733
      %v4735 = vpop.f32.mrb[0].mxu0
      %v4736 = vpop.f32.mrb[0].mxu0
      %v4737 = vadd.f32 0.0, %v4736
      %v4738 = vpop.f32.mrb[0].mxu0
      %4739 = vmatprep.mubr.bf16.mxu0 0
      %4740 = vmatmul.mubr.bf16.gmra.mrb[0].mxu0 %v4678
      %v4741 = vpop.f32.mrb[0].mxu0
      %v4742 = vadd.f32 0.0, %v4741
      %v4743 = vpop.f32.mrb[0].mxu0
      %v4744 = vpop.f32.mrb[0].mxu0
      %v4745 = vadd.f32 0.0, %v4744
      %v4746 = vpop.f32.mrb[0].mxu0
      %4747 = vdwg.mxu0
      %v4748 = vadd.f32 %v4518, %v4718
      %v4749 = vadd.f32 %v4519, %v4721
      %v4750 = vadd.f32 %v4520, %v4726
      %v4751 = vadd.f32 %v4521, %v4729
      %v4752 = vadd.f32 %v4522, %v4734
      %v4753 = vadd.f32 %v4523, %v4737
      %v4754 = vadd.f32 %v4524, %v4742
      %v4755 = vadd.f32 %v4525, %v4745
      %v4756 = vld [vmem:[%s4407] sm:$0xe]
      %v4757 = vld [vmem:[%s4407 + $0x8] sm:$0xe]
      %v4758 = vld [vmem:[%s4407 + $0x10] sm:$0xe]
      %v4759 = vld [vmem:[%s4407 + $0x18] sm:$0xe]
      %v4760 = vld [vmem:[%s4407 + $0x20] sm:$0xe]
      %v4761 = vld [vmem:[%s4407 + $0x28] sm:$0xe]
      %v4762 = vld [vmem:[%s4407 + $0x30] sm:$0xe]
      %v4763 = vld [vmem:[%s4407 + $0x38] sm:$0xe]
      %v4780 = vrot.slane %v4756, 5
      %v4781 = vrot.slane %v4780, 4
      %v4782 = vrot.slane %v4527, 5
      %v4783 = vsel %vm725, %v4781, %v4782
      %v4784 = vrot.slane %v4757, 5
      %v4785 = vrot.slane %v4784, 4
      %v4786 = vrot.slane %v4529, 5
      %v4787 = vsel %vm725, %v4785, %v4786
      %v4788 = vrot.slane %v4758, 5
      %v4789 = vrot.slane %v4788, 4
      %v4790 = vrot.slane %v4531, 5
      %v4791 = vsel %vm725, %v4789, %v4790
      %v4792 = vrot.slane %v4759, 5
      %v4793 = vrot.slane %v4792, 4
      %v4794 = vrot.slane %v4533, 5
      %v4795 = vsel %vm725, %v4793, %v4794
      %v4796 = vrot.slane %v4760, 5
      %v4797 = vrot.slane %v4796, 4
      %v4798 = vrot.slane %v4535, 5
      %v4799 = vsel %vm725, %v4797, %v4798
      %v4800 = vrot.slane %v4761, 5
      %v4801 = vrot.slane %v4800, 4
      %v4802 = vrot.slane %v4537, 5
      %v4803 = vsel %vm725, %v4801, %v4802
      %v4804 = vrot.slane %v4762, 5
      %v4805 = vrot.slane %v4804, 4
      %v4806 = vrot.slane %v4539, 5
      %v4807 = vsel %vm725, %v4805, %v4806
      %v4808 = vrot.slane %v4763, 5
      %v4809 = vrot.slane %v4808, 4
      %v4810 = vrot.slane %v4541, 5
      %v4811 = vsel %vm725, %v4809, %v4810
      %s4812 = scalar_lea.vmem %s3, 52
      %v4813 = vld [vmem:[%s4812] sm:$0x3]
      %v4814 = vunpack.c.l.b16 %v4783
      %v4815 = vunpack.c.l.b16 %v4787
      %v4816 = vunpack.c.l.b16 %v4791
      %v4817 = vunpack.c.l.b16 %v4795
      %v4818 = vunpack.c.l.b16 %v4799
      %v4819 = vunpack.c.l.b16 %v4803
      %v4820 = vunpack.c.l.b16 %v4807
      %v4821 = vunpack.c.l.b16 %v4811
      %v4822 = vpack.c.b16 %v4815, %v4814
      %v4823 = vpack.c.b16 %v4817, %v4816
      %v4824 = vpack.c.b16 %v4819, %v4818
      %v4825 = vpack.c.b16 %v4821, %v4820
      %v4827 = vsel %vm517, %v4822, 0
      %v4830 = vsel %vm517, %v4823, 0
      %v4833 = vsel %vm517, %v4824, 0
      %v4836 = vsel %vm517, %v4825, 0
      %v4839 = vsel %vm530, %v4813, 0
      %4841 = vmatprep.subr.bf16.mxu0 0
      %4842 = vmatpush1.bf16.msra.mxu0 %v4839
      %4843 = vmatprep.subr.bf16.mxu0 0
      %4844 = vmatpush1.bf16.msra.mxu0 0
      %4845 = vmatprep.subr.bf16.mxu0 0
      %4846 = vmatpush1.bf16.msra.mxu0 0
      %4847 = vmatprep.subr.bf16.mxu0 0
      %4848 = vmatpush1.bf16.msra.mxu0 0
      %4849 = vmatprep.subr.bf16.mxu0 0
      %4850 = vmatpush1.bf16.msra.mxu0 0
      %4851 = vmatprep.subr.bf16.mxu0 0
      %4852 = vmatpush1.bf16.msra.mxu0 0
      %4853 = vmatprep.subr.bf16.mxu0 0
      %4854 = vmatpush1.bf16.msra.mxu0 0
      %4855 = vmatprep.subr.bf16.mxu0 0
      %4856 = vmatpush1.bf16.msra.mxu0 0
      %4857 = vmatprep.subr.bf16.mxu0 0
      %4858 = vmatpush1.bf16.msra.mxu0 0
      %4859 = vmatprep.subr.bf16.mxu0 0
      %4860 = vmatpush1.bf16.msra.mxu0 0
      %4861 = vmatprep.subr.bf16.mxu0 0
      %4862 = vmatpush1.bf16.msra.mxu0 0
      %4863 = vmatprep.subr.bf16.mxu0 0
      %4864 = vmatpush1.bf16.msra.mxu0 0
      %4865 = vmatprep.subr.bf16.mxu0 0
      %4866 = vmatpush1.bf16.msra.mxu0 0
      %4867 = vmatprep.subr.bf16.mxu0 0
      %4868 = vmatpush1.bf16.msra.mxu0 0
      %4869 = vmatprep.subr.bf16.mxu0 0
      %4870 = vmatpush1.bf16.msra.mxu0 0
      %4871 = vmatprep.subr.bf16.mxu0 0
      %4872 = vmatpush1.bf16.msra.mxu0 0
      %4873 = vmatprep.mubr.bf16.mxu0 0
      %4874 = vmatmul.mubr.bf16.gmra.mrb[0].mxu0 %v4827
      %v4875 = vpop.f32.mrb[0].mxu0
      %v4876 = vadd.f32 0.0, %v4875
      %v4877 = vpop.f32.mrb[0].mxu0
      %v4878 = vpop.f32.mrb[0].mxu0
      %v4879 = vadd.f32 0.0, %v4878
      %v4880 = vpop.f32.mrb[0].mxu0
      %4881 = vmatprep.mubr.bf16.mxu0 0
      %4882 = vmatmul.mubr.bf16.gmra.mrb[0].mxu0 %v4830
      %v4883 = vpop.f32.mrb[0].mxu0
      %v4884 = vadd.f32 0.0, %v4883
      %v4885 = vpop.f32.mrb[0].mxu0
      %v4886 = vpop.f32.mrb[0].mxu0
      %v4887 = vadd.f32 0.0, %v4886
      %v4888 = vpop.f32.mrb[0].mxu0
      %4889 = vmatprep.mubr.bf16.mxu0 0
      %4890 = vmatmul.mubr.bf16.gmra.mrb[0].mxu0 %v4833
      %v4891 = vpop.f32.mrb[0].mxu0
      %v4892 = vadd.f32 0.0, %v4891
      %v4893 = vpop.f32.mrb[0].mxu0
      %v4894 = vpop.f32.mrb[0].mxu0
      %v4895 = vadd.f32 0.0, %v4894
      %v4896 = vpop.f32.mrb[0].mxu0
      %4897 = vmatprep.mubr.bf16.mxu0 0
      %4898 = vmatmul.mubr.bf16.gmra.mrb[0].mxu0 %v4836
      %v4899 = vpop.f32.mrb[0].mxu0
      %v4900 = vadd.f32 0.0, %v4899
      %v4901 = vpop.f32.mrb[0].mxu0
      %v4902 = vpop.f32.mrb[0].mxu0
      %v4903 = vadd.f32 0.0, %v4902
      %v4904 = vpop.f32.mrb[0].mxu0
      %4905 = vdwg.mxu0
      %v4906 = vadd.f32 %v4748, %v4876
      %v4907 = vadd.f32 %v4749, %v4879
      %v4908 = vadd.f32 %v4750, %v4884
      %v4909 = vadd.f32 %v4751, %v4887
      %v4910 = vadd.f32 %v4752, %v4892
      %v4911 = vadd.f32 %v4753, %v4895
      %v4912 = vadd.f32 %v4754, %v4900
      %v4913 = vadd.f32 %v4755, %v4903
      %v4914 = vld [vmem:[%s4] sm:$0x1]
      %v4916 = vlaneseq
      %v4917 = vshrl.u32 %v4916, 7
      %v4918 = vsub.s32 0, %v4917
      %v4919 = vrot.slane %v4914, %v4918
      %v4921 = vmul.f32 %v4906, %v4919
      %v4922 = vmul.f32 %v4907, %v4919
      %v4923 = vmul.f32 %v4908, %v4919
      %v4924 = vmul.f32 %v4909, %v4919
      %v4925 = vmul.f32 %v4910, %v4919
      %v4926 = vmul.f32 %v4911, %v4919
      %v4927 = vmul.f32 %v4912, %v4919
      %v4928 = vmul.f32 %v4913, %v4919
      %v4929 = vld [vmem:[%s5] sm:$0x1]
      %v4931 = vlaneseq
      %v4932 = vshrl.u32 %v4931, 7
      %v4933 = vsub.s32 0, %v4932
      %v4934 = vrot.slane %v4929, %v4933
      %v4936 = vadd.f32 %v4921, %v4934
      %v4937 = vadd.f32 %v4922, %v4934
      %v4938 = vadd.f32 %v4923, %v4934
      %v4939 = vadd.f32 %v4924, %v4934
      %v4940 = vadd.f32 %v4925, %v4934
      %v4941 = vadd.f32 %v4926, %v4934
      %v4942 = vadd.f32 %v4927, %v4934
      %v4943 = vadd.f32 %v4928, %v4934
      %v4944 = vmax.f32 %v4936, 0.0
      %v4945 = vmax.f32 %v4937, 0.0
      %v4946 = vmax.f32 %v4938, 0.0
      %v4947 = vmax.f32 %v4939, 0.0
      %v4948 = vmax.f32 %v4940, 0.0
      %v4949 = vmax.f32 %v4941, 0.0
      %v4950 = vmax.f32 %v4942, 0.0
      %v4951 = vmax.f32 %v4943, 0.0
      %v4952 = vpack.c.bf16 %v4945, %v4944
      %v4953 = vpack.c.bf16 %v4947, %v4946
      %v4954 = vpack.c.bf16 %v4949, %v4948
      %v4955 = vpack.c.bf16 %v4951, %v4950
      %v4960 = vunpack.c.l.b16 %v4952
      %v4961 = vunpack.c.h.b16 %v4952
      %v4962 = vunpack.c.l.b16 %v4953
      %v4963 = vunpack.c.h.b16 %v4953
      %v4964 = vunpack.c.l.b16 %v4954
      %v4965 = vunpack.c.h.b16 %v4954
      %v4966 = vunpack.c.l.b16 %v4955
      %v4967 = vunpack.c.h.b16 %v4955
      %v4968 = vpack.c.b16 %v4960, %v4960
      %v4969 = vpack.c.b16 %v4961, %v4961
      %v4970 = vpack.c.b16 %v4962, %v4962
      %v4971 = vpack.c.b16 %v4963, %v4963
      %v4972 = vpack.c.b16 %v4964, %v4964
      %v4973 = vpack.c.b16 %v4965, %v4965
      %v4974 = vpack.c.b16 %v4966, %v4966
      %v4975 = vpack.c.b16 %v4967, %v4967
      %vm4984 = vcmask 125952
      %4985 = vst.msk [vmem:[%s369] sm:$0xf] %vm4984, %v4968
      %4986 = vst.msk [vmem:[%s369 + $0x4] sm:$0xf] %vm4984, %v4969
      %4987 = vst.msk [vmem:[%s369 + $0x8] sm:$0xf] %vm4984, %v4970
      %4988 = vst.msk [vmem:[%s369 + $0xc] sm:$0xf] %vm4984, %v4971
      %4989 = vst.msk [vmem:[%s369 + $0x10] sm:$0xf] %vm4984, %v4972
      %4990 = vst.msk [vmem:[%s369 + $0x14] sm:$0xf] %vm4984, %v4973
      %4991 = vst.msk [vmem:[%s369 + $0x18] sm:$0xf] %vm4984, %v4974
      %4992 = vst.msk [vmem:[%s369 + $0x1c] sm:$0xf] %vm4984, %v4975
      %p4993 = scmp.lt.s32.totalorder %s21, 1
      %s4994 = scalar_select %p4993, %s21, 1
      %p4995 = scmp.lt.s32.totalorder %s22, 7
      %s4996 = scalar_select %p4995, %s22, 7
      %s4997 = smul.addr %s4996, 8
      %s4998 = smul.addr %s4994, 64
      %s4999 = sadd.s32 %s4997, %s4998
      %s5000 = smul.addr %s4999, 4
      %s5001 = scalar_lea.vmem %s6, %s5000
      // Predicated region
      $region45: #{tpu_custom_call.1} parent=43 // pred_check
        %p5002 = pneg %p200
      $region46: #{tpu_custom_call.1} parent=43 // pred_check_branch
        %5004 = sbr.rel (%p5002) target = $region48
      $region47: #{tpu_custom_call.1} parent=43 // pred_region
        _
      $region48: #{tpu_custom_call.1} parent=43 // pred_fallthru
        _
    $region44: #{tpu_custom_call.1} parent=5 // pred_fallthru
      _
    %p5005 = scmp.le.s32.totalorder 2, %s12
    // Predicated region
    $region49: #{tpu_custom_call.1} parent=5 // pred_check
      %p5006 = pneg %p5005
    $region50: #{tpu_custom_call.1} parent=5 // pred_check_branch
      %5008 = sbr.rel (%p5006) target = $region52
    $region51: #{tpu_custom_call.1} parent=5 // pred_region
      %s5009 = ssub.s32 %s12, 2
      // Predicated region
      $region53: #{tpu_custom_call.1} parent=51 // pred_check
        %p5010 = pneg %p206
      $region54: #{tpu_custom_call.1} parent=51 // pred_check_branch
        %5012 = sbr.rel (%p5010) target = $region56
      $region55: #{tpu_custom_call.1} parent=51 // pred_region
        %p5013 = scmp.lt.s32.totalorder %s23, 1
        %s5014 = scalar_select %p5013, %s23, 1
        %p5015 = scmp.lt.s32.totalorder %s24, 7
        %s5016 = scalar_select %p5015, %s24, 7
        %s5017 = smul.addr %s5016, 8
        %s5018 = smul.addr %s5014, 64
        %s5019 = sadd.s32 %s5017, %s5018
        %s5020 = smul.addr %s5019, 4
        %s5021 = scalar_lea.vmem %s6, %s5020
      $region56: #{tpu_custom_call.1} parent=51 // pred_fallthru
        _
    $region52: #{tpu_custom_call.1} parent=5 // pred_fallthru
      _
  $region6: #{tpu_custom_call.1} parent=0 // loop_footer
    %s16 = sadd.s32 1, %s12
  $region7: #{tpu_custom_call.1} parent=0 // loop_footer_branch
    %11 = sbr.rel target = $region3
  $region8: #{tpu_custom_call.1} parent=0 // loop_exit
    _

</llo_original>
